<compile_context>
chip_gen: v6e
topology: v6e:2x2x1
jax: 0.10.0
libtpu: 0.0.40
codegen_flags: <defaults>
</compile_context>

<pallas_src>
import jax
import jax.numpy as jnp
import numpy as np
from jax import lax
from jax.experimental import pallas as pl
from jax.experimental.pallas import tpu as pltpu


def cnn_kernel(xs_ref, w1t_ref, w2s_ref, b2e_ref, wcf_ref, selw_ref, bias_ref,
               out_ref):
    K = 5                                # conv/pool kernel size (fixed by the module)
    g = w1t_ref.shape[0] // K            # 80 = (conv2 taps) * (conv1 channels)
    lflat = selw_ref.shape[0]            # TB*J - (K-1)

    # conv1 (all 25 phase x 16 channel combinations) as one MXU matmul.
    y1 = jnp.dot(w1t_ref[...], xs_ref[...],
                 preferred_element_type=jnp.float32)            # (400, TB*J)

    # maxpool1 (k=5, stride=5): rows are r-major, so max over 5 aligned slices.
    p1 = y1[0:g, :]
    for r in range(1, K):
        p1 = jnp.maximum(p1, y1[r * g:(r + 1) * g, :])          # (80, TB*J)

    # conv2 (16 -> 33, k=5, stride=5): all taps fused into one matmul.
    # conv1 + conv2 biases are pre-folded into b2_eff.
    y2 = jnp.dot(w2s_ref[...], p1,
                 preferred_element_type=jnp.float32) + b2e_ref[...]   # (33, TB*J)

    # maxpool2 (k=5, stride=1) on the flat slab; windows crossing batch
    # boundaries are computed but get zero weight in selw below.
    m2 = y2[:, 0:lflat]
    for r in range(1, K):
        m2 = jnp.maximum(m2, y2[:, r:r + lflat])                # (33, TB*J-4)

    # conv_fc (1x1) weight is a pure channel reduce -> tiny (1,33) matmul first,
    # then the Linear(156,1) weight (folded into the per-batch 0/1 selection
    # matrix selw) does the per-batch lane-segment reduction on the MXU.
    v = jnp.dot(wcf_ref[...], m2,
                preferred_element_type=jnp.float32)             # (1, TB*J-4)
    logit = jnp.dot(v, selw_ref[...],
                    preferred_element_type=jnp.float32) + bias_ref[...]  # (1, 128)

    # TODO(synk): nn.Dropout() implemented as eval-mode identity (no RNG mask).
    out_ref[...] = 1.0 / (1.0 + jnp.exp(-logit))                # (1, 128) lane-dense


def cnn_forward(x, params, *, tile_b=8, n_lanes=128):
    B = x.shape[0]
    L = x.shape[-1]
    x2 = x.reshape(B, L).astype(jnp.float32)     # torch: x.view(B, 1, L)

    C1, _, K = params["w1"].shape                # (16, 1, 5)
    C2 = params["w2"].shape[0]                   # 33
    Lfc = params["w_fc"].shape[1]                # 156
    stride = 25                                  # pool1(5,5) followed by conv2 stride 5
    assert L % stride == 0, "length must be a multiple of 25 (4000 for Linear(156,1))"
    J = L // stride                              # 160
    assert J - (K - 1) == Lfc, "network geometry requires (L//25 - 4) == 156"

    TB = tile_b
    assert TB <= n_lanes
    Bp = ((B + TB - 1) // TB) * TB               # batch padded to a tile multiple
    G = Bp // TB

    # ---- glue: zero-pad + im2col, batch flattened into lanes ----------------
    xp = jnp.pad(x2, ((0, Bp - B), (2, 2)))      # (Bp, L+4); conv1 padding=2
    Q = stride + K - 1                           # 29 taps
    xs = jnp.stack([xp[:, q:q + stride * (J - 1) + 1:stride] for q in range(Q)],
                   axis=0)                       # (29, Bp, J)
    xs = xs.reshape(Q, Bp * J)                   # xs[q, b*J + j] = xp[b, 25j + q]

    # ---- block-Toeplitz conv1 weight: row r*80 + t*16 + c, offset 5t + r ----
    w1 = params["w1"][:, 0, :]                   # (16, 5)
    rows = []
    for r in range(K):
        for t in range(K):
            p = K * t + r
            rows.append(jnp.pad(w1, ((0, 0), (p, Q - K - p))))
    w1t = jnp.concatenate(rows, axis=0)          # (400, 29)

    # ---- conv2 weight with taps in the contraction axis; biases folded ------
    w2 = params["w2"]                                                # (33, 16, 5)
    w2s = jnp.transpose(w2, (0, 2, 1)).reshape(C2, K * C1)           # (33, 80)
    b2e = (params["b2"] +
           jnp.sum(w2 * params["b1"][None, :, None], axis=(1, 2)))[:, None]  # (33, 1)

    # ---- conv_fc (1x1) channel weight + Linear(156,1) position weight -------
    wcf_row = params["w_fc_conv"][0, :, 0].reshape(1, C2)            # (1, 33)
    wfc = params["w_fc"][0]                                          # (156,)
    wfc_pad = jnp.pad(wfc, (0, J - Lfc))                             # (160,)
    bias = (params["b_fc"][0] +
            params["b_fc_conv"][0] * jnp.sum(wfc)).reshape(1, 1)     # (1, 1)

    # ---- selection matrix: per-batch lane-segment sum (with wfc folded in) --
    lflat = TB * J - (K - 1)
    f = jnp.arange(lflat)
    selw = jnp.where((f // J)[:, None] == jnp.arange(n_lanes)[None, :],
                     wfc_pad[f % J][:, None],
                     0.0).astype(jnp.float32)                        # (lflat, 128)

    out = pl.pallas_call(
        cnn_kernel,
        out_shape=jax.ShapeDtypeStruct((1, G * n_lanes), jnp.float32),
        grid=(G,),
        in_specs=[
            pl.BlockSpec((Q, TB * J), lambda i: (0, i)),     # xs: batch-tiled
            pl.BlockSpec(w1t.shape, lambda i: (0, 0)),
            pl.BlockSpec(w2s.shape, lambda i: (0, 0)),
            pl.BlockSpec(b2e.shape, lambda i: (0, 0)),
            pl.BlockSpec(wcf_row.shape, lambda i: (0, 0)),
            pl.BlockSpec(selw.shape, lambda i: (0, 0)),
            pl.BlockSpec((1, 1), lambda i: (0, 0)),
        ],
        out_specs=pl.BlockSpec((1, n_lanes), lambda i: (0, i)),
        compiler_params=pltpu.CompilerParams(
            dimension_semantics=("parallel",)),
    )(xs, w1t, w2s, b2e, wcf_row, selw, bias)

    out = out.reshape(G, n_lanes)[:, :TB].reshape(Bp)[:B]
    return out.reshape(B, 1, 1)


def reference_forward(x, params):
    """Pure-JAX (XLA) reference with identical semantics to the PyTorch forward."""
    dn = ("NCH", "OIH", "NCH")
    B, L = x.shape[0], x.shape[-1]
    y = x.reshape(B, 1, L)
    y = lax.conv_general_dilated(y, params["w1"], (1,), [(2, 2)], dimension_numbers=dn)
    y = y + params["b1"][None, :, None]
    y = lax.reduce_window(y, -jnp.inf, lax.max, (1, 1, 5), (1, 1, 5), "VALID")
    y = lax.conv_general_dilated(y, params["w2"], (5,), [(0, 0)], dimension_numbers=dn)
    y = y + params["b2"][None, :, None]
    y = lax.reduce_window(y, -jnp.inf, lax.max, (1, 1, 5), (1, 1, 1), "VALID")
    y = lax.conv_general_dilated(y, params["w_fc_conv"], (1,), [(0, 0)], dimension_numbers=dn)
    y = y + params["b_fc_conv"][None, :, None]
    y = y @ params["w_fc"].T + params["b_fc"]
    return jax.nn.sigmoid(y)


def init_params(key):
    """Deterministic init mimicking PyTorch defaults: U(-1/sqrt(fan_in), 1/sqrt(fan_in))."""
    ks = jax.random.split(key, 8)

    def u(k, shape, fan_in):
        b = 1.0 / np.sqrt(fan_in)
        return jax.random.uniform(k, shape, jnp.float32, -b, b)

    return {
        "w1": u(ks[0], (16, 1, 5), 1 * 5),        # Conv1d(1, 16, 5, padding=2)
        "b1": u(ks[1], (16,), 1 * 5),
        "w2": u(ks[2], (33, 16, 5), 16 * 5),      # Conv1d(16, 33, 5, stride=5)
        "b2": u(ks[3], (33,), 16 * 5),
        "w_fc_conv": u(ks[4], (1, 33, 1), 33),    # Conv1d(33, 1, 1)
        "b_fc_conv": u(ks[5], (1,), 33),
        "w_fc": u(ks[6], (1, 156), 156),          # Linear(156, 1)
        "b_fc": u(ks[7], (1,), 156),
    }


if __name__ == "__main__":
    root = jax.random.PRNGKey(0)
    pkey, xkey = jax.random.split(root)
    params = init_params(pkey)

    # Linear(156, 1) forces the input length: 156 = ((L//5 - 5)//5 + 1) - 4  ->  L = 4000.
    x = jax.random.normal(xkey, (2, 4000), dtype=jnp.float32)

    out = jax.block_until_ready(jax.jit(cnn_forward)(x, params))
    ref = jax.block_until_ready(reference_forward(x, params))

    assert out.shape == (2, 1, 1), out.shape
    np.testing.assert_allclose(np.asarray(out), np.asarray(ref), rtol=5e-3, atol=5e-3)
    print("KERNEL_OK")
</pallas_src>

<mosaic_0001>
module attributes {stable_mosaic.version = 11 : i64} {
  func.func @cnn_kernel(%arg0: i32, %arg1: memref<29x1280xf32, #tpu.memory_space<vmem>>, %arg2: memref<400x29xf32, #tpu.memory_space<vmem>>, %arg3: memref<33x80xf32, #tpu.memory_space<vmem>>, %arg4: memref<33x1xf32, #tpu.memory_space<vmem>>, %arg5: memref<1x33xf32, #tpu.memory_space<vmem>>, %arg6: memref<1276x128xf32, #tpu.memory_space<vmem>>, %arg7: memref<1x1xf32, #tpu.memory_space<vmem>>, %arg8: memref<1x128xf32, #tpu.memory_space<vmem>>) attributes {dimension_semantics = [#tpu.dimension_semantics<parallel>], iteration_bounds = array<i64: 1>, scalar_prefetch = 0 : i64, scratch_operands = 0 : i64, tpu.core_type = #tpu.core_type<tc>, window_params = [{transform_indices = @transform_0, window_bounds = array<i64: 29, 1280>}, {pipeline_mode = #tpu.pipeline_mode<synchronous>, transform_indices = @transform_1, window_bounds = array<i64: 400, 29>}, {pipeline_mode = #tpu.pipeline_mode<synchronous>, transform_indices = @transform_2, window_bounds = array<i64: 33, 80>}, {pipeline_mode = #tpu.pipeline_mode<synchronous>, transform_indices = @transform_3, window_bounds = array<i64: 33, 1>}, {pipeline_mode = #tpu.pipeline_mode<synchronous>, transform_indices = @transform_4, window_bounds = array<i64: 1, 33>}, {pipeline_mode = #tpu.pipeline_mode<synchronous>, transform_indices = @transform_5, window_bounds = array<i64: 1276, 128>}, {pipeline_mode = #tpu.pipeline_mode<synchronous>, transform_indices = @transform_6, window_bounds = array<i64: 1, 1>}, {transform_indices = @transform_7, window_bounds = array<i64: 1, 128>}]} {
    %c0 = arith.constant 0 : index
    %c0_0 = arith.constant 0 : index
    %0 = vector.load %arg2[%c0, %c0_0] : memref<400x29xf32, #tpu.memory_space<vmem>>, vector<400x29xf32>
    %c0_1 = arith.constant 0 : index
    %c0_2 = arith.constant 0 : index
    %1 = vector.load %arg1[%c0_1, %c0_2] : memref<29x1280xf32, #tpu.memory_space<vmem>>, vector<29x1280xf32>
    %cst = arith.constant dense<0.000000e+00> : vector<400x1280xf32>
    %2 = tpu.matmul %0, %1, %cst {dimension_numbers = #tpu.dot_dimension_numbers<[1], [0], [0], [1], [0, 0, 1, 1], [], []>} : vector<400x29xf32>, vector<29x1280xf32>, vector<400x1280xf32> -> vector<400x1280xf32>
    %3 = vector.extract_strided_slice %2 {offsets = [0, 0], sizes = [80, 1280], strides = [1, 1]} : vector<400x1280xf32> to vector<80x1280xf32>
    %4 = vector.extract_strided_slice %2 {offsets = [80, 0], sizes = [80, 1280], strides = [1, 1]} : vector<400x1280xf32> to vector<80x1280xf32>
    %5 = arith.maximumf %3, %4 : vector<80x1280xf32>
    %6 = vector.extract_strided_slice %2 {offsets = [160, 0], sizes = [80, 1280], strides = [1, 1]} : vector<400x1280xf32> to vector<80x1280xf32>
    %7 = arith.maximumf %5, %6 : vector<80x1280xf32>
    %8 = vector.extract_strided_slice %2 {offsets = [240, 0], sizes = [80, 1280], strides = [1, 1]} : vector<400x1280xf32> to vector<80x1280xf32>
    %9 = arith.maximumf %7, %8 : vector<80x1280xf32>
    %10 = vector.extract_strided_slice %2 {offsets = [320, 0], sizes = [80, 1280], strides = [1, 1]} : vector<400x1280xf32> to vector<80x1280xf32>
    %11 = arith.maximumf %9, %10 : vector<80x1280xf32>
    %c0_3 = arith.constant 0 : index
    %c0_4 = arith.constant 0 : index
    %12 = vector.load %arg3[%c0_3, %c0_4] : memref<33x80xf32, #tpu.memory_space<vmem>>, vector<33x80xf32>
    %cst_5 = arith.constant dense<0.000000e+00> : vector<33x1280xf32>
    %13 = tpu.matmul %12, %11, %cst_5 {dimension_numbers = #tpu.dot_dimension_numbers<[1], [0], [0], [1], [0, 0, 1, 1], [], []>} : vector<33x80xf32>, vector<80x1280xf32>, vector<33x1280xf32> -> vector<33x1280xf32>
    %c0_6 = arith.constant 0 : index
    %c0_7 = arith.constant 0 : index
    %14 = vector.load %arg4[%c0_6, %c0_7] : memref<33x1xf32, #tpu.memory_space<vmem>>, vector<33x1xf32>
    %15 = vector.broadcast %14 : vector<33x1xf32> to vector<33x1280xf32>
    %16 = arith.addf %13, %15 : vector<33x1280xf32>
    %17 = vector.extract_strided_slice %16 {offsets = [0, 0], sizes = [33, 1276], strides = [1, 1]} : vector<33x1280xf32> to vector<33x1276xf32>
    %18 = vector.extract_strided_slice %16 {offsets = [0, 1], sizes = [33, 1276], strides = [1, 1]} : vector<33x1280xf32> to vector<33x1276xf32>
    %19 = arith.maximumf %17, %18 : vector<33x1276xf32>
    %20 = vector.extract_strided_slice %16 {offsets = [0, 2], sizes = [33, 1276], strides = [1, 1]} : vector<33x1280xf32> to vector<33x1276xf32>
    %21 = arith.maximumf %19, %20 : vector<33x1276xf32>
    %22 = vector.extract_strided_slice %16 {offsets = [0, 3], sizes = [33, 1276], strides = [1, 1]} : vector<33x1280xf32> to vector<33x1276xf32>
    %23 = arith.maximumf %21, %22 : vector<33x1276xf32>
    %24 = vector.extract_strided_slice %16 {offsets = [0, 4], sizes = [33, 1276], strides = [1, 1]} : vector<33x1280xf32> to vector<33x1276xf32>
    %25 = arith.maximumf %23, %24 : vector<33x1276xf32>
    %c0_8 = arith.constant 0 : index
    %c0_9 = arith.constant 0 : index
    %26 = vector.load %arg5[%c0_8, %c0_9] : memref<1x33xf32, #tpu.memory_space<vmem>>, vector<1x33xf32>
    %cst_10 = arith.constant dense<0.000000e+00> : vector<1x1276xf32>
    %27 = tpu.matmul %26, %25, %cst_10 {dimension_numbers = #tpu.dot_dimension_numbers<[1], [0], [0], [1], [0, 0, 1, 1], [], []>} : vector<1x33xf32>, vector<33x1276xf32>, vector<1x1276xf32> -> vector<1x1276xf32>
    %c0_11 = arith.constant 0 : index
    %c0_12 = arith.constant 0 : index
    %28 = vector.load %arg6[%c0_11, %c0_12] : memref<1276x128xf32, #tpu.memory_space<vmem>>, vector<1276x128xf32>
    %cst_13 = arith.constant dense<0.000000e+00> : vector<1x128xf32>
    %29 = tpu.matmul %27, %28, %cst_13 {dimension_numbers = #tpu.dot_dimension_numbers<[1], [0], [0], [1], [0, 0, 1, 1], [], []>} : vector<1x1276xf32>, vector<1276x128xf32>, vector<1x128xf32> -> vector<1x128xf32>
    %c0_14 = arith.constant 0 : index
    %c0_15 = arith.constant 0 : index
    %30 = vector.load %arg7[%c0_14, %c0_15] : memref<1x1xf32, #tpu.memory_space<vmem>>, vector<1x1xf32>
    %31 = vector.broadcast %30 : vector<1x1xf32> to vector<1x128xf32>
    %32 = arith.addf %29, %31 : vector<1x128xf32>
    %cst_16 = arith.constant 0.000000e+00 : f32
    %33 = vector.broadcast %cst_16 : f32 to vector<1x128xf32>
    %34 = arith.subf %33, %32 : vector<1x128xf32>
    %35 = math.exp %34 : vector<1x128xf32>
    %cst_17 = arith.constant 1.000000e+00 : f32
    %36 = vector.broadcast %cst_17 : f32 to vector<1x128xf32>
    %37 = arith.addf %36, %35 : vector<1x128xf32>
    %cst_18 = arith.constant 1.000000e+00 : f32
    %38 = vector.broadcast %cst_18 : f32 to vector<1x128xf32>
    %39 = arith.divf %38, %37 : vector<1x128xf32>
    %c0_19 = arith.constant 0 : index
    %c0_20 = arith.constant 0 : index
    %40 = vector.load %arg8[%c0_19, %c0_20] : memref<1x128xf32, #tpu.memory_space<vmem>>, vector<1x128xf32>
    tpu.vector_store %arg8[%c0_19, %c0_20], %39 {strides = array<i32>} : memref<1x128xf32, #tpu.memory_space<vmem>>, vector<1x128xf32>,
    return
  }
  func.func @transform_0(%arg0: i32) -> (i32, i32) {
    %c0_i32 = arith.constant 0 : i32
    %c0_i32_0 = arith.constant 0 : i32
    return %c0_i32, %arg0 : i32, i32
  }
  func.func @transform_1(%arg0: i32) -> (i32, i32) {
    %c0_i32 = arith.constant 0 : i32
    %c0_i32_0 = arith.constant 0 : i32
    %c0_i32_1 = arith.constant 0 : i32
    return %c0_i32, %c0_i32_0 : i32, i32
  }
  func.func @transform_2(%arg0: i32) -> (i32, i32) {
    %c0_i32 = arith.constant 0 : i32
    %c0_i32_0 = arith.constant 0 : i32
    %c0_i32_1 = arith.constant 0 : i32
    return %c0_i32, %c0_i32_0 : i32, i32
  }
  func.func @transform_3(%arg0: i32) -> (i32, i32) {
    %c0_i32 = arith.constant 0 : i32
    %c0_i32_0 = arith.constant 0 : i32
    %c0_i32_1 = arith.constant 0 : i32
    return %c0_i32, %c0_i32_0 : i32, i32
  }
  func.func @transform_4(%arg0: i32) -> (i32, i32) {
    %c0_i32 = arith.constant 0 : i32
    %c0_i32_0 = arith.constant 0 : i32
    %c0_i32_1 = arith.constant 0 : i32
    return %c0_i32, %c0_i32_0 : i32, i32
  }
  func.func @transform_5(%arg0: i32) -> (i32, i32) {
    %c0_i32 = arith.constant 0 : i32
    %c0_i32_0 = arith.constant 0 : i32
    %c0_i32_1 = arith.constant 0 : i32
    return %c0_i32, %c0_i32_0 : i32, i32
  }
  func.func @transform_6(%arg0: i32) -> (i32, i32) {
    %c0_i32 = arith.constant 0 : i32
    %c0_i32_0 = arith.constant 0 : i32
    %c0_i32_1 = arith.constant 0 : i32
    return %c0_i32, %c0_i32_0 : i32, i32
  }
  func.func @transform_7(%arg0: i32) -> (i32, i32) {
    %c0_i32 = arith.constant 0 : i32
    %c0_i32_0 = arith.constant 0 : i32
    return %c0_i32, %arg0 : i32, i32
  }
}

</mosaic_0001>

<llo_original>
// kernel: cnn_forward.1
$region0: #{cnn_forward.1}
  #allocation0 [shape = 'u32[]', space=smem, size = 0x4, offset = 0x4, fixed_abs, tag = 'smem constant byte address 0x4 - core index']
  #allocation1 [shape = 'u32[144,128]{1,0:T(1,128)}', space=vmem, size = 0x12000, scoped, tag = 'internal scratch']
  #allocation2 [shape = 'f32[1,1]{1,0:T(1,128)S(1)}', space=vmem, size = 0x200, scoped, tag = 'scoped memory for cnn_forward.1']
  %s0 = inlined_call_operand.vmem [shape: f32[29,1280], index: 0, kind: input, shape index: {}]
  %s1 = inlined_call_operand.vmem [shape: f32[400,29], index: 1, kind: input, shape index: {}]
  %s2 = inlined_call_operand.vmem [shape: f32[33,80], index: 2, kind: input, shape index: {}]
  %s3 = inlined_call_operand.vmem [shape: f32[33,1], index: 3, kind: input, shape index: {}]
  %s4 = inlined_call_operand.vmem [shape: f32[1,33], index: 4, kind: input, shape index: {}]
  %s5 = inlined_call_operand.vmem [shape: f32[1276,128], index: 5, kind: input, shape index: {}]
  %s6 = inlined_call_operand.<no memory space> [shape: f32[1,1], index: 6, kind: input, shape index: {}]
  %s7 = inlined_call_operand.vmem [shape: f32[1,128], index: 7, kind: output, shape index: {}]
  %s8 = sld [smem:[#allocation0]]
  $region38: #{cnn_forward.1} parent=0
    _
  %s10 = ssub.s32 1, %s8
  %s11 = scalar_select 0, %s10, %s8
  %v12 = vstv %s6
  %13 = vst [vmem:[#allocation2] sm:$0x1] %v12
  // Predicated region
  $region2: #{cnn_forward.1} parent=0 // pred_check
    _
  $region3: #{cnn_forward.1} parent=0 // pred_check_branch
    %15 = sbr.rel (0) target = $region5
  $region4: #{cnn_forward.1} parent=0 // pred_region
    _
  $region5: #{cnn_forward.1} parent=0 // pred_fallthru
    _
  // Predicated region
  $region6: #{cnn_forward.1} parent=0 // pred_check
    _
  $region7: #{cnn_forward.1} parent=0 // pred_check_branch
    %17 = sbr.rel (0) target = $region9
  $region8: #{cnn_forward.1} parent=0 // pred_region
    _
  $region9: #{cnn_forward.1} parent=0 // pred_fallthru
    _
  // Predicated region
  $region10: #{cnn_forward.1} parent=0 // pred_check
    _
  $region11: #{cnn_forward.1} parent=0 // pred_check_branch
    %19 = sbr.rel (0) target = $region13
  $region12: #{cnn_forward.1} parent=0 // pred_region
    _
  $region13: #{cnn_forward.1} parent=0 // pred_fallthru
    _
  // Predicated region
  $region14: #{cnn_forward.1} parent=0 // pred_check
    _
  $region15: #{cnn_forward.1} parent=0 // pred_check_branch
    %21 = sbr.rel (0) target = $region17
  $region16: #{cnn_forward.1} parent=0 // pred_region
    _
  $region17: #{cnn_forward.1} parent=0 // pred_fallthru
    _
  // Predicated region
  $region18: #{cnn_forward.1} parent=0 // pred_check
    _
  $region19: #{cnn_forward.1} parent=0 // pred_check_branch
    %23 = sbr.rel (0) target = $region21
  $region20: #{cnn_forward.1} parent=0 // pred_region
    _
  $region21: #{cnn_forward.1} parent=0 // pred_fallthru
    _
  // Predicated region
  $region22: #{cnn_forward.1} parent=0 // pred_check
    _
  $region23: #{cnn_forward.1} parent=0 // pred_check_branch
    %25 = sbr.rel (0) target = $region25
  $region24: #{cnn_forward.1} parent=0 // pred_region
    _
  $region25: #{cnn_forward.1} parent=0 // pred_fallthru
    _
  // Predicated region
  $region26: #{cnn_forward.1} parent=0 // pred_check
    _
  $region27: #{cnn_forward.1} parent=0 // pred_check_branch
    %27 = sbr.rel (0) target = $region29
  $region28: #{cnn_forward.1} parent=0 // pred_region
    _
  $region29: #{cnn_forward.1} parent=0 // pred_fallthru
    _
  %v28 = vld [vmem:[%s1] sm:$0xff]
  %v29 = vld [vmem:[%s1 + $0x8] sm:$0xff]
  %v30 = vld [vmem:[%s1 + $0x10] sm:$0xff]
  %v31 = vld [vmem:[%s1 + $0x18] sm:$0xff]
  %v32 = vld [vmem:[%s1 + $0x20] sm:$0xff]
  %v33 = vld [vmem:[%s1 + $0x28] sm:$0xff]
  %v34 = vld [vmem:[%s1 + $0x30] sm:$0xff]
  %v35 = vld [vmem:[%s1 + $0x38] sm:$0xff]
  %v36 = vld [vmem:[%s1 + $0x40] sm:$0xff]
  %v37 = vld [vmem:[%s1 + $0x48] sm:$0xff]
  %v38 = vld [vmem:[%s1 + $0x50] sm:$0xff]
  %v39 = vld [vmem:[%s1 + $0x58] sm:$0xff]
  %v40 = vld [vmem:[%s1 + $0x60] sm:$0xff]
  %v41 = vld [vmem:[%s1 + $0x68] sm:$0xff]
  %v42 = vld [vmem:[%s1 + $0x70] sm:$0xff]
  %v43 = vld [vmem:[%s1 + $0x78] sm:$0xff]
  %v44 = vld [vmem:[%s1 + $0x80] sm:$0xff]
  %v45 = vld [vmem:[%s1 + $0x88] sm:$0xff]
  %v46 = vld [vmem:[%s1 + $0x90] sm:$0xff]
  %v47 = vld [vmem:[%s1 + $0x98] sm:$0xff]
  %v48 = vld [vmem:[%s1 + $0xa0] sm:$0xff]
  %v49 = vld [vmem:[%s1 + $0xa8] sm:$0xff]
  %v50 = vld [vmem:[%s1 + $0xb0] sm:$0xff]
  %v51 = vld [vmem:[%s1 + $0xb8] sm:$0xff]
  %v52 = vld [vmem:[%s1 + $0xc0] sm:$0xff]
  %v53 = vld [vmem:[%s1 + $0xc8] sm:$0xff]
  %v54 = vld [vmem:[%s1 + $0xd0] sm:$0xff]
  %v55 = vld [vmem:[%s1 + $0xd8] sm:$0xff]
  %v56 = vld [vmem:[%s1 + $0xe0] sm:$0xff]
  %v57 = vld [vmem:[%s1 + $0xe8] sm:$0xff]
  %v58 = vld [vmem:[%s1 + $0xf0] sm:$0xff]
  %v59 = vld [vmem:[%s1 + $0xf8] sm:$0xff]
  %v60 = vld [vmem:[%s1 + $0x100] sm:$0xff]
  %v61 = vld [vmem:[%s1 + $0x108] sm:$0xff]
  %v62 = vld [vmem:[%s1 + $0x110] sm:$0xff]
  %v63 = vld [vmem:[%s1 + $0x118] sm:$0xff]
  %v64 = vld [vmem:[%s1 + $0x120] sm:$0xff]
  %v65 = vld [vmem:[%s1 + $0x128] sm:$0xff]
  %v66 = vld [vmem:[%s1 + $0x130] sm:$0xff]
  %v67 = vld [vmem:[%s1 + $0x138] sm:$0xff]
  %v68 = vld [vmem:[%s1 + $0x140] sm:$0xff]
  %v69 = vld [vmem:[%s1 + $0x148] sm:$0xff]
  %v70 = vld [vmem:[%s1 + $0x150] sm:$0xff]
  %v71 = vld [vmem:[%s1 + $0x158] sm:$0xff]
  %v72 = vld [vmem:[%s1 + $0x160] sm:$0xff]
  %v73 = vld [vmem:[%s1 + $0x168] sm:$0xff]
  %v74 = vld [vmem:[%s1 + $0x170] sm:$0xff]
  %v75 = vld [vmem:[%s1 + $0x178] sm:$0xff]
  %v76 = vld [vmem:[%s1 + $0x180] sm:$0xff]
  %v77 = vld [vmem:[%s1 + $0x188] sm:$0xff]
  %v78 = vld [vmem:[%s0] sm:$0xff]
  %v79 = vld [vmem:[%s0 + $0x8] sm:$0xff]
  %v80 = vld [vmem:[%s0 + $0x10] sm:$0xff]
  %v81 = vld [vmem:[%s0 + $0x18] sm:$0xff]
  %v82 = vld [vmem:[%s0 + $0x20] sm:$0xff]
  %v83 = vld [vmem:[%s0 + $0x28] sm:$0xff]
  %v84 = vld [vmem:[%s0 + $0x30] sm:$0xff]
  %v85 = vld [vmem:[%s0 + $0x38] sm:$0xff]
  %v86 = vld [vmem:[%s0 + $0x40] sm:$0xff]
  %v87 = vld [vmem:[%s0 + $0x48] sm:$0xff]
  %v88 = vld [vmem:[%s0 + $0x50] sm:$0xff]
  %v89 = vld [vmem:[%s0 + $0x58] sm:$0xff]
  %v90 = vld [vmem:[%s0 + $0x60] sm:$0xff]
  %v91 = vld [vmem:[%s0 + $0x68] sm:$0xff]
  %v92 = vld [vmem:[%s0 + $0x70] sm:$0xff]
  %v93 = vld [vmem:[%s0 + $0x78] sm:$0xff]
  %v94 = vld [vmem:[%s0 + $0x80] sm:$0xff]
  %v95 = vld [vmem:[%s0 + $0x88] sm:$0xff]
  %v96 = vld [vmem:[%s0 + $0x90] sm:$0xff]
  %v97 = vld [vmem:[%s0 + $0x98] sm:$0xff]
  %v98 = vld [vmem:[%s0 + $0xa0] sm:$0xff]
  %v99 = vld [vmem:[%s0 + $0xa8] sm:$0xff]
  %v100 = vld [vmem:[%s0 + $0xb0] sm:$0xff]
  %v101 = vld [vmem:[%s0 + $0xb8] sm:$0xff]
  %v102 = vld [vmem:[%s0 + $0xc0] sm:$0xff]
  %v103 = vld [vmem:[%s0 + $0xc8] sm:$0xff]
  %v104 = vld [vmem:[%s0 + $0xd0] sm:$0xff]
  %v105 = vld [vmem:[%s0 + $0xd8] sm:$0xff]
  %v106 = vld [vmem:[%s0 + $0xe0] sm:$0xff]
  %v107 = vld [vmem:[%s0 + $0xe8] sm:$0xff]
  %v108 = vld [vmem:[%s0 + $0xf0] sm:$0x1f]
  %v109 = vld [vmem:[%s0 + $0xf8] sm:$0x1f]
  %v110 = vld [vmem:[%s0 + $0x100] sm:$0x1f]
  %v111 = vld [vmem:[%s0 + $0x108] sm:$0x1f]
  %v112 = vld [vmem:[%s0 + $0x110] sm:$0x1f]
  %v113 = vld [vmem:[%s0 + $0x118] sm:$0x1f]
  %v114 = vld [vmem:[%s0 + $0x120] sm:$0x1f]
  %v115 = vld [vmem:[%s0 + $0x128] sm:$0x1f]
  %v116 = vld [vmem:[%s0 + $0x130] sm:$0x1f]
  %v117 = vld [vmem:[%s0 + $0x138] sm:$0x1f]
  %vm118 = vcmask 236544
  %v120 = vsel %vm118, %v28, 0
  %v123 = vsel %vm118, %v29, 0
  %v126 = vsel %vm118, %v30, 0
  %v129 = vsel %vm118, %v31, 0
  %v132 = vsel %vm118, %v32, 0
  %v135 = vsel %vm118, %v33, 0
  %v138 = vsel %vm118, %v34, 0
  %v141 = vsel %vm118, %v35, 0
  %v144 = vsel %vm118, %v36, 0
  %v147 = vsel %vm118, %v37, 0
  %v150 = vsel %vm118, %v38, 0
  %v153 = vsel %vm118, %v39, 0
  %v156 = vsel %vm118, %v40, 0
  %v159 = vsel %vm118, %v41, 0
  %v162 = vsel %vm118, %v42, 0
  %v165 = vsel %vm118, %v43, 0
  %v168 = vsel %vm118, %v44, 0
  %v171 = vsel %vm118, %v45, 0
  %v174 = vsel %vm118, %v46, 0
  %v177 = vsel %vm118, %v47, 0
  %v180 = vsel %vm118, %v48, 0
  %v183 = vsel %vm118, %v49, 0
  %v186 = vsel %vm118, %v50, 0
  %v189 = vsel %vm118, %v51, 0
  %v192 = vsel %vm118, %v52, 0
  %v195 = vsel %vm118, %v53, 0
  %v198 = vsel %vm118, %v54, 0
  %v201 = vsel %vm118, %v55, 0
  %v204 = vsel %vm118, %v56, 0
  %v207 = vsel %vm118, %v57, 0
  %v210 = vsel %vm118, %v58, 0
  %v213 = vsel %vm118, %v59, 0
  %v216 = vsel %vm118, %v60, 0
  %v219 = vsel %vm118, %v61, 0
  %v222 = vsel %vm118, %v62, 0
  %v225 = vsel %vm118, %v63, 0
  %v228 = vsel %vm118, %v64, 0
  %v231 = vsel %vm118, %v65, 0
  %v234 = vsel %vm118, %v66, 0
  %v237 = vsel %vm118, %v67, 0
  %v240 = vsel %vm118, %v68, 0
  %v243 = vsel %vm118, %v69, 0
  %v246 = vsel %vm118, %v70, 0
  %v249 = vsel %vm118, %v71, 0
  %v252 = vsel %vm118, %v72, 0
  %v255 = vsel %vm118, %v73, 0
  %v258 = vsel %vm118, %v74, 0
  %v261 = vsel %vm118, %v75, 0
  %v264 = vsel %vm118, %v76, 0
  %v267 = vsel %vm118, %v77, 0
  %vm269 = vcmask 1044480
  %v271 = vsel %vm269, %v108, 0
  %v274 = vsel %vm269, %v109, 0
  %v277 = vsel %vm269, %v110, 0
  %v280 = vsel %vm269, %v111, 0
  %v283 = vsel %vm269, %v112, 0
  %v286 = vsel %vm269, %v113, 0
  %v289 = vsel %vm269, %v114, 0
  %v292 = vsel %vm269, %v115, 0
  %v295 = vsel %vm269, %v116, 0
  %v298 = vsel %vm269, %v117, 0
  %300 = vmatprep.subr.mxu0 0.0
  %301 = vmatpush1.msra.mxu0 0.0
  %302 = vmatprep.subr.mxu0 0.0
  %303 = vmatpush1.msra.mxu0 0.0
  %304 = vmatprep.subr.mxu0 0.0
  %305 = vmatpush1.msra.mxu0 0.0
  %306 = vmatprep.subr.mxu0 0.0
  %307 = vmatpush1.msra.mxu0 0.0
  %308 = vmatprep.subr.mxu0 0.0
  %309 = vmatpush1.msra.mxu0 0.0
  %310 = vmatprep.subr.mxu0 0.0
  %311 = vmatpush1.msra.mxu0 0.0
  %312 = vmatprep.subr.mxu0 0.0
  %313 = vmatpush1.msra.mxu0 0.0
  %314 = vmatprep.subr.mxu0 0.0
  %315 = vmatpush1.msra.mxu0 0.0
  %316 = vmatprep.subr.mxu0 0.0
  %317 = vmatpush1.msra.mxu0 0.0
  %318 = vmatprep.subr.mxu0 0.0
  %319 = vmatpush1.msra.mxu0 0.0
  %320 = vmatprep.subr.mxu0 0.0
  %321 = vmatpush1.msra.mxu0 0.0
  %322 = vmatprep.subr.mxu0 0.0
  %323 = vmatpush1.msra.mxu0 0.0
  %324 = vmatprep.subr.mxu0 %v274
  %325 = vmatpush1.msra.mxu0 %v271
  %326 = vmatprep.subr.mxu0 %v99
  %327 = vmatpush1.msra.mxu0 %v98
  %328 = vmatprep.subr.mxu0 %v89
  %329 = vmatpush1.msra.mxu0 %v88
  %330 = vmatprep.subr.mxu0 %v79
  %331 = vmatpush1.msra.mxu0 %v78
  %332 = vmatprep.subr.mxu0 0.0
  %333 = vmatpush2.msra.mxu0 0.0
  %334 = vmatprep.subr.mxu0 0.0
  %335 = vmatpush2.msra.mxu0 0.0
  %336 = vmatprep.subr.mxu0 0.0
  %337 = vmatpush2.msra.mxu0 0.0
  %338 = vmatprep.subr.mxu0 0.0
  %339 = vmatpush2.msra.mxu0 0.0
  %340 = vmatprep.subr.mxu0 0.0
  %341 = vmatpush2.msra.mxu0 0.0
  %342 = vmatprep.subr.mxu0 0.0
  %343 = vmatpush2.msra.mxu0 0.0
  %344 = vmatprep.subr.mxu0 0.0
  %345 = vmatpush2.msra.mxu0 0.0
  %346 = vmatprep.subr.mxu0 0.0
  %347 = vmatpush2.msra.mxu0 0.0
  %348 = vmatprep.subr.mxu0 0.0
  %349 = vmatpush2.msra.mxu0 0.0
  %350 = vmatprep.subr.mxu0 0.0
  %351 = vmatpush2.msra.mxu0 0.0
  %352 = vmatprep.subr.mxu0 0.0
  %353 = vmatpush2.msra.mxu0 0.0
  %354 = vmatprep.subr.mxu0 0.0
  %355 = vmatpush2.msra.mxu0 0.0
  %356 = vmatprep.subr.mxu0 0.0
  %357 = vmatpush2.msra.mxu0 0.0
  %358 = vmatprep.subr.mxu0 0.0
  %359 = vmatpush2.msra.mxu0 0.0
  %360 = vmatprep.subr.mxu0 0.0
  %361 = vmatpush2.msra.mxu0 0.0
  %362 = vmatprep.subr.mxu0 0.0
  %363 = vmatpush2.msra.mxu0 0.0
  %364 = vmatprep.mubr.f32.mxu0 0.0
  %365 = vmatmul.mubr.f32.gmra.mxu0 %v120
  %v366 = vpop.f32.mrf.mxu0
  %v367 = vadd.f32 0.0, %v366
  %v368 = vpop.f32.mrf.mxu0
  %v369 = vadd.f32 0.0, %v368
  %370 = vmatprep.mubr.f32.mxu0 0.0
  %371 = vmatmul.mubr.f32.gmra.mxu0 %v123
  %v372 = vpop.f32.mrf.mxu0
  %v373 = vadd.f32 0.0, %v372
  %v374 = vpop.f32.mrf.mxu0
  %v375 = vadd.f32 0.0, %v374
  %376 = vmatprep.mubr.f32.mxu0 0.0
  %377 = vmatmul.mubr.f32.gmra.mxu0 %v126
  %v378 = vpop.f32.mrf.mxu0
  %v379 = vadd.f32 0.0, %v378
  %v380 = vpop.f32.mrf.mxu0
  %v381 = vadd.f32 0.0, %v380
  %382 = vmatprep.mubr.f32.mxu0 0.0
  %383 = vmatmul.mubr.f32.gmra.mxu0 %v129
  %v384 = vpop.f32.mrf.mxu0
  %v385 = vadd.f32 0.0, %v384
  %v386 = vpop.f32.mrf.mxu0
  %v387 = vadd.f32 0.0, %v386
  %388 = vmatprep.mubr.f32.mxu0 0.0
  %389 = vmatmul.mubr.f32.gmra.mxu0 %v132
  %v390 = vpop.f32.mrf.mxu0
  %v391 = vadd.f32 0.0, %v390
  %v392 = vpop.f32.mrf.mxu0
  %v393 = vadd.f32 0.0, %v392
  %394 = vmatprep.mubr.f32.mxu0 0.0
  %395 = vmatmul.mubr.f32.gmra.mxu0 %v135
  %v396 = vpop.f32.mrf.mxu0
  %v397 = vadd.f32 0.0, %v396
  %v398 = vpop.f32.mrf.mxu0
  %v399 = vadd.f32 0.0, %v398
  %400 = vmatprep.mubr.f32.mxu0 0.0
  %401 = vmatmul.mubr.f32.gmra.mxu0 %v138
  %v402 = vpop.f32.mrf.mxu0
  %v403 = vadd.f32 0.0, %v402
  %v404 = vpop.f32.mrf.mxu0
  %v405 = vadd.f32 0.0, %v404
  %406 = vmatprep.mubr.f32.mxu0 0.0
  %407 = vmatmul.mubr.f32.gmra.mxu0 %v141
  %v408 = vpop.f32.mrf.mxu0
  %v409 = vadd.f32 0.0, %v408
  %v410 = vpop.f32.mrf.mxu0
  %v411 = vadd.f32 0.0, %v410
  %412 = vmatprep.mubr.f32.mxu0 0.0
  %413 = vmatmul.mubr.f32.gmra.mxu0 %v144
  %v414 = vpop.f32.mrf.mxu0
  %v415 = vadd.f32 0.0, %v414
  %v416 = vpop.f32.mrf.mxu0
  %v417 = vadd.f32 0.0, %v416
  %418 = vmatprep.mubr.f32.mxu0 0.0
  %419 = vmatmul.mubr.f32.gmra.mxu0 %v147
  %v420 = vpop.f32.mrf.mxu0
  %v421 = vadd.f32 0.0, %v420
  %v422 = vpop.f32.mrf.mxu0
  %v423 = vadd.f32 0.0, %v422
  %424 = vmatprep.mubr.f32.mxu0 0.0
  %425 = vmatmul.mubr.f32.gmra.mxu0 %v150
  %v426 = vpop.f32.mrf.mxu0
  %v427 = vadd.f32 0.0, %v426
  %v428 = vpop.f32.mrf.mxu0
  %v429 = vadd.f32 0.0, %v428
  %430 = vmatprep.mubr.f32.mxu0 0.0
  %431 = vmatmul.mubr.f32.gmra.mxu0 %v153
  %v432 = vpop.f32.mrf.mxu0
  %v433 = vadd.f32 0.0, %v432
  %v434 = vpop.f32.mrf.mxu0
  %v435 = vadd.f32 0.0, %v434
  %436 = vmatprep.mubr.f32.mxu0 0.0
  %437 = vmatmul.mubr.f32.gmra.mxu0 %v156
  %v438 = vpop.f32.mrf.mxu0
  %v439 = vadd.f32 0.0, %v438
  %v440 = vpop.f32.mrf.mxu0
  %v441 = vadd.f32 0.0, %v440
  %442 = vmatprep.mubr.f32.mxu0 0.0
  %443 = vmatmul.mubr.f32.gmra.mxu0 %v159
  %v444 = vpop.f32.mrf.mxu0
  %v445 = vadd.f32 0.0, %v444
  %v446 = vpop.f32.mrf.mxu0
  %v447 = vadd.f32 0.0, %v446
  %448 = vmatprep.mubr.f32.mxu0 0.0
  %449 = vmatmul.mubr.f32.gmra.mxu0 %v162
  %v450 = vpop.f32.mrf.mxu0
  %v451 = vadd.f32 0.0, %v450
  %v452 = vpop.f32.mrf.mxu0
  %v453 = vadd.f32 0.0, %v452
  %454 = vmatprep.mubr.f32.mxu0 0.0
  %455 = vmatmul.mubr.f32.gmra.mxu0 %v165
  %v456 = vpop.f32.mrf.mxu0
  %v457 = vadd.f32 0.0, %v456
  %v458 = vpop.f32.mrf.mxu0
  %v459 = vadd.f32 0.0, %v458
  %460 = vmatprep.mubr.f32.mxu0 0.0
  %461 = vmatmul.mubr.f32.gmra.mxu0 %v168
  %v462 = vpop.f32.mrf.mxu0
  %v463 = vadd.f32 0.0, %v462
  %v464 = vpop.f32.mrf.mxu0
  %v465 = vadd.f32 0.0, %v464
  %466 = vmatprep.mubr.f32.mxu0 0.0
  %467 = vmatmul.mubr.f32.gmra.mxu0 %v171
  %v468 = vpop.f32.mrf.mxu0
  %v469 = vadd.f32 0.0, %v468
  %v470 = vpop.f32.mrf.mxu0
  %v471 = vadd.f32 0.0, %v470
  %472 = vmatprep.mubr.f32.mxu0 0.0
  %473 = vmatmul.mubr.f32.gmra.mxu0 %v174
  %v474 = vpop.f32.mrf.mxu0
  %v475 = vadd.f32 0.0, %v474
  %v476 = vpop.f32.mrf.mxu0
  %v477 = vadd.f32 0.0, %v476
  %478 = vmatprep.mubr.f32.mxu0 0.0
  %479 = vmatmul.mubr.f32.gmra.mxu0 %v177
  %v480 = vpop.f32.mrf.mxu0
  %v481 = vadd.f32 0.0, %v480
  %v482 = vpop.f32.mrf.mxu0
  %v483 = vadd.f32 0.0, %v482
  %484 = vmatprep.mubr.f32.mxu0 0.0
  %485 = vmatmul.mubr.f32.gmra.mxu0 %v180
  %v486 = vpop.f32.mrf.mxu0
  %v487 = vadd.f32 0.0, %v486
  %v488 = vpop.f32.mrf.mxu0
  %v489 = vadd.f32 0.0, %v488
  %490 = vmatprep.mubr.f32.mxu0 0.0
  %491 = vmatmul.mubr.f32.gmra.mxu0 %v183
  %v492 = vpop.f32.mrf.mxu0
  %v493 = vadd.f32 0.0, %v492
  %v494 = vpop.f32.mrf.mxu0
  %v495 = vadd.f32 0.0, %v494
  %496 = vmatprep.mubr.f32.mxu0 0.0
  %497 = vmatmul.mubr.f32.gmra.mxu0 %v186
  %v498 = vpop.f32.mrf.mxu0
  %v499 = vadd.f32 0.0, %v498
  %v500 = vpop.f32.mrf.mxu0
  %v501 = vadd.f32 0.0, %v500
  %502 = vmatprep.mubr.f32.mxu0 0.0
  %503 = vmatmul.mubr.f32.gmra.mxu0 %v189
  %v504 = vpop.f32.mrf.mxu0
  %v505 = vadd.f32 0.0, %v504
  %v506 = vpop.f32.mrf.mxu0
  %v507 = vadd.f32 0.0, %v506
  %508 = vmatprep.mubr.f32.mxu0 0.0
  %509 = vmatmul.mubr.f32.gmra.mxu0 %v192
  %v510 = vpop.f32.mrf.mxu0
  %v511 = vadd.f32 0.0, %v510
  %v512 = vpop.f32.mrf.mxu0
  %v513 = vadd.f32 0.0, %v512
  %514 = vmatprep.mubr.f32.mxu0 0.0
  %515 = vmatmul.mubr.f32.gmra.mxu0 %v195
  %v516 = vpop.f32.mrf.mxu0
  %v517 = vadd.f32 0.0, %v516
  %v518 = vpop.f32.mrf.mxu0
  %v519 = vadd.f32 0.0, %v518
  %520 = vmatprep.mubr.f32.mxu0 0.0
  %521 = vmatmul.mubr.f32.gmra.mxu0 %v198
  %v522 = vpop.f32.mrf.mxu0
  %v523 = vadd.f32 0.0, %v522
  %v524 = vpop.f32.mrf.mxu0
  %v525 = vadd.f32 0.0, %v524
  %526 = vmatprep.mubr.f32.mxu0 0.0
  %527 = vmatmul.mubr.f32.gmra.mxu0 %v201
  %v528 = vpop.f32.mrf.mxu0
  %v529 = vadd.f32 0.0, %v528
  %v530 = vpop.f32.mrf.mxu0
  %v531 = vadd.f32 0.0, %v530
  %532 = vmatprep.mubr.f32.mxu0 0.0
  %533 = vmatmul.mubr.f32.gmra.mxu0 %v204
  %v534 = vpop.f32.mrf.mxu0
  %v535 = vadd.f32 0.0, %v534
  %v536 = vpop.f32.mrf.mxu0
  %v537 = vadd.f32 0.0, %v536
  %538 = vmatprep.mubr.f32.mxu0 0.0
  %539 = vmatmul.mubr.f32.gmra.mxu0 %v207
  %v540 = vpop.f32.mrf.mxu0
  %v541 = vadd.f32 0.0, %v540
  %v542 = vpop.f32.mrf.mxu0
  %v543 = vadd.f32 0.0, %v542
  %544 = vmatprep.mubr.f32.mxu0 0.0
  %545 = vmatmul.mubr.f32.gmra.mxu0 %v210
  %v546 = vpop.f32.mrf.mxu0
  %v547 = vadd.f32 0.0, %v546
  %v548 = vpop.f32.mrf.mxu0
  %v549 = vadd.f32 0.0, %v548
  %550 = vmatprep.mubr.f32.mxu0 0.0
  %551 = vmatmul.mubr.f32.gmra.mxu0 %v213
  %v552 = vpop.f32.mrf.mxu0
  %v553 = vadd.f32 0.0, %v552
  %v554 = vpop.f32.mrf.mxu0
  %v555 = vadd.f32 0.0, %v554
  %556 = vmatprep.mubr.f32.mxu0 0.0
  %557 = vmatmul.mubr.f32.gmra.mxu0 %v216
  %v558 = vpop.f32.mrf.mxu0
  %v559 = vadd.f32 0.0, %v558
  %v560 = vpop.f32.mrf.mxu0
  %v561 = vadd.f32 0.0, %v560
  %562 = vmatprep.mubr.f32.mxu0 0.0
  %563 = vmatmul.mubr.f32.gmra.mxu0 %v219
  %v564 = vpop.f32.mrf.mxu0
  %v565 = vadd.f32 0.0, %v564
  %v566 = vpop.f32.mrf.mxu0
  %v567 = vadd.f32 0.0, %v566
  %568 = vmatprep.mubr.f32.mxu0 0.0
  %569 = vmatmul.mubr.f32.gmra.mxu0 %v222
  %v570 = vpop.f32.mrf.mxu0
  %v571 = vadd.f32 0.0, %v570
  %v572 = vpop.f32.mrf.mxu0
  %v573 = vadd.f32 0.0, %v572
  %574 = vmatprep.mubr.f32.mxu0 0.0
  %575 = vmatmul.mubr.f32.gmra.mxu0 %v225
  %v576 = vpop.f32.mrf.mxu0
  %v577 = vadd.f32 0.0, %v576
  %v578 = vpop.f32.mrf.mxu0
  %v579 = vadd.f32 0.0, %v578
  %580 = vmatprep.mubr.f32.mxu0 0.0
  %581 = vmatmul.mubr.f32.gmra.mxu0 %v228
  %v582 = vpop.f32.mrf.mxu0
  %v583 = vadd.f32 0.0, %v582
  %v584 = vpop.f32.mrf.mxu0
  %v585 = vadd.f32 0.0, %v584
  %586 = vmatprep.mubr.f32.mxu0 0.0
  %587 = vmatmul.mubr.f32.gmra.mxu0 %v231
  %v588 = vpop.f32.mrf.mxu0
  %v589 = vadd.f32 0.0, %v588
  %v590 = vpop.f32.mrf.mxu0
  %v591 = vadd.f32 0.0, %v590
  %592 = vmatprep.mubr.f32.mxu0 0.0
  %593 = vmatmul.mubr.f32.gmra.mxu0 %v234
  %v594 = vpop.f32.mrf.mxu0
  %v595 = vadd.f32 0.0, %v594
  %v596 = vpop.f32.mrf.mxu0
  %v597 = vadd.f32 0.0, %v596
  %598 = vmatprep.mubr.f32.mxu0 0.0
  %599 = vmatmul.mubr.f32.gmra.mxu0 %v237
  %v600 = vpop.f32.mrf.mxu0
  %v601 = vadd.f32 0.0, %v600
  %v602 = vpop.f32.mrf.mxu0
  %v603 = vadd.f32 0.0, %v602
  %604 = vmatprep.mubr.f32.mxu0 0.0
  %605 = vmatmul.mubr.f32.gmra.mxu0 %v240
  %v606 = vpop.f32.mrf.mxu0
  %v607 = vadd.f32 0.0, %v606
  %v608 = vpop.f32.mrf.mxu0
  %v609 = vadd.f32 0.0, %v608
  %610 = vmatprep.mubr.f32.mxu0 0.0
  %611 = vmatmul.mubr.f32.gmra.mxu0 %v243
  %v612 = vpop.f32.mrf.mxu0
  %v613 = vadd.f32 0.0, %v612
  %v614 = vpop.f32.mrf.mxu0
  %v615 = vadd.f32 0.0, %v614
  %616 = vmatprep.mubr.f32.mxu0 0.0
  %617 = vmatmul.mubr.f32.gmra.mxu0 %v246
  %v618 = vpop.f32.mrf.mxu0
  %v619 = vadd.f32 0.0, %v618
  %v620 = vpop.f32.mrf.mxu0
  %v621 = vadd.f32 0.0, %v620
  %622 = vmatprep.mubr.f32.mxu0 0.0
  %623 = vmatmul.mubr.f32.gmra.mxu0 %v249
  %v624 = vpop.f32.mrf.mxu0
  %v625 = vadd.f32 0.0, %v624
  %v626 = vpop.f32.mrf.mxu0
  %v627 = vadd.f32 0.0, %v626
  %628 = vmatprep.mubr.f32.mxu0 0.0
  %629 = vmatmul.mubr.f32.gmra.mxu0 %v252
  %v630 = vpop.f32.mrf.mxu0
  %v631 = vadd.f32 0.0, %v630
  %v632 = vpop.f32.mrf.mxu0
  %v633 = vadd.f32 0.0, %v632
  %634 = vmatprep.mubr.f32.mxu0 0.0
  %635 = vmatmul.mubr.f32.gmra.mxu0 %v255
  %v636 = vpop.f32.mrf.mxu0
  %v637 = vadd.f32 0.0, %v636
  %v638 = vpop.f32.mrf.mxu0
  %v639 = vadd.f32 0.0, %v638
  %640 = vmatprep.mubr.f32.mxu0 0.0
  %641 = vmatmul.mubr.f32.gmra.mxu0 %v258
  %v642 = vpop.f32.mrf.mxu0
  %v643 = vadd.f32 0.0, %v642
  %v644 = vpop.f32.mrf.mxu0
  %v645 = vadd.f32 0.0, %v644
  %646 = vmatprep.mubr.f32.mxu0 0.0
  %647 = vmatmul.mubr.f32.gmra.mxu0 %v261
  %v648 = vpop.f32.mrf.mxu0
  %v649 = vadd.f32 0.0, %v648
  %v650 = vpop.f32.mrf.mxu0
  %v651 = vadd.f32 0.0, %v650
  %652 = vmatprep.mubr.f32.mxu0 0.0
  %653 = vmatmul.mubr.f32.gmra.mxu0 %v264
  %v654 = vpop.f32.mrf.mxu0
  %v655 = vadd.f32 0.0, %v654
  %v656 = vpop.f32.mrf.mxu0
  %v657 = vadd.f32 0.0, %v656
  %658 = vmatprep.mubr.f32.mxu0 0.0
  %659 = vmatmul.mubr.f32.gmra.mxu0 %v267
  %v660 = vpop.f32.mrf.mxu0
  %v661 = vadd.f32 0.0, %v660
  %v662 = vpop.f32.mrf.mxu0
  %v663 = vadd.f32 0.0, %v662
  %664 = vdwg.mxu0
  %665 = vmatprep.subr.mxu0 0.0
  %666 = vmatpush1.msra.mxu0 0.0
  %667 = vmatprep.subr.mxu0 0.0
  %668 = vmatpush1.msra.mxu0 0.0
  %669 = vmatprep.subr.mxu0 0.0
  %670 = vmatpush1.msra.mxu0 0.0
  %671 = vmatprep.subr.mxu0 0.0
  %672 = vmatpush1.msra.mxu0 0.0
  %673 = vmatprep.subr.mxu0 0.0
  %674 = vmatpush1.msra.mxu0 0.0
  %675 = vmatprep.subr.mxu0 0.0
  %676 = vmatpush1.msra.mxu0 0.0
  %677 = vmatprep.subr.mxu0 0.0
  %678 = vmatpush1.msra.mxu0 0.0
  %679 = vmatprep.subr.mxu0 0.0
  %680 = vmatpush1.msra.mxu0 0.0
  %681 = vmatprep.subr.mxu0 0.0
  %682 = vmatpush1.msra.mxu0 0.0
  %683 = vmatprep.subr.mxu0 0.0
  %684 = vmatpush1.msra.mxu0 0.0
  %685 = vmatprep.subr.mxu0 0.0
  %686 = vmatpush1.msra.mxu0 0.0
  %687 = vmatprep.subr.mxu0 0.0
  %688 = vmatpush1.msra.mxu0 0.0
  %689 = vmatprep.subr.mxu0 %v280
  %690 = vmatpush1.msra.mxu0 %v277
  %691 = vmatprep.subr.mxu0 %v101
  %692 = vmatpush1.msra.mxu0 %v100
  %693 = vmatprep.subr.mxu0 %v91
  %694 = vmatpush1.msra.mxu0 %v90
  %695 = vmatprep.subr.mxu0 %v81
  %696 = vmatpush1.msra.mxu0 %v80
  %697 = vmatprep.subr.mxu0 0.0
  %698 = vmatpush2.msra.mxu0 0.0
  %699 = vmatprep.subr.mxu0 0.0
  %700 = vmatpush2.msra.mxu0 0.0
  %701 = vmatprep.subr.mxu0 0.0
  %702 = vmatpush2.msra.mxu0 0.0
  %703 = vmatprep.subr.mxu0 0.0
  %704 = vmatpush2.msra.mxu0 0.0
  %705 = vmatprep.subr.mxu0 0.0
  %706 = vmatpush2.msra.mxu0 0.0
  %707 = vmatprep.subr.mxu0 0.0
  %708 = vmatpush2.msra.mxu0 0.0
  %709 = vmatprep.subr.mxu0 0.0
  %710 = vmatpush2.msra.mxu0 0.0
  %711 = vmatprep.subr.mxu0 0.0
  %712 = vmatpush2.msra.mxu0 0.0
  %713 = vmatprep.subr.mxu0 0.0
  %714 = vmatpush2.msra.mxu0 0.0
  %715 = vmatprep.subr.mxu0 0.0
  %716 = vmatpush2.msra.mxu0 0.0
  %717 = vmatprep.subr.mxu0 0.0
  %718 = vmatpush2.msra.mxu0 0.0
  %719 = vmatprep.subr.mxu0 0.0
  %720 = vmatpush2.msra.mxu0 0.0
  %721 = vmatprep.subr.mxu0 0.0
  %722 = vmatpush2.msra.mxu0 0.0
  %723 = vmatprep.subr.mxu0 0.0
  %724 = vmatpush2.msra.mxu0 0.0
  %725 = vmatprep.subr.mxu0 0.0
  %726 = vmatpush2.msra.mxu0 0.0
  %727 = vmatprep.subr.mxu0 0.0
  %728 = vmatpush2.msra.mxu0 0.0
  %729 = vmatprep.mubr.f32.mxu0 0.0
  %730 = vmatmul.mubr.f32.gmra.mxu0 %v120
  %v731 = vpop.f32.mrf.mxu0
  %v732 = vadd.f32 0.0, %v731
  %v733 = vpop.f32.mrf.mxu0
  %v734 = vadd.f32 0.0, %v733
  %735 = vmatprep.mubr.f32.mxu0 0.0
  %736 = vmatmul.mubr.f32.gmra.mxu0 %v123
  %v737 = vpop.f32.mrf.mxu0
  %v738 = vadd.f32 0.0, %v737
  %v739 = vpop.f32.mrf.mxu0
  %v740 = vadd.f32 0.0, %v739
  %741 = vmatprep.mubr.f32.mxu0 0.0
  %742 = vmatmul.mubr.f32.gmra.mxu0 %v126
  %v743 = vpop.f32.mrf.mxu0
  %v744 = vadd.f32 0.0, %v743
  %v745 = vpop.f32.mrf.mxu0
  %v746 = vadd.f32 0.0, %v745
  %747 = vmatprep.mubr.f32.mxu0 0.0
  %748 = vmatmul.mubr.f32.gmra.mxu0 %v129
  %v749 = vpop.f32.mrf.mxu0
  %v750 = vadd.f32 0.0, %v749
  %v751 = vpop.f32.mrf.mxu0
  %v752 = vadd.f32 0.0, %v751
  %753 = vmatprep.mubr.f32.mxu0 0.0
  %754 = vmatmul.mubr.f32.gmra.mxu0 %v132
  %v755 = vpop.f32.mrf.mxu0
  %v756 = vadd.f32 0.0, %v755
  %v757 = vpop.f32.mrf.mxu0
  %v758 = vadd.f32 0.0, %v757
  %759 = vmatprep.mubr.f32.mxu0 0.0
  %760 = vmatmul.mubr.f32.gmra.mxu0 %v135
  %v761 = vpop.f32.mrf.mxu0
  %v762 = vadd.f32 0.0, %v761
  %v763 = vpop.f32.mrf.mxu0
  %v764 = vadd.f32 0.0, %v763
  %765 = vmatprep.mubr.f32.mxu0 0.0
  %766 = vmatmul.mubr.f32.gmra.mxu0 %v138
  %v767 = vpop.f32.mrf.mxu0
  %v768 = vadd.f32 0.0, %v767
  %v769 = vpop.f32.mrf.mxu0
  %v770 = vadd.f32 0.0, %v769
  %771 = vmatprep.mubr.f32.mxu0 0.0
  %772 = vmatmul.mubr.f32.gmra.mxu0 %v141
  %v773 = vpop.f32.mrf.mxu0
  %v774 = vadd.f32 0.0, %v773
  %v775 = vpop.f32.mrf.mxu0
  %v776 = vadd.f32 0.0, %v775
  %777 = vmatprep.mubr.f32.mxu0 0.0
  %778 = vmatmul.mubr.f32.gmra.mxu0 %v144
  %v779 = vpop.f32.mrf.mxu0
  %v780 = vadd.f32 0.0, %v779
  %v781 = vpop.f32.mrf.mxu0
  %v782 = vadd.f32 0.0, %v781
  %783 = vmatprep.mubr.f32.mxu0 0.0
  %784 = vmatmul.mubr.f32.gmra.mxu0 %v147
  %v785 = vpop.f32.mrf.mxu0
  %v786 = vadd.f32 0.0, %v785
  %v787 = vpop.f32.mrf.mxu0
  %v788 = vadd.f32 0.0, %v787
  %789 = vmatprep.mubr.f32.mxu0 0.0
  %790 = vmatmul.mubr.f32.gmra.mxu0 %v150
  %v791 = vpop.f32.mrf.mxu0
  %v792 = vadd.f32 0.0, %v791
  %v793 = vpop.f32.mrf.mxu0
  %v794 = vadd.f32 0.0, %v793
  %795 = vmatprep.mubr.f32.mxu0 0.0
  %796 = vmatmul.mubr.f32.gmra.mxu0 %v153
  %v797 = vpop.f32.mrf.mxu0
  %v798 = vadd.f32 0.0, %v797
  %v799 = vpop.f32.mrf.mxu0
  %v800 = vadd.f32 0.0, %v799
  %801 = vmatprep.mubr.f32.mxu0 0.0
  %802 = vmatmul.mubr.f32.gmra.mxu0 %v156
  %v803 = vpop.f32.mrf.mxu0
  %v804 = vadd.f32 0.0, %v803
  %v805 = vpop.f32.mrf.mxu0
  %v806 = vadd.f32 0.0, %v805
  %807 = vmatprep.mubr.f32.mxu0 0.0
  %808 = vmatmul.mubr.f32.gmra.mxu0 %v159
  %v809 = vpop.f32.mrf.mxu0
  %v810 = vadd.f32 0.0, %v809
  %v811 = vpop.f32.mrf.mxu0
  %v812 = vadd.f32 0.0, %v811
  %813 = vmatprep.mubr.f32.mxu0 0.0
  %814 = vmatmul.mubr.f32.gmra.mxu0 %v162
  %v815 = vpop.f32.mrf.mxu0
  %v816 = vadd.f32 0.0, %v815
  %v817 = vpop.f32.mrf.mxu0
  %v818 = vadd.f32 0.0, %v817
  %819 = vmatprep.mubr.f32.mxu0 0.0
  %820 = vmatmul.mubr.f32.gmra.mxu0 %v165
  %v821 = vpop.f32.mrf.mxu0
  %v822 = vadd.f32 0.0, %v821
  %v823 = vpop.f32.mrf.mxu0
  %v824 = vadd.f32 0.0, %v823
  %825 = vmatprep.mubr.f32.mxu0 0.0
  %826 = vmatmul.mubr.f32.gmra.mxu0 %v168
  %v827 = vpop.f32.mrf.mxu0
  %v828 = vadd.f32 0.0, %v827
  %v829 = vpop.f32.mrf.mxu0
  %v830 = vadd.f32 0.0, %v829
  %831 = vmatprep.mubr.f32.mxu0 0.0
  %832 = vmatmul.mubr.f32.gmra.mxu0 %v171
  %v833 = vpop.f32.mrf.mxu0
  %v834 = vadd.f32 0.0, %v833
  %v835 = vpop.f32.mrf.mxu0
  %v836 = vadd.f32 0.0, %v835
  %837 = vmatprep.mubr.f32.mxu0 0.0
  %838 = vmatmul.mubr.f32.gmra.mxu0 %v174
  %v839 = vpop.f32.mrf.mxu0
  %v840 = vadd.f32 0.0, %v839
  %v841 = vpop.f32.mrf.mxu0
  %v842 = vadd.f32 0.0, %v841
  %843 = vmatprep.mubr.f32.mxu0 0.0
  %844 = vmatmul.mubr.f32.gmra.mxu0 %v177
  %v845 = vpop.f32.mrf.mxu0
  %v846 = vadd.f32 0.0, %v845
  %v847 = vpop.f32.mrf.mxu0
  %v848 = vadd.f32 0.0, %v847
  %849 = vmatprep.mubr.f32.mxu0 0.0
  %850 = vmatmul.mubr.f32.gmra.mxu0 %v180
  %v851 = vpop.f32.mrf.mxu0
  %v852 = vadd.f32 0.0, %v851
  %v853 = vpop.f32.mrf.mxu0
  %v854 = vadd.f32 0.0, %v853
  %855 = vmatprep.mubr.f32.mxu0 0.0
  %856 = vmatmul.mubr.f32.gmra.mxu0 %v183
  %v857 = vpop.f32.mrf.mxu0
  %v858 = vadd.f32 0.0, %v857
  %v859 = vpop.f32.mrf.mxu0
  %v860 = vadd.f32 0.0, %v859
  %861 = vmatprep.mubr.f32.mxu0 0.0
  %862 = vmatmul.mubr.f32.gmra.mxu0 %v186
  %v863 = vpop.f32.mrf.mxu0
  %v864 = vadd.f32 0.0, %v863
  %v865 = vpop.f32.mrf.mxu0
  %v866 = vadd.f32 0.0, %v865
  %867 = vmatprep.mubr.f32.mxu0 0.0
  %868 = vmatmul.mubr.f32.gmra.mxu0 %v189
  %v869 = vpop.f32.mrf.mxu0
  %v870 = vadd.f32 0.0, %v869
  %v871 = vpop.f32.mrf.mxu0
  %v872 = vadd.f32 0.0, %v871
  %873 = vmatprep.mubr.f32.mxu0 0.0
  %874 = vmatmul.mubr.f32.gmra.mxu0 %v192
  %v875 = vpop.f32.mrf.mxu0
  %v876 = vadd.f32 0.0, %v875
  %v877 = vpop.f32.mrf.mxu0
  %v878 = vadd.f32 0.0, %v877
  %879 = vmatprep.mubr.f32.mxu0 0.0
  %880 = vmatmul.mubr.f32.gmra.mxu0 %v195
  %v881 = vpop.f32.mrf.mxu0
  %v882 = vadd.f32 0.0, %v881
  %v883 = vpop.f32.mrf.mxu0
  %v884 = vadd.f32 0.0, %v883
  %885 = vmatprep.mubr.f32.mxu0 0.0
  %886 = vmatmul.mubr.f32.gmra.mxu0 %v198
  %v887 = vpop.f32.mrf.mxu0
  %v888 = vadd.f32 0.0, %v887
  %v889 = vpop.f32.mrf.mxu0
  %v890 = vadd.f32 0.0, %v889
  %891 = vmatprep.mubr.f32.mxu0 0.0
  %892 = vmatmul.mubr.f32.gmra.mxu0 %v201
  %v893 = vpop.f32.mrf.mxu0
  %v894 = vadd.f32 0.0, %v893
  %v895 = vpop.f32.mrf.mxu0
  %v896 = vadd.f32 0.0, %v895
  %897 = vmatprep.mubr.f32.mxu0 0.0
  %898 = vmatmul.mubr.f32.gmra.mxu0 %v204
  %v899 = vpop.f32.mrf.mxu0
  %v900 = vadd.f32 0.0, %v899
  %v901 = vpop.f32.mrf.mxu0
  %v902 = vadd.f32 0.0, %v901
  %903 = vmatprep.mubr.f32.mxu0 0.0
  %904 = vmatmul.mubr.f32.gmra.mxu0 %v207
  %v905 = vpop.f32.mrf.mxu0
  %v906 = vadd.f32 0.0, %v905
  %v907 = vpop.f32.mrf.mxu0
  %v908 = vadd.f32 0.0, %v907
  %909 = vmatprep.mubr.f32.mxu0 0.0
  %910 = vmatmul.mubr.f32.gmra.mxu0 %v210
  %v911 = vpop.f32.mrf.mxu0
  %v912 = vadd.f32 0.0, %v911
  %v913 = vpop.f32.mrf.mxu0
  %v914 = vadd.f32 0.0, %v913
  %915 = vmatprep.mubr.f32.mxu0 0.0
  %916 = vmatmul.mubr.f32.gmra.mxu0 %v213
  %v917 = vpop.f32.mrf.mxu0
  %v918 = vadd.f32 0.0, %v917
  %v919 = vpop.f32.mrf.mxu0
  %v920 = vadd.f32 0.0, %v919
  %921 = vmatprep.mubr.f32.mxu0 0.0
  %922 = vmatmul.mubr.f32.gmra.mxu0 %v216
  %v923 = vpop.f32.mrf.mxu0
  %v924 = vadd.f32 0.0, %v923
  %v925 = vpop.f32.mrf.mxu0
  %v926 = vadd.f32 0.0, %v925
  %927 = vmatprep.mubr.f32.mxu0 0.0
  %928 = vmatmul.mubr.f32.gmra.mxu0 %v219
  %v929 = vpop.f32.mrf.mxu0
  %v930 = vadd.f32 0.0, %v929
  %v931 = vpop.f32.mrf.mxu0
  %v932 = vadd.f32 0.0, %v931
  %933 = vmatprep.mubr.f32.mxu0 0.0
  %934 = vmatmul.mubr.f32.gmra.mxu0 %v222
  %v935 = vpop.f32.mrf.mxu0
  %v936 = vadd.f32 0.0, %v935
  %v937 = vpop.f32.mrf.mxu0
  %v938 = vadd.f32 0.0, %v937
  %939 = vmatprep.mubr.f32.mxu0 0.0
  %940 = vmatmul.mubr.f32.gmra.mxu0 %v225
  %v941 = vpop.f32.mrf.mxu0
  %v942 = vadd.f32 0.0, %v941
  %v943 = vpop.f32.mrf.mxu0
  %v944 = vadd.f32 0.0, %v943
  %945 = vmatprep.mubr.f32.mxu0 0.0
  %946 = vmatmul.mubr.f32.gmra.mxu0 %v228
  %v947 = vpop.f32.mrf.mxu0
  %v948 = vadd.f32 0.0, %v947
  %v949 = vpop.f32.mrf.mxu0
  %v950 = vadd.f32 0.0, %v949
  %951 = vmatprep.mubr.f32.mxu0 0.0
  %952 = vmatmul.mubr.f32.gmra.mxu0 %v231
  %v953 = vpop.f32.mrf.mxu0
  %v954 = vadd.f32 0.0, %v953
  %v955 = vpop.f32.mrf.mxu0
  %v956 = vadd.f32 0.0, %v955
  %957 = vmatprep.mubr.f32.mxu0 0.0
  %958 = vmatmul.mubr.f32.gmra.mxu0 %v234
  %v959 = vpop.f32.mrf.mxu0
  %v960 = vadd.f32 0.0, %v959
  %v961 = vpop.f32.mrf.mxu0
  %v962 = vadd.f32 0.0, %v961
  %963 = vmatprep.mubr.f32.mxu0 0.0
  %964 = vmatmul.mubr.f32.gmra.mxu0 %v237
  %v965 = vpop.f32.mrf.mxu0
  %v966 = vadd.f32 0.0, %v965
  %v967 = vpop.f32.mrf.mxu0
  %v968 = vadd.f32 0.0, %v967
  %969 = vmatprep.mubr.f32.mxu0 0.0
  %970 = vmatmul.mubr.f32.gmra.mxu0 %v240
  %v971 = vpop.f32.mrf.mxu0
  %v972 = vadd.f32 0.0, %v971
  %v973 = vpop.f32.mrf.mxu0
  %v974 = vadd.f32 0.0, %v973
  %975 = vmatprep.mubr.f32.mxu0 0.0
  %976 = vmatmul.mubr.f32.gmra.mxu0 %v243
  %v977 = vpop.f32.mrf.mxu0
  %v978 = vadd.f32 0.0, %v977
  %v979 = vpop.f32.mrf.mxu0
  %v980 = vadd.f32 0.0, %v979
  %981 = vmatprep.mubr.f32.mxu0 0.0
  %982 = vmatmul.mubr.f32.gmra.mxu0 %v246
  %v983 = vpop.f32.mrf.mxu0
  %v984 = vadd.f32 0.0, %v983
  %v985 = vpop.f32.mrf.mxu0
  %v986 = vadd.f32 0.0, %v985
  %987 = vmatprep.mubr.f32.mxu0 0.0
  %988 = vmatmul.mubr.f32.gmra.mxu0 %v249
  %v989 = vpop.f32.mrf.mxu0
  %v990 = vadd.f32 0.0, %v989
  %v991 = vpop.f32.mrf.mxu0
  %v992 = vadd.f32 0.0, %v991
  %993 = vmatprep.mubr.f32.mxu0 0.0
  %994 = vmatmul.mubr.f32.gmra.mxu0 %v252
  %v995 = vpop.f32.mrf.mxu0
  %v996 = vadd.f32 0.0, %v995
  %v997 = vpop.f32.mrf.mxu0
  %v998 = vadd.f32 0.0, %v997
  %999 = vmatprep.mubr.f32.mxu0 0.0
  %1000 = vmatmul.mubr.f32.gmra.mxu0 %v255
  %v1001 = vpop.f32.mrf.mxu0
  %v1002 = vadd.f32 0.0, %v1001
  %v1003 = vpop.f32.mrf.mxu0
  %v1004 = vadd.f32 0.0, %v1003
  %1005 = vmatprep.mubr.f32.mxu0 0.0
  %1006 = vmatmul.mubr.f32.gmra.mxu0 %v258
  %v1007 = vpop.f32.mrf.mxu0
  %v1008 = vadd.f32 0.0, %v1007
  %v1009 = vpop.f32.mrf.mxu0
  %v1010 = vadd.f32 0.0, %v1009
  %1011 = vmatprep.mubr.f32.mxu0 0.0
  %1012 = vmatmul.mubr.f32.gmra.mxu0 %v261
  %v1013 = vpop.f32.mrf.mxu0
  %v1014 = vadd.f32 0.0, %v1013
  %v1015 = vpop.f32.mrf.mxu0
  %v1016 = vadd.f32 0.0, %v1015
  %1017 = vmatprep.mubr.f32.mxu0 0.0
  %1018 = vmatmul.mubr.f32.gmra.mxu0 %v264
  %v1019 = vpop.f32.mrf.mxu0
  %v1020 = vadd.f32 0.0, %v1019
  %v1021 = vpop.f32.mrf.mxu0
  %v1022 = vadd.f32 0.0, %v1021
  %1023 = vmatprep.mubr.f32.mxu0 0.0
  %1024 = vmatmul.mubr.f32.gmra.mxu0 %v267
  %v1025 = vpop.f32.mrf.mxu0
  %v1026 = vadd.f32 0.0, %v1025
  %v1027 = vpop.f32.mrf.mxu0
  %v1028 = vadd.f32 0.0, %v1027
  %1029 = vdwg.mxu0
  %1030 = vmatprep.subr.mxu0 0.0
  %1031 = vmatpush1.msra.mxu0 0.0
  %1032 = vmatprep.subr.mxu0 0.0
  %1033 = vmatpush1.msra.mxu0 0.0
  %1034 = vmatprep.subr.mxu0 0.0
  %1035 = vmatpush1.msra.mxu0 0.0
  %1036 = vmatprep.subr.mxu0 0.0
  %1037 = vmatpush1.msra.mxu0 0.0
  %1038 = vmatprep.subr.mxu0 0.0
  %1039 = vmatpush1.msra.mxu0 0.0
  %1040 = vmatprep.subr.mxu0 0.0
  %1041 = vmatpush1.msra.mxu0 0.0
  %1042 = vmatprep.subr.mxu0 0.0
  %1043 = vmatpush1.msra.mxu0 0.0
  %1044 = vmatprep.subr.mxu0 0.0
  %1045 = vmatpush1.msra.mxu0 0.0
  %1046 = vmatprep.subr.mxu0 0.0
  %1047 = vmatpush1.msra.mxu0 0.0
  %1048 = vmatprep.subr.mxu0 0.0
  %1049 = vmatpush1.msra.mxu0 0.0
  %1050 = vmatprep.subr.mxu0 0.0
  %1051 = vmatpush1.msra.mxu0 0.0
  %1052 = vmatprep.subr.mxu0 0.0
  %1053 = vmatpush1.msra.mxu0 0.0
  %1054 = vmatprep.subr.mxu0 %v286
  %1055 = vmatpush1.msra.mxu0 %v283
  %1056 = vmatprep.subr.mxu0 %v103
  %1057 = vmatpush1.msra.mxu0 %v102
  %1058 = vmatprep.subr.mxu0 %v93
  %1059 = vmatpush1.msra.mxu0 %v92
  %1060 = vmatprep.subr.mxu0 %v83
  %1061 = vmatpush1.msra.mxu0 %v82
  %1062 = vmatprep.subr.mxu0 0.0
  %1063 = vmatpush2.msra.mxu0 0.0
  %1064 = vmatprep.subr.mxu0 0.0
  %1065 = vmatpush2.msra.mxu0 0.0
  %1066 = vmatprep.subr.mxu0 0.0
  %1067 = vmatpush2.msra.mxu0 0.0
  %1068 = vmatprep.subr.mxu0 0.0
  %1069 = vmatpush2.msra.mxu0 0.0
  %1070 = vmatprep.subr.mxu0 0.0
  %1071 = vmatpush2.msra.mxu0 0.0
  %1072 = vmatprep.subr.mxu0 0.0
  %1073 = vmatpush2.msra.mxu0 0.0
  %1074 = vmatprep.subr.mxu0 0.0
  %1075 = vmatpush2.msra.mxu0 0.0
  %1076 = vmatprep.subr.mxu0 0.0
  %1077 = vmatpush2.msra.mxu0 0.0
  %1078 = vmatprep.subr.mxu0 0.0
  %1079 = vmatpush2.msra.mxu0 0.0
  %1080 = vmatprep.subr.mxu0 0.0
  %1081 = vmatpush2.msra.mxu0 0.0
  %1082 = vmatprep.subr.mxu0 0.0
  %1083 = vmatpush2.msra.mxu0 0.0
  %1084 = vmatprep.subr.mxu0 0.0
  %1085 = vmatpush2.msra.mxu0 0.0
  %1086 = vmatprep.subr.mxu0 0.0
  %1087 = vmatpush2.msra.mxu0 0.0
  %1088 = vmatprep.subr.mxu0 0.0
  %1089 = vmatpush2.msra.mxu0 0.0
  %1090 = vmatprep.subr.mxu0 0.0
  %1091 = vmatpush2.msra.mxu0 0.0
  %1092 = vmatprep.subr.mxu0 0.0
  %1093 = vmatpush2.msra.mxu0 0.0
  %1094 = vmatprep.mubr.f32.mxu0 0.0
  %1095 = vmatmul.mubr.f32.gmra.mxu0 %v120
  %v1096 = vpop.f32.mrf.mxu0
  %v1097 = vadd.f32 0.0, %v1096
  %v1098 = vpop.f32.mrf.mxu0
  %v1099 = vadd.f32 0.0, %v1098
  %1100 = vmatprep.mubr.f32.mxu0 0.0
  %1101 = vmatmul.mubr.f32.gmra.mxu0 %v123
  %v1102 = vpop.f32.mrf.mxu0
  %v1103 = vadd.f32 0.0, %v1102
  %v1104 = vpop.f32.mrf.mxu0
  %v1105 = vadd.f32 0.0, %v1104
  %1106 = vmatprep.mubr.f32.mxu0 0.0
  %1107 = vmatmul.mubr.f32.gmra.mxu0 %v126
  %v1108 = vpop.f32.mrf.mxu0
  %v1109 = vadd.f32 0.0, %v1108
  %v1110 = vpop.f32.mrf.mxu0
  %v1111 = vadd.f32 0.0, %v1110
  %1112 = vmatprep.mubr.f32.mxu0 0.0
  %1113 = vmatmul.mubr.f32.gmra.mxu0 %v129
  %v1114 = vpop.f32.mrf.mxu0
  %v1115 = vadd.f32 0.0, %v1114
  %v1116 = vpop.f32.mrf.mxu0
  %v1117 = vadd.f32 0.0, %v1116
  %1118 = vmatprep.mubr.f32.mxu0 0.0
  %1119 = vmatmul.mubr.f32.gmra.mxu0 %v132
  %v1120 = vpop.f32.mrf.mxu0
  %v1121 = vadd.f32 0.0, %v1120
  %v1122 = vpop.f32.mrf.mxu0
  %v1123 = vadd.f32 0.0, %v1122
  %1124 = vmatprep.mubr.f32.mxu0 0.0
  %1125 = vmatmul.mubr.f32.gmra.mxu0 %v135
  %v1126 = vpop.f32.mrf.mxu0
  %v1127 = vadd.f32 0.0, %v1126
  %v1128 = vpop.f32.mrf.mxu0
  %v1129 = vadd.f32 0.0, %v1128
  %1130 = vmatprep.mubr.f32.mxu0 0.0
  %1131 = vmatmul.mubr.f32.gmra.mxu0 %v138
  %v1132 = vpop.f32.mrf.mxu0
  %v1133 = vadd.f32 0.0, %v1132
  %v1134 = vpop.f32.mrf.mxu0
  %v1135 = vadd.f32 0.0, %v1134
  %1136 = vmatprep.mubr.f32.mxu0 0.0
  %1137 = vmatmul.mubr.f32.gmra.mxu0 %v141
  %v1138 = vpop.f32.mrf.mxu0
  %v1139 = vadd.f32 0.0, %v1138
  %v1140 = vpop.f32.mrf.mxu0
  %v1141 = vadd.f32 0.0, %v1140
  %1142 = vmatprep.mubr.f32.mxu0 0.0
  %1143 = vmatmul.mubr.f32.gmra.mxu0 %v144
  %v1144 = vpop.f32.mrf.mxu0
  %v1145 = vadd.f32 0.0, %v1144
  %v1146 = vpop.f32.mrf.mxu0
  %v1147 = vadd.f32 0.0, %v1146
  %1148 = vmatprep.mubr.f32.mxu0 0.0
  %1149 = vmatmul.mubr.f32.gmra.mxu0 %v147
  %v1150 = vpop.f32.mrf.mxu0
  %v1151 = vadd.f32 0.0, %v1150
  %v1152 = vpop.f32.mrf.mxu0
  %v1153 = vadd.f32 0.0, %v1152
  %1154 = vmatprep.mubr.f32.mxu0 0.0
  %1155 = vmatmul.mubr.f32.gmra.mxu0 %v150
  %v1156 = vpop.f32.mrf.mxu0
  %v1157 = vadd.f32 0.0, %v1156
  %v1158 = vpop.f32.mrf.mxu0
  %v1159 = vadd.f32 0.0, %v1158
  %1160 = vmatprep.mubr.f32.mxu0 0.0
  %1161 = vmatmul.mubr.f32.gmra.mxu0 %v153
  %v1162 = vpop.f32.mrf.mxu0
  %v1163 = vadd.f32 0.0, %v1162
  %v1164 = vpop.f32.mrf.mxu0
  %v1165 = vadd.f32 0.0, %v1164
  %1166 = vmatprep.mubr.f32.mxu0 0.0
  %1167 = vmatmul.mubr.f32.gmra.mxu0 %v156
  %v1168 = vpop.f32.mrf.mxu0
  %v1169 = vadd.f32 0.0, %v1168
  %v1170 = vpop.f32.mrf.mxu0
  %v1171 = vadd.f32 0.0, %v1170
  %1172 = vmatprep.mubr.f32.mxu0 0.0
  %1173 = vmatmul.mubr.f32.gmra.mxu0 %v159
  %v1174 = vpop.f32.mrf.mxu0
  %v1175 = vadd.f32 0.0, %v1174
  %v1176 = vpop.f32.mrf.mxu0
  %v1177 = vadd.f32 0.0, %v1176
  %1178 = vmatprep.mubr.f32.mxu0 0.0
  %1179 = vmatmul.mubr.f32.gmra.mxu0 %v162
  %v1180 = vpop.f32.mrf.mxu0
  %v1181 = vadd.f32 0.0, %v1180
  %v1182 = vpop.f32.mrf.mxu0
  %v1183 = vadd.f32 0.0, %v1182
  %1184 = vmatprep.mubr.f32.mxu0 0.0
  %1185 = vmatmul.mubr.f32.gmra.mxu0 %v165
  %v1186 = vpop.f32.mrf.mxu0
  %v1187 = vadd.f32 0.0, %v1186
  %v1188 = vpop.f32.mrf.mxu0
  %v1189 = vadd.f32 0.0, %v1188
  %1190 = vmatprep.mubr.f32.mxu0 0.0
  %1191 = vmatmul.mubr.f32.gmra.mxu0 %v168
  %v1192 = vpop.f32.mrf.mxu0
  %v1193 = vadd.f32 0.0, %v1192
  %v1194 = vpop.f32.mrf.mxu0
  %v1195 = vadd.f32 0.0, %v1194
  %1196 = vmatprep.mubr.f32.mxu0 0.0
  %1197 = vmatmul.mubr.f32.gmra.mxu0 %v171
  %v1198 = vpop.f32.mrf.mxu0
  %v1199 = vadd.f32 0.0, %v1198
  %v1200 = vpop.f32.mrf.mxu0
  %v1201 = vadd.f32 0.0, %v1200
  %1202 = vmatprep.mubr.f32.mxu0 0.0
  %1203 = vmatmul.mubr.f32.gmra.mxu0 %v174
  %v1204 = vpop.f32.mrf.mxu0
  %v1205 = vadd.f32 0.0, %v1204
  %v1206 = vpop.f32.mrf.mxu0
  %v1207 = vadd.f32 0.0, %v1206
  %1208 = vmatprep.mubr.f32.mxu0 0.0
  %1209 = vmatmul.mubr.f32.gmra.mxu0 %v177
  %v1210 = vpop.f32.mrf.mxu0
  %v1211 = vadd.f32 0.0, %v1210
  %v1212 = vpop.f32.mrf.mxu0
  %v1213 = vadd.f32 0.0, %v1212
  %1214 = vmatprep.mubr.f32.mxu0 0.0
  %1215 = vmatmul.mubr.f32.gmra.mxu0 %v180
  %v1216 = vpop.f32.mrf.mxu0
  %v1217 = vadd.f32 0.0, %v1216
  %v1218 = vpop.f32.mrf.mxu0
  %v1219 = vadd.f32 0.0, %v1218
  %1220 = vmatprep.mubr.f32.mxu0 0.0
  %1221 = vmatmul.mubr.f32.gmra.mxu0 %v183
  %v1222 = vpop.f32.mrf.mxu0
  %v1223 = vadd.f32 0.0, %v1222
  %v1224 = vpop.f32.mrf.mxu0
  %v1225 = vadd.f32 0.0, %v1224
  %1226 = vmatprep.mubr.f32.mxu0 0.0
  %1227 = vmatmul.mubr.f32.gmra.mxu0 %v186
  %v1228 = vpop.f32.mrf.mxu0
  %v1229 = vadd.f32 0.0, %v1228
  %v1230 = vpop.f32.mrf.mxu0
  %v1231 = vadd.f32 0.0, %v1230
  %1232 = vmatprep.mubr.f32.mxu0 0.0
  %1233 = vmatmul.mubr.f32.gmra.mxu0 %v189
  %v1234 = vpop.f32.mrf.mxu0
  %v1235 = vadd.f32 0.0, %v1234
  %v1236 = vpop.f32.mrf.mxu0
  %v1237 = vadd.f32 0.0, %v1236
  %1238 = vmatprep.mubr.f32.mxu0 0.0
  %1239 = vmatmul.mubr.f32.gmra.mxu0 %v192
  %v1240 = vpop.f32.mrf.mxu0
  %v1241 = vadd.f32 0.0, %v1240
  %v1242 = vpop.f32.mrf.mxu0
  %v1243 = vadd.f32 0.0, %v1242
  %1244 = vmatprep.mubr.f32.mxu0 0.0
  %1245 = vmatmul.mubr.f32.gmra.mxu0 %v195
  %v1246 = vpop.f32.mrf.mxu0
  %v1247 = vadd.f32 0.0, %v1246
  %v1248 = vpop.f32.mrf.mxu0
  %v1249 = vadd.f32 0.0, %v1248
  %1250 = vmatprep.mubr.f32.mxu0 0.0
  %1251 = vmatmul.mubr.f32.gmra.mxu0 %v198
  %v1252 = vpop.f32.mrf.mxu0
  %v1253 = vadd.f32 0.0, %v1252
  %v1254 = vpop.f32.mrf.mxu0
  %v1255 = vadd.f32 0.0, %v1254
  %1256 = vmatprep.mubr.f32.mxu0 0.0
  %1257 = vmatmul.mubr.f32.gmra.mxu0 %v201
  %v1258 = vpop.f32.mrf.mxu0
  %v1259 = vadd.f32 0.0, %v1258
  %v1260 = vpop.f32.mrf.mxu0
  %v1261 = vadd.f32 0.0, %v1260
  %1262 = vmatprep.mubr.f32.mxu0 0.0
  %1263 = vmatmul.mubr.f32.gmra.mxu0 %v204
  %v1264 = vpop.f32.mrf.mxu0
  %v1265 = vadd.f32 0.0, %v1264
  %v1266 = vpop.f32.mrf.mxu0
  %v1267 = vadd.f32 0.0, %v1266
  %1268 = vmatprep.mubr.f32.mxu0 0.0
  %1269 = vmatmul.mubr.f32.gmra.mxu0 %v207
  %v1270 = vpop.f32.mrf.mxu0
  %v1271 = vadd.f32 0.0, %v1270
  %v1272 = vpop.f32.mrf.mxu0
  %v1273 = vadd.f32 0.0, %v1272
  %1274 = vmatprep.mubr.f32.mxu0 0.0
  %1275 = vmatmul.mubr.f32.gmra.mxu0 %v210
  %v1276 = vpop.f32.mrf.mxu0
  %v1277 = vadd.f32 0.0, %v1276
  %v1278 = vpop.f32.mrf.mxu0
  %v1279 = vadd.f32 0.0, %v1278
  %1280 = vmatprep.mubr.f32.mxu0 0.0
  %1281 = vmatmul.mubr.f32.gmra.mxu0 %v213
  %v1282 = vpop.f32.mrf.mxu0
  %v1283 = vadd.f32 0.0, %v1282
  %v1284 = vpop.f32.mrf.mxu0
  %v1285 = vadd.f32 0.0, %v1284
  %1286 = vmatprep.mubr.f32.mxu0 0.0
  %1287 = vmatmul.mubr.f32.gmra.mxu0 %v216
  %v1288 = vpop.f32.mrf.mxu0
  %v1289 = vadd.f32 0.0, %v1288
  %v1290 = vpop.f32.mrf.mxu0
  %v1291 = vadd.f32 0.0, %v1290
  %1292 = vmatprep.mubr.f32.mxu0 0.0
  %1293 = vmatmul.mubr.f32.gmra.mxu0 %v219
  %v1294 = vpop.f32.mrf.mxu0
  %v1295 = vadd.f32 0.0, %v1294
  %v1296 = vpop.f32.mrf.mxu0
  %v1297 = vadd.f32 0.0, %v1296
  %1298 = vmatprep.mubr.f32.mxu0 0.0
  %1299 = vmatmul.mubr.f32.gmra.mxu0 %v222
  %v1300 = vpop.f32.mrf.mxu0
  %v1301 = vadd.f32 0.0, %v1300
  %v1302 = vpop.f32.mrf.mxu0
  %v1303 = vadd.f32 0.0, %v1302
  %1304 = vmatprep.mubr.f32.mxu0 0.0
  %1305 = vmatmul.mubr.f32.gmra.mxu0 %v225
  %v1306 = vpop.f32.mrf.mxu0
  %v1307 = vadd.f32 0.0, %v1306
  %v1308 = vpop.f32.mrf.mxu0
  %v1309 = vadd.f32 0.0, %v1308
  %1310 = vmatprep.mubr.f32.mxu0 0.0
  %1311 = vmatmul.mubr.f32.gmra.mxu0 %v228
  %v1312 = vpop.f32.mrf.mxu0
  %v1313 = vadd.f32 0.0, %v1312
  %v1314 = vpop.f32.mrf.mxu0
  %v1315 = vadd.f32 0.0, %v1314
  %1316 = vmatprep.mubr.f32.mxu0 0.0
  %1317 = vmatmul.mubr.f32.gmra.mxu0 %v231
  %v1318 = vpop.f32.mrf.mxu0
  %v1319 = vadd.f32 0.0, %v1318
  %v1320 = vpop.f32.mrf.mxu0
  %v1321 = vadd.f32 0.0, %v1320
  %1322 = vmatprep.mubr.f32.mxu0 0.0
  %1323 = vmatmul.mubr.f32.gmra.mxu0 %v234
  %v1324 = vpop.f32.mrf.mxu0
  %v1325 = vadd.f32 0.0, %v1324
  %v1326 = vpop.f32.mrf.mxu0
  %v1327 = vadd.f32 0.0, %v1326
  %1328 = vmatprep.mubr.f32.mxu0 0.0
  %1329 = vmatmul.mubr.f32.gmra.mxu0 %v237
  %v1330 = vpop.f32.mrf.mxu0
  %v1331 = vadd.f32 0.0, %v1330
  %v1332 = vpop.f32.mrf.mxu0
  %v1333 = vadd.f32 0.0, %v1332
  %1334 = vmatprep.mubr.f32.mxu0 0.0
  %1335 = vmatmul.mubr.f32.gmra.mxu0 %v240
  %v1336 = vpop.f32.mrf.mxu0
  %v1337 = vadd.f32 0.0, %v1336
  %v1338 = vpop.f32.mrf.mxu0
  %v1339 = vadd.f32 0.0, %v1338
  %1340 = vmatprep.mubr.f32.mxu0 0.0
  %1341 = vmatmul.mubr.f32.gmra.mxu0 %v243
  %v1342 = vpop.f32.mrf.mxu0
  %v1343 = vadd.f32 0.0, %v1342
  %v1344 = vpop.f32.mrf.mxu0
  %v1345 = vadd.f32 0.0, %v1344
  %1346 = vmatprep.mubr.f32.mxu0 0.0
  %1347 = vmatmul.mubr.f32.gmra.mxu0 %v246
  %v1348 = vpop.f32.mrf.mxu0
  %v1349 = vadd.f32 0.0, %v1348
  %v1350 = vpop.f32.mrf.mxu0
  %v1351 = vadd.f32 0.0, %v1350
  %1352 = vmatprep.mubr.f32.mxu0 0.0
  %1353 = vmatmul.mubr.f32.gmra.mxu0 %v249
  %v1354 = vpop.f32.mrf.mxu0
  %v1355 = vadd.f32 0.0, %v1354
  %v1356 = vpop.f32.mrf.mxu0
  %v1357 = vadd.f32 0.0, %v1356
  %1358 = vmatprep.mubr.f32.mxu0 0.0
  %1359 = vmatmul.mubr.f32.gmra.mxu0 %v252
  %v1360 = vpop.f32.mrf.mxu0
  %v1361 = vadd.f32 0.0, %v1360
  %v1362 = vpop.f32.mrf.mxu0
  %v1363 = vadd.f32 0.0, %v1362
  %1364 = vmatprep.mubr.f32.mxu0 0.0
  %1365 = vmatmul.mubr.f32.gmra.mxu0 %v255
  %v1366 = vpop.f32.mrf.mxu0
  %v1367 = vadd.f32 0.0, %v1366
  %v1368 = vpop.f32.mrf.mxu0
  %v1369 = vadd.f32 0.0, %v1368
  %1370 = vmatprep.mubr.f32.mxu0 0.0
  %1371 = vmatmul.mubr.f32.gmra.mxu0 %v258
  %v1372 = vpop.f32.mrf.mxu0
  %v1373 = vadd.f32 0.0, %v1372
  %v1374 = vpop.f32.mrf.mxu0
  %v1375 = vadd.f32 0.0, %v1374
  %1376 = vmatprep.mubr.f32.mxu0 0.0
  %1377 = vmatmul.mubr.f32.gmra.mxu0 %v261
  %v1378 = vpop.f32.mrf.mxu0
  %v1379 = vadd.f32 0.0, %v1378
  %v1380 = vpop.f32.mrf.mxu0
  %v1381 = vadd.f32 0.0, %v1380
  %1382 = vmatprep.mubr.f32.mxu0 0.0
  %1383 = vmatmul.mubr.f32.gmra.mxu0 %v264
  %v1384 = vpop.f32.mrf.mxu0
  %v1385 = vadd.f32 0.0, %v1384
  %v1386 = vpop.f32.mrf.mxu0
  %v1387 = vadd.f32 0.0, %v1386
  %1388 = vmatprep.mubr.f32.mxu0 0.0
  %1389 = vmatmul.mubr.f32.gmra.mxu0 %v267
  %v1390 = vpop.f32.mrf.mxu0
  %v1391 = vadd.f32 0.0, %v1390
  %v1392 = vpop.f32.mrf.mxu0
  %v1393 = vadd.f32 0.0, %v1392
  %1394 = vdwg.mxu0
  %1395 = vmatprep.subr.mxu0 0.0
  %1396 = vmatpush1.msra.mxu0 0.0
  %1397 = vmatprep.subr.mxu0 0.0
  %1398 = vmatpush1.msra.mxu0 0.0
  %1399 = vmatprep.subr.mxu0 0.0
  %1400 = vmatpush1.msra.mxu0 0.0
  %1401 = vmatprep.subr.mxu0 0.0
  %1402 = vmatpush1.msra.mxu0 0.0
  %1403 = vmatprep.subr.mxu0 0.0
  %1404 = vmatpush1.msra.mxu0 0.0
  %1405 = vmatprep.subr.mxu0 0.0
  %1406 = vmatpush1.msra.mxu0 0.0
  %1407 = vmatprep.subr.mxu0 0.0
  %1408 = vmatpush1.msra.mxu0 0.0
  %1409 = vmatprep.subr.mxu0 0.0
  %1410 = vmatpush1.msra.mxu0 0.0
  %1411 = vmatprep.subr.mxu0 0.0
  %1412 = vmatpush1.msra.mxu0 0.0
  %1413 = vmatprep.subr.mxu0 0.0
  %1414 = vmatpush1.msra.mxu0 0.0
  %1415 = vmatprep.subr.mxu0 0.0
  %1416 = vmatpush1.msra.mxu0 0.0
  %1417 = vmatprep.subr.mxu0 0.0
  %1418 = vmatpush1.msra.mxu0 0.0
  %1419 = vmatprep.subr.mxu0 %v292
  %1420 = vmatpush1.msra.mxu0 %v289
  %1421 = vmatprep.subr.mxu0 %v105
  %1422 = vmatpush1.msra.mxu0 %v104
  %1423 = vmatprep.subr.mxu0 %v95
  %1424 = vmatpush1.msra.mxu0 %v94
  %1425 = vmatprep.subr.mxu0 %v85
  %1426 = vmatpush1.msra.mxu0 %v84
  %1427 = vmatprep.subr.mxu0 0.0
  %1428 = vmatpush2.msra.mxu0 0.0
  %1429 = vmatprep.subr.mxu0 0.0
  %1430 = vmatpush2.msra.mxu0 0.0
  %1431 = vmatprep.subr.mxu0 0.0
  %1432 = vmatpush2.msra.mxu0 0.0
  %1433 = vmatprep.subr.mxu0 0.0
  %1434 = vmatpush2.msra.mxu0 0.0
  %1435 = vmatprep.subr.mxu0 0.0
  %1436 = vmatpush2.msra.mxu0 0.0
  %1437 = vmatprep.subr.mxu0 0.0
  %1438 = vmatpush2.msra.mxu0 0.0
  %1439 = vmatprep.subr.mxu0 0.0
  %1440 = vmatpush2.msra.mxu0 0.0
  %1441 = vmatprep.subr.mxu0 0.0
  %1442 = vmatpush2.msra.mxu0 0.0
  %1443 = vmatprep.subr.mxu0 0.0
  %1444 = vmatpush2.msra.mxu0 0.0
  %1445 = vmatprep.subr.mxu0 0.0
  %1446 = vmatpush2.msra.mxu0 0.0
  %1447 = vmatprep.subr.mxu0 0.0
  %1448 = vmatpush2.msra.mxu0 0.0
  %1449 = vmatprep.subr.mxu0 0.0
  %1450 = vmatpush2.msra.mxu0 0.0
  %1451 = vmatprep.subr.mxu0 0.0
  %1452 = vmatpush2.msra.mxu0 0.0
  %1453 = vmatprep.subr.mxu0 0.0
  %1454 = vmatpush2.msra.mxu0 0.0
  %1455 = vmatprep.subr.mxu0 0.0
  %1456 = vmatpush2.msra.mxu0 0.0
  %1457 = vmatprep.subr.mxu0 0.0
  %1458 = vmatpush2.msra.mxu0 0.0
  %1459 = vmatprep.mubr.f32.mxu0 0.0
  %1460 = vmatmul.mubr.f32.gmra.mxu0 %v120
  %v1461 = vpop.f32.mrf.mxu0
  %v1462 = vadd.f32 0.0, %v1461
  %v1463 = vpop.f32.mrf.mxu0
  %v1464 = vadd.f32 0.0, %v1463
  %1465 = vmatprep.mubr.f32.mxu0 0.0
  %1466 = vmatmul.mubr.f32.gmra.mxu0 %v123
  %v1467 = vpop.f32.mrf.mxu0
  %v1468 = vadd.f32 0.0, %v1467
  %v1469 = vpop.f32.mrf.mxu0
  %v1470 = vadd.f32 0.0, %v1469
  %1471 = vmatprep.mubr.f32.mxu0 0.0
  %1472 = vmatmul.mubr.f32.gmra.mxu0 %v126
  %v1473 = vpop.f32.mrf.mxu0
  %v1474 = vadd.f32 0.0, %v1473
  %v1475 = vpop.f32.mrf.mxu0
  %v1476 = vadd.f32 0.0, %v1475
  %1477 = vmatprep.mubr.f32.mxu0 0.0
  %1478 = vmatmul.mubr.f32.gmra.mxu0 %v129
  %v1479 = vpop.f32.mrf.mxu0
  %v1480 = vadd.f32 0.0, %v1479
  %v1481 = vpop.f32.mrf.mxu0
  %v1482 = vadd.f32 0.0, %v1481
  %1483 = vmatprep.mubr.f32.mxu0 0.0
  %1484 = vmatmul.mubr.f32.gmra.mxu0 %v132
  %v1485 = vpop.f32.mrf.mxu0
  %v1486 = vadd.f32 0.0, %v1485
  %v1487 = vpop.f32.mrf.mxu0
  %v1488 = vadd.f32 0.0, %v1487
  %1489 = vmatprep.mubr.f32.mxu0 0.0
  %1490 = vmatmul.mubr.f32.gmra.mxu0 %v135
  %v1491 = vpop.f32.mrf.mxu0
  %v1492 = vadd.f32 0.0, %v1491
  %v1493 = vpop.f32.mrf.mxu0
  %v1494 = vadd.f32 0.0, %v1493
  %1495 = vmatprep.mubr.f32.mxu0 0.0
  %1496 = vmatmul.mubr.f32.gmra.mxu0 %v138
  %v1497 = vpop.f32.mrf.mxu0
  %v1498 = vadd.f32 0.0, %v1497
  %v1499 = vpop.f32.mrf.mxu0
  %v1500 = vadd.f32 0.0, %v1499
  %1501 = vmatprep.mubr.f32.mxu0 0.0
  %1502 = vmatmul.mubr.f32.gmra.mxu0 %v141
  %v1503 = vpop.f32.mrf.mxu0
  %v1504 = vadd.f32 0.0, %v1503
  %v1505 = vpop.f32.mrf.mxu0
  %v1506 = vadd.f32 0.0, %v1505
  %1507 = vmatprep.mubr.f32.mxu0 0.0
  %1508 = vmatmul.mubr.f32.gmra.mxu0 %v144
  %v1509 = vpop.f32.mrf.mxu0
  %v1510 = vadd.f32 0.0, %v1509
  %v1511 = vpop.f32.mrf.mxu0
  %v1512 = vadd.f32 0.0, %v1511
  %1513 = vmatprep.mubr.f32.mxu0 0.0
  %1514 = vmatmul.mubr.f32.gmra.mxu0 %v147
  %v1515 = vpop.f32.mrf.mxu0
  %v1516 = vadd.f32 0.0, %v1515
  %v1517 = vpop.f32.mrf.mxu0
  %v1518 = vadd.f32 0.0, %v1517
  %1519 = vmatprep.mubr.f32.mxu0 0.0
  %1520 = vmatmul.mubr.f32.gmra.mxu0 %v150
  %v1521 = vpop.f32.mrf.mxu0
  %v1522 = vadd.f32 0.0, %v1521
  %v1523 = vpop.f32.mrf.mxu0
  %v1524 = vadd.f32 0.0, %v1523
  %1525 = vmatprep.mubr.f32.mxu0 0.0
  %1526 = vmatmul.mubr.f32.gmra.mxu0 %v153
  %v1527 = vpop.f32.mrf.mxu0
  %v1528 = vadd.f32 0.0, %v1527
  %v1529 = vpop.f32.mrf.mxu0
  %v1530 = vadd.f32 0.0, %v1529
  %1531 = vmatprep.mubr.f32.mxu0 0.0
  %1532 = vmatmul.mubr.f32.gmra.mxu0 %v156
  %v1533 = vpop.f32.mrf.mxu0
  %v1534 = vadd.f32 0.0, %v1533
  %v1535 = vpop.f32.mrf.mxu0
  %v1536 = vadd.f32 0.0, %v1535
  %1537 = vmatprep.mubr.f32.mxu0 0.0
  %1538 = vmatmul.mubr.f32.gmra.mxu0 %v159
  %v1539 = vpop.f32.mrf.mxu0
  %v1540 = vadd.f32 0.0, %v1539
  %v1541 = vpop.f32.mrf.mxu0
  %v1542 = vadd.f32 0.0, %v1541
  %1543 = vmatprep.mubr.f32.mxu0 0.0
  %1544 = vmatmul.mubr.f32.gmra.mxu0 %v162
  %v1545 = vpop.f32.mrf.mxu0
  %v1546 = vadd.f32 0.0, %v1545
  %v1547 = vpop.f32.mrf.mxu0
  %v1548 = vadd.f32 0.0, %v1547
  %1549 = vmatprep.mubr.f32.mxu0 0.0
  %1550 = vmatmul.mubr.f32.gmra.mxu0 %v165
  %v1551 = vpop.f32.mrf.mxu0
  %v1552 = vadd.f32 0.0, %v1551
  %v1553 = vpop.f32.mrf.mxu0
  %v1554 = vadd.f32 0.0, %v1553
  %1555 = vmatprep.mubr.f32.mxu0 0.0
  %1556 = vmatmul.mubr.f32.gmra.mxu0 %v168
  %v1557 = vpop.f32.mrf.mxu0
  %v1558 = vadd.f32 0.0, %v1557
  %v1559 = vpop.f32.mrf.mxu0
  %v1560 = vadd.f32 0.0, %v1559
  %1561 = vmatprep.mubr.f32.mxu0 0.0
  %1562 = vmatmul.mubr.f32.gmra.mxu0 %v171
  %v1563 = vpop.f32.mrf.mxu0
  %v1564 = vadd.f32 0.0, %v1563
  %v1565 = vpop.f32.mrf.mxu0
  %v1566 = vadd.f32 0.0, %v1565
  %1567 = vmatprep.mubr.f32.mxu0 0.0
  %1568 = vmatmul.mubr.f32.gmra.mxu0 %v174
  %v1569 = vpop.f32.mrf.mxu0
  %v1570 = vadd.f32 0.0, %v1569
  %v1571 = vpop.f32.mrf.mxu0
  %v1572 = vadd.f32 0.0, %v1571
  %1573 = vmatprep.mubr.f32.mxu0 0.0
  %1574 = vmatmul.mubr.f32.gmra.mxu0 %v177
  %v1575 = vpop.f32.mrf.mxu0
  %v1576 = vadd.f32 0.0, %v1575
  %v1577 = vpop.f32.mrf.mxu0
  %v1578 = vadd.f32 0.0, %v1577
  %1579 = vmatprep.mubr.f32.mxu0 0.0
  %1580 = vmatmul.mubr.f32.gmra.mxu0 %v180
  %v1581 = vpop.f32.mrf.mxu0
  %v1582 = vadd.f32 0.0, %v1581
  %v1583 = vpop.f32.mrf.mxu0
  %v1584 = vadd.f32 0.0, %v1583
  %1585 = vmatprep.mubr.f32.mxu0 0.0
  %1586 = vmatmul.mubr.f32.gmra.mxu0 %v183
  %v1587 = vpop.f32.mrf.mxu0
  %v1588 = vadd.f32 0.0, %v1587
  %v1589 = vpop.f32.mrf.mxu0
  %v1590 = vadd.f32 0.0, %v1589
  %1591 = vmatprep.mubr.f32.mxu0 0.0
  %1592 = vmatmul.mubr.f32.gmra.mxu0 %v186
  %v1593 = vpop.f32.mrf.mxu0
  %v1594 = vadd.f32 0.0, %v1593
  %v1595 = vpop.f32.mrf.mxu0
  %v1596 = vadd.f32 0.0, %v1595
  %1597 = vmatprep.mubr.f32.mxu0 0.0
  %1598 = vmatmul.mubr.f32.gmra.mxu0 %v189
  %v1599 = vpop.f32.mrf.mxu0
  %v1600 = vadd.f32 0.0, %v1599
  %v1601 = vpop.f32.mrf.mxu0
  %v1602 = vadd.f32 0.0, %v1601
  %1603 = vmatprep.mubr.f32.mxu0 0.0
  %1604 = vmatmul.mubr.f32.gmra.mxu0 %v192
  %v1605 = vpop.f32.mrf.mxu0
  %v1606 = vadd.f32 0.0, %v1605
  %v1607 = vpop.f32.mrf.mxu0
  %v1608 = vadd.f32 0.0, %v1607
  %1609 = vmatprep.mubr.f32.mxu0 0.0
  %1610 = vmatmul.mubr.f32.gmra.mxu0 %v195
  %v1611 = vpop.f32.mrf.mxu0
  %v1612 = vadd.f32 0.0, %v1611
  %v1613 = vpop.f32.mrf.mxu0
  %v1614 = vadd.f32 0.0, %v1613
  %1615 = vmatprep.mubr.f32.mxu0 0.0
  %1616 = vmatmul.mubr.f32.gmra.mxu0 %v198
  %v1617 = vpop.f32.mrf.mxu0
  %v1618 = vadd.f32 0.0, %v1617
  %v1619 = vpop.f32.mrf.mxu0
  %v1620 = vadd.f32 0.0, %v1619
  %1621 = vmatprep.mubr.f32.mxu0 0.0
  %1622 = vmatmul.mubr.f32.gmra.mxu0 %v201
  %v1623 = vpop.f32.mrf.mxu0
  %v1624 = vadd.f32 0.0, %v1623
  %v1625 = vpop.f32.mrf.mxu0
  %v1626 = vadd.f32 0.0, %v1625
  %1627 = vmatprep.mubr.f32.mxu0 0.0
  %1628 = vmatmul.mubr.f32.gmra.mxu0 %v204
  %v1629 = vpop.f32.mrf.mxu0
  %v1630 = vadd.f32 0.0, %v1629
  %v1631 = vpop.f32.mrf.mxu0
  %v1632 = vadd.f32 0.0, %v1631
  %1633 = vmatprep.mubr.f32.mxu0 0.0
  %1634 = vmatmul.mubr.f32.gmra.mxu0 %v207
  %v1635 = vpop.f32.mrf.mxu0
  %v1636 = vadd.f32 0.0, %v1635
  %v1637 = vpop.f32.mrf.mxu0
  %v1638 = vadd.f32 0.0, %v1637
  %1639 = vmatprep.mubr.f32.mxu0 0.0
  %1640 = vmatmul.mubr.f32.gmra.mxu0 %v210
  %v1641 = vpop.f32.mrf.mxu0
  %v1642 = vadd.f32 0.0, %v1641
  %v1643 = vpop.f32.mrf.mxu0
  %v1644 = vadd.f32 0.0, %v1643
  %1645 = vmatprep.mubr.f32.mxu0 0.0
  %1646 = vmatmul.mubr.f32.gmra.mxu0 %v213
  %v1647 = vpop.f32.mrf.mxu0
  %v1648 = vadd.f32 0.0, %v1647
  %v1649 = vpop.f32.mrf.mxu0
  %v1650 = vadd.f32 0.0, %v1649
  %1651 = vmatprep.mubr.f32.mxu0 0.0
  %1652 = vmatmul.mubr.f32.gmra.mxu0 %v216
  %v1653 = vpop.f32.mrf.mxu0
  %v1654 = vadd.f32 0.0, %v1653
  %v1655 = vpop.f32.mrf.mxu0
  %v1656 = vadd.f32 0.0, %v1655
  %1657 = vmatprep.mubr.f32.mxu0 0.0
  %1658 = vmatmul.mubr.f32.gmra.mxu0 %v219
  %v1659 = vpop.f32.mrf.mxu0
  %v1660 = vadd.f32 0.0, %v1659
  %v1661 = vpop.f32.mrf.mxu0
  %v1662 = vadd.f32 0.0, %v1661
  %1663 = vmatprep.mubr.f32.mxu0 0.0
  %1664 = vmatmul.mubr.f32.gmra.mxu0 %v222
  %v1665 = vpop.f32.mrf.mxu0
  %v1666 = vadd.f32 0.0, %v1665
  %v1667 = vpop.f32.mrf.mxu0
  %v1668 = vadd.f32 0.0, %v1667
  %1669 = vmatprep.mubr.f32.mxu0 0.0
  %1670 = vmatmul.mubr.f32.gmra.mxu0 %v225
  %v1671 = vpop.f32.mrf.mxu0
  %v1672 = vadd.f32 0.0, %v1671
  %v1673 = vpop.f32.mrf.mxu0
  %v1674 = vadd.f32 0.0, %v1673
  %1675 = vmatprep.mubr.f32.mxu0 0.0
  %1676 = vmatmul.mubr.f32.gmra.mxu0 %v228
  %v1677 = vpop.f32.mrf.mxu0
  %v1678 = vadd.f32 0.0, %v1677
  %v1679 = vpop.f32.mrf.mxu0
  %v1680 = vadd.f32 0.0, %v1679
  %1681 = vmatprep.mubr.f32.mxu0 0.0
  %1682 = vmatmul.mubr.f32.gmra.mxu0 %v231
  %v1683 = vpop.f32.mrf.mxu0
  %v1684 = vadd.f32 0.0, %v1683
  %v1685 = vpop.f32.mrf.mxu0
  %v1686 = vadd.f32 0.0, %v1685
  %1687 = vmatprep.mubr.f32.mxu0 0.0
  %1688 = vmatmul.mubr.f32.gmra.mxu0 %v234
  %v1689 = vpop.f32.mrf.mxu0
  %v1690 = vadd.f32 0.0, %v1689
  %v1691 = vpop.f32.mrf.mxu0
  %v1692 = vadd.f32 0.0, %v1691
  %1693 = vmatprep.mubr.f32.mxu0 0.0
  %1694 = vmatmul.mubr.f32.gmra.mxu0 %v237
  %v1695 = vpop.f32.mrf.mxu0
  %v1696 = vadd.f32 0.0, %v1695
  %v1697 = vpop.f32.mrf.mxu0
  %v1698 = vadd.f32 0.0, %v1697
  %1699 = vmatprep.mubr.f32.mxu0 0.0
  %1700 = vmatmul.mubr.f32.gmra.mxu0 %v240
  %v1701 = vpop.f32.mrf.mxu0
  %v1702 = vadd.f32 0.0, %v1701
  %v1703 = vpop.f32.mrf.mxu0
  %v1704 = vadd.f32 0.0, %v1703
  %1705 = vmatprep.mubr.f32.mxu0 0.0
  %1706 = vmatmul.mubr.f32.gmra.mxu0 %v243
  %v1707 = vpop.f32.mrf.mxu0
  %v1708 = vadd.f32 0.0, %v1707
  %v1709 = vpop.f32.mrf.mxu0
  %v1710 = vadd.f32 0.0, %v1709
  %1711 = vmatprep.mubr.f32.mxu0 0.0
  %1712 = vmatmul.mubr.f32.gmra.mxu0 %v246
  %v1713 = vpop.f32.mrf.mxu0
  %v1714 = vadd.f32 0.0, %v1713
  %v1715 = vpop.f32.mrf.mxu0
  %v1716 = vadd.f32 0.0, %v1715
  %1717 = vmatprep.mubr.f32.mxu0 0.0
  %1718 = vmatmul.mubr.f32.gmra.mxu0 %v249
  %v1719 = vpop.f32.mrf.mxu0
  %v1720 = vadd.f32 0.0, %v1719
  %v1721 = vpop.f32.mrf.mxu0
  %v1722 = vadd.f32 0.0, %v1721
  %1723 = vmatprep.mubr.f32.mxu0 0.0
  %1724 = vmatmul.mubr.f32.gmra.mxu0 %v252
  %v1725 = vpop.f32.mrf.mxu0
  %v1726 = vadd.f32 0.0, %v1725
  %v1727 = vpop.f32.mrf.mxu0
  %v1728 = vadd.f32 0.0, %v1727
  %1729 = vmatprep.mubr.f32.mxu0 0.0
  %1730 = vmatmul.mubr.f32.gmra.mxu0 %v255
  %v1731 = vpop.f32.mrf.mxu0
  %v1732 = vadd.f32 0.0, %v1731
  %v1733 = vpop.f32.mrf.mxu0
  %v1734 = vadd.f32 0.0, %v1733
  %1735 = vmatprep.mubr.f32.mxu0 0.0
  %1736 = vmatmul.mubr.f32.gmra.mxu0 %v258
  %v1737 = vpop.f32.mrf.mxu0
  %v1738 = vadd.f32 0.0, %v1737
  %v1739 = vpop.f32.mrf.mxu0
  %v1740 = vadd.f32 0.0, %v1739
  %1741 = vmatprep.mubr.f32.mxu0 0.0
  %1742 = vmatmul.mubr.f32.gmra.mxu0 %v261
  %v1743 = vpop.f32.mrf.mxu0
  %v1744 = vadd.f32 0.0, %v1743
  %v1745 = vpop.f32.mrf.mxu0
  %v1746 = vadd.f32 0.0, %v1745
  %1747 = vmatprep.mubr.f32.mxu0 0.0
  %1748 = vmatmul.mubr.f32.gmra.mxu0 %v264
  %v1749 = vpop.f32.mrf.mxu0
  %v1750 = vadd.f32 0.0, %v1749
  %v1751 = vpop.f32.mrf.mxu0
  %v1752 = vadd.f32 0.0, %v1751
  %1753 = vmatprep.mubr.f32.mxu0 0.0
  %1754 = vmatmul.mubr.f32.gmra.mxu0 %v267
  %v1755 = vpop.f32.mrf.mxu0
  %v1756 = vadd.f32 0.0, %v1755
  %v1757 = vpop.f32.mrf.mxu0
  %v1758 = vadd.f32 0.0, %v1757
  %1759 = vdwg.mxu0
  %1760 = vmatprep.subr.mxu0 0.0
  %1761 = vmatpush1.msra.mxu0 0.0
  %1762 = vmatprep.subr.mxu0 0.0
  %1763 = vmatpush1.msra.mxu0 0.0
  %1764 = vmatprep.subr.mxu0 0.0
  %1765 = vmatpush1.msra.mxu0 0.0
  %1766 = vmatprep.subr.mxu0 0.0
  %1767 = vmatpush1.msra.mxu0 0.0
  %1768 = vmatprep.subr.mxu0 0.0
  %1769 = vmatpush1.msra.mxu0 0.0
  %1770 = vmatprep.subr.mxu0 0.0
  %1771 = vmatpush1.msra.mxu0 0.0
  %1772 = vmatprep.subr.mxu0 0.0
  %1773 = vmatpush1.msra.mxu0 0.0
  %1774 = vmatprep.subr.mxu0 0.0
  %1775 = vmatpush1.msra.mxu0 0.0
  %1776 = vmatprep.subr.mxu0 0.0
  %1777 = vmatpush1.msra.mxu0 0.0
  %1778 = vmatprep.subr.mxu0 0.0
  %1779 = vmatpush1.msra.mxu0 0.0
  %1780 = vmatprep.subr.mxu0 0.0
  %1781 = vmatpush1.msra.mxu0 0.0
  %1782 = vmatprep.subr.mxu0 0.0
  %1783 = vmatpush1.msra.mxu0 0.0
  %1784 = vmatprep.subr.mxu0 %v298
  %1785 = vmatpush1.msra.mxu0 %v295
  %1786 = vmatprep.subr.mxu0 %v107
  %1787 = vmatpush1.msra.mxu0 %v106
  %1788 = vmatprep.subr.mxu0 %v97
  %1789 = vmatpush1.msra.mxu0 %v96
  %1790 = vmatprep.subr.mxu0 %v87
  %1791 = vmatpush1.msra.mxu0 %v86
  %1792 = vmatprep.subr.mxu0 0.0
  %1793 = vmatpush2.msra.mxu0 0.0
  %1794 = vmatprep.subr.mxu0 0.0
  %1795 = vmatpush2.msra.mxu0 0.0
  %1796 = vmatprep.subr.mxu0 0.0
  %1797 = vmatpush2.msra.mxu0 0.0
  %1798 = vmatprep.subr.mxu0 0.0
  %1799 = vmatpush2.msra.mxu0 0.0
  %1800 = vmatprep.subr.mxu0 0.0
  %1801 = vmatpush2.msra.mxu0 0.0
  %1802 = vmatprep.subr.mxu0 0.0
  %1803 = vmatpush2.msra.mxu0 0.0
  %1804 = vmatprep.subr.mxu0 0.0
  %1805 = vmatpush2.msra.mxu0 0.0
  %1806 = vmatprep.subr.mxu0 0.0
  %1807 = vmatpush2.msra.mxu0 0.0
  %1808 = vmatprep.subr.mxu0 0.0
  %1809 = vmatpush2.msra.mxu0 0.0
  %1810 = vmatprep.subr.mxu0 0.0
  %1811 = vmatpush2.msra.mxu0 0.0
  %1812 = vmatprep.subr.mxu0 0.0
  %1813 = vmatpush2.msra.mxu0 0.0
  %1814 = vmatprep.subr.mxu0 0.0
  %1815 = vmatpush2.msra.mxu0 0.0
  %1816 = vmatprep.subr.mxu0 0.0
  %1817 = vmatpush2.msra.mxu0 0.0
  %1818 = vmatprep.subr.mxu0 0.0
  %1819 = vmatpush2.msra.mxu0 0.0
  %1820 = vmatprep.subr.mxu0 0.0
  %1821 = vmatpush2.msra.mxu0 0.0
  %1822 = vmatprep.subr.mxu0 0.0
  %1823 = vmatpush2.msra.mxu0 0.0
  %1824 = vmatprep.mubr.f32.mxu0 0.0
  %1825 = vmatmul.mubr.f32.gmra.mxu0 %v120
  %v1826 = vpop.f32.mrf.mxu0
  %v1827 = vadd.f32 0.0, %v1826
  %v1828 = vpop.f32.mrf.mxu0
  %v1829 = vadd.f32 0.0, %v1828
  %1830 = vmatprep.mubr.f32.mxu0 0.0
  %1831 = vmatmul.mubr.f32.gmra.mxu0 %v123
  %v1832 = vpop.f32.mrf.mxu0
  %v1833 = vadd.f32 0.0, %v1832
  %v1834 = vpop.f32.mrf.mxu0
  %v1835 = vadd.f32 0.0, %v1834
  %1836 = vmatprep.mubr.f32.mxu0 0.0
  %1837 = vmatmul.mubr.f32.gmra.mxu0 %v126
  %v1838 = vpop.f32.mrf.mxu0
  %v1839 = vadd.f32 0.0, %v1838
  %v1840 = vpop.f32.mrf.mxu0
  %v1841 = vadd.f32 0.0, %v1840
  %1842 = vmatprep.mubr.f32.mxu0 0.0
  %1843 = vmatmul.mubr.f32.gmra.mxu0 %v129
  %v1844 = vpop.f32.mrf.mxu0
  %v1845 = vadd.f32 0.0, %v1844
  %v1846 = vpop.f32.mrf.mxu0
  %v1847 = vadd.f32 0.0, %v1846
  %1848 = vmatprep.mubr.f32.mxu0 0.0
  %1849 = vmatmul.mubr.f32.gmra.mxu0 %v132
  %v1850 = vpop.f32.mrf.mxu0
  %v1851 = vadd.f32 0.0, %v1850
  %v1852 = vpop.f32.mrf.mxu0
  %v1853 = vadd.f32 0.0, %v1852
  %1854 = vmatprep.mubr.f32.mxu0 0.0
  %1855 = vmatmul.mubr.f32.gmra.mxu0 %v135
  %v1856 = vpop.f32.mrf.mxu0
  %v1857 = vadd.f32 0.0, %v1856
  %v1858 = vpop.f32.mrf.mxu0
  %v1859 = vadd.f32 0.0, %v1858
  %1860 = vmatprep.mubr.f32.mxu0 0.0
  %1861 = vmatmul.mubr.f32.gmra.mxu0 %v138
  %v1862 = vpop.f32.mrf.mxu0
  %v1863 = vadd.f32 0.0, %v1862
  %v1864 = vpop.f32.mrf.mxu0
  %v1865 = vadd.f32 0.0, %v1864
  %1866 = vmatprep.mubr.f32.mxu0 0.0
  %1867 = vmatmul.mubr.f32.gmra.mxu0 %v141
  %v1868 = vpop.f32.mrf.mxu0
  %v1869 = vadd.f32 0.0, %v1868
  %v1870 = vpop.f32.mrf.mxu0
  %v1871 = vadd.f32 0.0, %v1870
  %1872 = vmatprep.mubr.f32.mxu0 0.0
  %1873 = vmatmul.mubr.f32.gmra.mxu0 %v144
  %v1874 = vpop.f32.mrf.mxu0
  %v1875 = vadd.f32 0.0, %v1874
  %v1876 = vpop.f32.mrf.mxu0
  %v1877 = vadd.f32 0.0, %v1876
  %1878 = vmatprep.mubr.f32.mxu0 0.0
  %1879 = vmatmul.mubr.f32.gmra.mxu0 %v147
  %v1880 = vpop.f32.mrf.mxu0
  %v1881 = vadd.f32 0.0, %v1880
  %v1882 = vpop.f32.mrf.mxu0
  %v1883 = vadd.f32 0.0, %v1882
  %1884 = vmatprep.mubr.f32.mxu0 0.0
  %1885 = vmatmul.mubr.f32.gmra.mxu0 %v150
  %v1886 = vpop.f32.mrf.mxu0
  %v1887 = vadd.f32 0.0, %v1886
  %v1888 = vpop.f32.mrf.mxu0
  %v1889 = vadd.f32 0.0, %v1888
  %1890 = vmatprep.mubr.f32.mxu0 0.0
  %1891 = vmatmul.mubr.f32.gmra.mxu0 %v153
  %v1892 = vpop.f32.mrf.mxu0
  %v1893 = vadd.f32 0.0, %v1892
  %v1894 = vpop.f32.mrf.mxu0
  %v1895 = vadd.f32 0.0, %v1894
  %1896 = vmatprep.mubr.f32.mxu0 0.0
  %1897 = vmatmul.mubr.f32.gmra.mxu0 %v156
  %v1898 = vpop.f32.mrf.mxu0
  %v1899 = vadd.f32 0.0, %v1898
  %v1900 = vpop.f32.mrf.mxu0
  %v1901 = vadd.f32 0.0, %v1900
  %1902 = vmatprep.mubr.f32.mxu0 0.0
  %1903 = vmatmul.mubr.f32.gmra.mxu0 %v159
  %v1904 = vpop.f32.mrf.mxu0
  %v1905 = vadd.f32 0.0, %v1904
  %v1906 = vpop.f32.mrf.mxu0
  %v1907 = vadd.f32 0.0, %v1906
  %1908 = vmatprep.mubr.f32.mxu0 0.0
  %1909 = vmatmul.mubr.f32.gmra.mxu0 %v162
  %v1910 = vpop.f32.mrf.mxu0
  %v1911 = vadd.f32 0.0, %v1910
  %v1912 = vpop.f32.mrf.mxu0
  %v1913 = vadd.f32 0.0, %v1912
  %1914 = vmatprep.mubr.f32.mxu0 0.0
  %1915 = vmatmul.mubr.f32.gmra.mxu0 %v165
  %v1916 = vpop.f32.mrf.mxu0
  %v1917 = vadd.f32 0.0, %v1916
  %v1918 = vpop.f32.mrf.mxu0
  %v1919 = vadd.f32 0.0, %v1918
  %1920 = vmatprep.mubr.f32.mxu0 0.0
  %1921 = vmatmul.mubr.f32.gmra.mxu0 %v168
  %v1922 = vpop.f32.mrf.mxu0
  %v1923 = vadd.f32 0.0, %v1922
  %v1924 = vpop.f32.mrf.mxu0
  %v1925 = vadd.f32 0.0, %v1924
  %1926 = vmatprep.mubr.f32.mxu0 0.0
  %1927 = vmatmul.mubr.f32.gmra.mxu0 %v171
  %v1928 = vpop.f32.mrf.mxu0
  %v1929 = vadd.f32 0.0, %v1928
  %v1930 = vpop.f32.mrf.mxu0
  %v1931 = vadd.f32 0.0, %v1930
  %1932 = vmatprep.mubr.f32.mxu0 0.0
  %1933 = vmatmul.mubr.f32.gmra.mxu0 %v174
  %v1934 = vpop.f32.mrf.mxu0
  %v1935 = vadd.f32 0.0, %v1934
  %v1936 = vpop.f32.mrf.mxu0
  %v1937 = vadd.f32 0.0, %v1936
  %1938 = vmatprep.mubr.f32.mxu0 0.0
  %1939 = vmatmul.mubr.f32.gmra.mxu0 %v177
  %v1940 = vpop.f32.mrf.mxu0
  %v1941 = vadd.f32 0.0, %v1940
  %v1942 = vpop.f32.mrf.mxu0
  %v1943 = vadd.f32 0.0, %v1942
  %1944 = vmatprep.mubr.f32.mxu0 0.0
  %1945 = vmatmul.mubr.f32.gmra.mxu0 %v180
  %v1946 = vpop.f32.mrf.mxu0
  %v1947 = vadd.f32 0.0, %v1946
  %v1948 = vpop.f32.mrf.mxu0
  %v1949 = vadd.f32 0.0, %v1948
  %1950 = vmatprep.mubr.f32.mxu0 0.0
  %1951 = vmatmul.mubr.f32.gmra.mxu0 %v183
  %v1952 = vpop.f32.mrf.mxu0
  %v1953 = vadd.f32 0.0, %v1952
  %v1954 = vpop.f32.mrf.mxu0
  %v1955 = vadd.f32 0.0, %v1954
  %1956 = vmatprep.mubr.f32.mxu0 0.0
  %1957 = vmatmul.mubr.f32.gmra.mxu0 %v186
  %v1958 = vpop.f32.mrf.mxu0
  %v1959 = vadd.f32 0.0, %v1958
  %v1960 = vpop.f32.mrf.mxu0
  %v1961 = vadd.f32 0.0, %v1960
  %1962 = vmatprep.mubr.f32.mxu0 0.0
  %1963 = vmatmul.mubr.f32.gmra.mxu0 %v189
  %v1964 = vpop.f32.mrf.mxu0
  %v1965 = vadd.f32 0.0, %v1964
  %v1966 = vpop.f32.mrf.mxu0
  %v1967 = vadd.f32 0.0, %v1966
  %1968 = vmatprep.mubr.f32.mxu0 0.0
  %1969 = vmatmul.mubr.f32.gmra.mxu0 %v192
  %v1970 = vpop.f32.mrf.mxu0
  %v1971 = vadd.f32 0.0, %v1970
  %v1972 = vpop.f32.mrf.mxu0
  %v1973 = vadd.f32 0.0, %v1972
  %1974 = vmatprep.mubr.f32.mxu0 0.0
  %1975 = vmatmul.mubr.f32.gmra.mxu0 %v195
  %v1976 = vpop.f32.mrf.mxu0
  %v1977 = vadd.f32 0.0, %v1976
  %v1978 = vpop.f32.mrf.mxu0
  %v1979 = vadd.f32 0.0, %v1978
  %1980 = vmatprep.mubr.f32.mxu0 0.0
  %1981 = vmatmul.mubr.f32.gmra.mxu0 %v198
  %v1982 = vpop.f32.mrf.mxu0
  %v1983 = vadd.f32 0.0, %v1982
  %v1984 = vpop.f32.mrf.mxu0
  %v1985 = vadd.f32 0.0, %v1984
  %1986 = vmatprep.mubr.f32.mxu0 0.0
  %1987 = vmatmul.mubr.f32.gmra.mxu0 %v201
  %v1988 = vpop.f32.mrf.mxu0
  %v1989 = vadd.f32 0.0, %v1988
  %v1990 = vpop.f32.mrf.mxu0
  %v1991 = vadd.f32 0.0, %v1990
  %1992 = vmatprep.mubr.f32.mxu0 0.0
  %1993 = vmatmul.mubr.f32.gmra.mxu0 %v204
  %v1994 = vpop.f32.mrf.mxu0
  %v1995 = vadd.f32 0.0, %v1994
  %v1996 = vpop.f32.mrf.mxu0
  %v1997 = vadd.f32 0.0, %v1996
  %1998 = vmatprep.mubr.f32.mxu0 0.0
  %1999 = vmatmul.mubr.f32.gmra.mxu0 %v207
  %v2000 = vpop.f32.mrf.mxu0
  %v2001 = vadd.f32 0.0, %v2000
  %v2002 = vpop.f32.mrf.mxu0
  %v2003 = vadd.f32 0.0, %v2002
  %2004 = vmatprep.mubr.f32.mxu0 0.0
  %2005 = vmatmul.mubr.f32.gmra.mxu0 %v210
  %v2006 = vpop.f32.mrf.mxu0
  %v2007 = vadd.f32 0.0, %v2006
  %v2008 = vpop.f32.mrf.mxu0
  %v2009 = vadd.f32 0.0, %v2008
  %2010 = vmatprep.mubr.f32.mxu0 0.0
  %2011 = vmatmul.mubr.f32.gmra.mxu0 %v213
  %v2012 = vpop.f32.mrf.mxu0
  %v2013 = vadd.f32 0.0, %v2012
  %v2014 = vpop.f32.mrf.mxu0
  %v2015 = vadd.f32 0.0, %v2014
  %2016 = vmatprep.mubr.f32.mxu0 0.0
  %2017 = vmatmul.mubr.f32.gmra.mxu0 %v216
  %v2018 = vpop.f32.mrf.mxu0
  %v2019 = vadd.f32 0.0, %v2018
  %v2020 = vpop.f32.mrf.mxu0
  %v2021 = vadd.f32 0.0, %v2020
  %2022 = vmatprep.mubr.f32.mxu0 0.0
  %2023 = vmatmul.mubr.f32.gmra.mxu0 %v219
  %v2024 = vpop.f32.mrf.mxu0
  %v2025 = vadd.f32 0.0, %v2024
  %v2026 = vpop.f32.mrf.mxu0
  %v2027 = vadd.f32 0.0, %v2026
  %2028 = vmatprep.mubr.f32.mxu0 0.0
  %2029 = vmatmul.mubr.f32.gmra.mxu0 %v222
  %v2030 = vpop.f32.mrf.mxu0
  %v2031 = vadd.f32 0.0, %v2030
  %v2032 = vpop.f32.mrf.mxu0
  %v2033 = vadd.f32 0.0, %v2032
  %2034 = vmatprep.mubr.f32.mxu0 0.0
  %2035 = vmatmul.mubr.f32.gmra.mxu0 %v225
  %v2036 = vpop.f32.mrf.mxu0
  %v2037 = vadd.f32 0.0, %v2036
  %v2038 = vpop.f32.mrf.mxu0
  %v2039 = vadd.f32 0.0, %v2038
  %2040 = vmatprep.mubr.f32.mxu0 0.0
  %2041 = vmatmul.mubr.f32.gmra.mxu0 %v228
  %v2042 = vpop.f32.mrf.mxu0
  %v2043 = vadd.f32 0.0, %v2042
  %v2044 = vpop.f32.mrf.mxu0
  %v2045 = vadd.f32 0.0, %v2044
  %2046 = vmatprep.mubr.f32.mxu0 0.0
  %2047 = vmatmul.mubr.f32.gmra.mxu0 %v231
  %v2048 = vpop.f32.mrf.mxu0
  %v2049 = vadd.f32 0.0, %v2048
  %v2050 = vpop.f32.mrf.mxu0
  %v2051 = vadd.f32 0.0, %v2050
  %2052 = vmatprep.mubr.f32.mxu0 0.0
  %2053 = vmatmul.mubr.f32.gmra.mxu0 %v234
  %v2054 = vpop.f32.mrf.mxu0
  %v2055 = vadd.f32 0.0, %v2054
  %v2056 = vpop.f32.mrf.mxu0
  %v2057 = vadd.f32 0.0, %v2056
  %2058 = vmatprep.mubr.f32.mxu0 0.0
  %2059 = vmatmul.mubr.f32.gmra.mxu0 %v237
  %v2060 = vpop.f32.mrf.mxu0
  %v2061 = vadd.f32 0.0, %v2060
  %v2062 = vpop.f32.mrf.mxu0
  %v2063 = vadd.f32 0.0, %v2062
  %2064 = vmatprep.mubr.f32.mxu0 0.0
  %2065 = vmatmul.mubr.f32.gmra.mxu0 %v240
  %v2066 = vpop.f32.mrf.mxu0
  %v2067 = vadd.f32 0.0, %v2066
  %v2068 = vpop.f32.mrf.mxu0
  %v2069 = vadd.f32 0.0, %v2068
  %2070 = vmatprep.mubr.f32.mxu0 0.0
  %2071 = vmatmul.mubr.f32.gmra.mxu0 %v243
  %v2072 = vpop.f32.mrf.mxu0
  %v2073 = vadd.f32 0.0, %v2072
  %v2074 = vpop.f32.mrf.mxu0
  %v2075 = vadd.f32 0.0, %v2074
  %2076 = vmatprep.mubr.f32.mxu0 0.0
  %2077 = vmatmul.mubr.f32.gmra.mxu0 %v246
  %v2078 = vpop.f32.mrf.mxu0
  %v2079 = vadd.f32 0.0, %v2078
  %v2080 = vpop.f32.mrf.mxu0
  %v2081 = vadd.f32 0.0, %v2080
  %2082 = vmatprep.mubr.f32.mxu0 0.0
  %2083 = vmatmul.mubr.f32.gmra.mxu0 %v249
  %v2084 = vpop.f32.mrf.mxu0
  %v2085 = vadd.f32 0.0, %v2084
  %v2086 = vpop.f32.mrf.mxu0
  %v2087 = vadd.f32 0.0, %v2086
  %2088 = vmatprep.mubr.f32.mxu0 0.0
  %2089 = vmatmul.mubr.f32.gmra.mxu0 %v252
  %v2090 = vpop.f32.mrf.mxu0
  %v2091 = vadd.f32 0.0, %v2090
  %v2092 = vpop.f32.mrf.mxu0
  %v2093 = vadd.f32 0.0, %v2092
  %2094 = vmatprep.mubr.f32.mxu0 0.0
  %2095 = vmatmul.mubr.f32.gmra.mxu0 %v255
  %v2096 = vpop.f32.mrf.mxu0
  %v2097 = vadd.f32 0.0, %v2096
  %v2098 = vpop.f32.mrf.mxu0
  %v2099 = vadd.f32 0.0, %v2098
  %2100 = vmatprep.mubr.f32.mxu0 0.0
  %2101 = vmatmul.mubr.f32.gmra.mxu0 %v258
  %v2102 = vpop.f32.mrf.mxu0
  %v2103 = vadd.f32 0.0, %v2102
  %v2104 = vpop.f32.mrf.mxu0
  %v2105 = vadd.f32 0.0, %v2104
  %2106 = vmatprep.mubr.f32.mxu0 0.0
  %2107 = vmatmul.mubr.f32.gmra.mxu0 %v261
  %v2108 = vpop.f32.mrf.mxu0
  %v2109 = vadd.f32 0.0, %v2108
  %v2110 = vpop.f32.mrf.mxu0
  %v2111 = vadd.f32 0.0, %v2110
  %2112 = vmatprep.mubr.f32.mxu0 0.0
  %2113 = vmatmul.mubr.f32.gmra.mxu0 %v264
  %v2114 = vpop.f32.mrf.mxu0
  %v2115 = vadd.f32 0.0, %v2114
  %v2116 = vpop.f32.mrf.mxu0
  %v2117 = vadd.f32 0.0, %v2116
  %2118 = vmatprep.mubr.f32.mxu0 0.0
  %2119 = vmatmul.mubr.f32.gmra.mxu0 %v267
  %v2120 = vpop.f32.mrf.mxu0
  %v2121 = vadd.f32 0.0, %v2120
  %v2122 = vpop.f32.mrf.mxu0
  %v2123 = vadd.f32 0.0, %v2122
  %2124 = vdwg.mxu0
  %v2125 = vmax.f32 %v367, %v427
  %v2126 = vmax.f32 %v369, %v429
  %v2127 = vmax.f32 %v732, %v792
  %v2128 = vmax.f32 %v734, %v794
  %v2129 = vmax.f32 %v1097, %v1157
  %v2130 = vmax.f32 %v1099, %v1159
  %v2131 = vmax.f32 %v1462, %v1522
  %v2132 = vmax.f32 %v1464, %v1524
  %v2133 = vmax.f32 %v1827, %v1887
  %v2134 = vmax.f32 %v1829, %v1889
  %v2135 = vmax.f32 %v373, %v433
  %v2136 = vmax.f32 %v375, %v435
  %v2137 = vmax.f32 %v738, %v798
  %v2138 = vmax.f32 %v740, %v800
  %v2139 = vmax.f32 %v1103, %v1163
  %v2140 = vmax.f32 %v1105, %v1165
  %v2141 = vmax.f32 %v1468, %v1528
  %v2142 = vmax.f32 %v1470, %v1530
  %v2143 = vmax.f32 %v1833, %v1893
  %v2144 = vmax.f32 %v1835, %v1895
  %v2145 = vmax.f32 %v379, %v439
  %v2146 = vmax.f32 %v381, %v441
  %v2147 = vmax.f32 %v744, %v804
  %v2148 = vmax.f32 %v746, %v806
  %v2149 = vmax.f32 %v1109, %v1169
  %v2150 = vmax.f32 %v1111, %v1171
  %v2151 = vmax.f32 %v1474, %v1534
  %v2152 = vmax.f32 %v1476, %v1536
  %v2153 = vmax.f32 %v1839, %v1899
  %v2154 = vmax.f32 %v1841, %v1901
  %v2155 = vmax.f32 %v385, %v445
  %v2156 = vmax.f32 %v387, %v447
  %v2157 = vmax.f32 %v750, %v810
  %v2158 = vmax.f32 %v752, %v812
  %v2159 = vmax.f32 %v1115, %v1175
  %v2160 = vmax.f32 %v1117, %v1177
  %v2161 = vmax.f32 %v1480, %v1540
  %v2162 = vmax.f32 %v1482, %v1542
  %v2163 = vmax.f32 %v1845, %v1905
  %v2164 = vmax.f32 %v1847, %v1907
  %v2165 = vmax.f32 %v391, %v451
  %v2166 = vmax.f32 %v393, %v453
  %v2167 = vmax.f32 %v756, %v816
  %v2168 = vmax.f32 %v758, %v818
  %v2169 = vmax.f32 %v1121, %v1181
  %v2170 = vmax.f32 %v1123, %v1183
  %v2171 = vmax.f32 %v1486, %v1546
  %v2172 = vmax.f32 %v1488, %v1548
  %v2173 = vmax.f32 %v1851, %v1911
  %v2174 = vmax.f32 %v1853, %v1913
  %v2175 = vmax.f32 %v397, %v457
  %v2176 = vmax.f32 %v399, %v459
  %v2177 = vmax.f32 %v762, %v822
  %v2178 = vmax.f32 %v764, %v824
  %v2179 = vmax.f32 %v1127, %v1187
  %v2180 = vmax.f32 %v1129, %v1189
  %v2181 = vmax.f32 %v1492, %v1552
  %v2182 = vmax.f32 %v1494, %v1554
  %v2183 = vmax.f32 %v1857, %v1917
  %v2184 = vmax.f32 %v1859, %v1919
  %v2185 = vmax.f32 %v403, %v463
  %v2186 = vmax.f32 %v405, %v465
  %v2187 = vmax.f32 %v768, %v828
  %v2188 = vmax.f32 %v770, %v830
  %v2189 = vmax.f32 %v1133, %v1193
  %v2190 = vmax.f32 %v1135, %v1195
  %v2191 = vmax.f32 %v1498, %v1558
  %v2192 = vmax.f32 %v1500, %v1560
  %v2193 = vmax.f32 %v1863, %v1923
  %v2194 = vmax.f32 %v1865, %v1925
  %v2195 = vmax.f32 %v409, %v469
  %v2196 = vmax.f32 %v411, %v471
  %v2197 = vmax.f32 %v774, %v834
  %v2198 = vmax.f32 %v776, %v836
  %v2199 = vmax.f32 %v1139, %v1199
  %v2200 = vmax.f32 %v1141, %v1201
  %v2201 = vmax.f32 %v1504, %v1564
  %v2202 = vmax.f32 %v1506, %v1566
  %v2203 = vmax.f32 %v1869, %v1929
  %v2204 = vmax.f32 %v1871, %v1931
  %v2205 = vmax.f32 %v415, %v475
  %v2206 = vmax.f32 %v417, %v477
  %v2207 = vmax.f32 %v780, %v840
  %v2208 = vmax.f32 %v782, %v842
  %v2209 = vmax.f32 %v1145, %v1205
  %v2210 = vmax.f32 %v1147, %v1207
  %v2211 = vmax.f32 %v1510, %v1570
  %v2212 = vmax.f32 %v1512, %v1572
  %v2213 = vmax.f32 %v1875, %v1935
  %v2214 = vmax.f32 %v1877, %v1937
  %v2215 = vmax.f32 %v421, %v481
  %v2216 = vmax.f32 %v423, %v483
  %v2217 = vmax.f32 %v786, %v846
  %v2218 = vmax.f32 %v788, %v848
  %v2219 = vmax.f32 %v1151, %v1211
  %v2220 = vmax.f32 %v1153, %v1213
  %v2221 = vmax.f32 %v1516, %v1576
  %v2222 = vmax.f32 %v1518, %v1578
  %v2223 = vmax.f32 %v1881, %v1941
  %v2224 = vmax.f32 %v1883, %v1943
  %v2225 = vmax.f32 %v2125, %v487
  %v2226 = vmax.f32 %v2126, %v489
  %v2227 = vmax.f32 %v2127, %v852
  %v2228 = vmax.f32 %v2128, %v854
  %v2229 = vmax.f32 %v2129, %v1217
  %v2230 = vmax.f32 %v2130, %v1219
  %v2231 = vmax.f32 %v2131, %v1582
  %v2232 = vmax.f32 %v2132, %v1584
  %v2233 = vmax.f32 %v2133, %v1947
  %v2234 = vmax.f32 %v2134, %v1949
  %v2235 = vmax.f32 %v2135, %v493
  %v2236 = vmax.f32 %v2136, %v495
  %v2237 = vmax.f32 %v2137, %v858
  %v2238 = vmax.f32 %v2138, %v860
  %v2239 = vmax.f32 %v2139, %v1223
  %v2240 = vmax.f32 %v2140, %v1225
  %v2241 = vmax.f32 %v2141, %v1588
  %v2242 = vmax.f32 %v2142, %v1590
  %v2243 = vmax.f32 %v2143, %v1953
  %v2244 = vmax.f32 %v2144, %v1955
  %v2245 = vmax.f32 %v2145, %v499
  %v2246 = vmax.f32 %v2146, %v501
  %v2247 = vmax.f32 %v2147, %v864
  %v2248 = vmax.f32 %v2148, %v866
  %v2249 = vmax.f32 %v2149, %v1229
  %v2250 = vmax.f32 %v2150, %v1231
  %v2251 = vmax.f32 %v2151, %v1594
  %v2252 = vmax.f32 %v2152, %v1596
  %v2253 = vmax.f32 %v2153, %v1959
  %v2254 = vmax.f32 %v2154, %v1961
  %v2255 = vmax.f32 %v2155, %v505
  %v2256 = vmax.f32 %v2156, %v507
  %v2257 = vmax.f32 %v2157, %v870
  %v2258 = vmax.f32 %v2158, %v872
  %v2259 = vmax.f32 %v2159, %v1235
  %v2260 = vmax.f32 %v2160, %v1237
  %v2261 = vmax.f32 %v2161, %v1600
  %v2262 = vmax.f32 %v2162, %v1602
  %v2263 = vmax.f32 %v2163, %v1965
  %v2264 = vmax.f32 %v2164, %v1967
  %v2265 = vmax.f32 %v2165, %v511
  %v2266 = vmax.f32 %v2166, %v513
  %v2267 = vmax.f32 %v2167, %v876
  %v2268 = vmax.f32 %v2168, %v878
  %v2269 = vmax.f32 %v2169, %v1241
  %v2270 = vmax.f32 %v2170, %v1243
  %v2271 = vmax.f32 %v2171, %v1606
  %v2272 = vmax.f32 %v2172, %v1608
  %v2273 = vmax.f32 %v2173, %v1971
  %v2274 = vmax.f32 %v2174, %v1973
  %v2275 = vmax.f32 %v2175, %v517
  %v2276 = vmax.f32 %v2176, %v519
  %v2277 = vmax.f32 %v2177, %v882
  %v2278 = vmax.f32 %v2178, %v884
  %v2279 = vmax.f32 %v2179, %v1247
  %v2280 = vmax.f32 %v2180, %v1249
  %v2281 = vmax.f32 %v2181, %v1612
  %v2282 = vmax.f32 %v2182, %v1614
  %v2283 = vmax.f32 %v2183, %v1977
  %v2284 = vmax.f32 %v2184, %v1979
  %v2285 = vmax.f32 %v2185, %v523
  %v2286 = vmax.f32 %v2186, %v525
  %v2287 = vmax.f32 %v2187, %v888
  %v2288 = vmax.f32 %v2188, %v890
  %v2289 = vmax.f32 %v2189, %v1253
  %v2290 = vmax.f32 %v2190, %v1255
  %v2291 = vmax.f32 %v2191, %v1618
  %v2292 = vmax.f32 %v2192, %v1620
  %v2293 = vmax.f32 %v2193, %v1983
  %v2294 = vmax.f32 %v2194, %v1985
  %v2295 = vmax.f32 %v2195, %v529
  %v2296 = vmax.f32 %v2196, %v531
  %v2297 = vmax.f32 %v2197, %v894
  %v2298 = vmax.f32 %v2198, %v896
  %v2299 = vmax.f32 %v2199, %v1259
  %v2300 = vmax.f32 %v2200, %v1261
  %v2301 = vmax.f32 %v2201, %v1624
  %v2302 = vmax.f32 %v2202, %v1626
  %v2303 = vmax.f32 %v2203, %v1989
  %v2304 = vmax.f32 %v2204, %v1991
  %v2305 = vmax.f32 %v2205, %v535
  %v2306 = vmax.f32 %v2206, %v537
  %v2307 = vmax.f32 %v2207, %v900
  %v2308 = vmax.f32 %v2208, %v902
  %v2309 = vmax.f32 %v2209, %v1265
  %v2310 = vmax.f32 %v2210, %v1267
  %v2311 = vmax.f32 %v2211, %v1630
  %v2312 = vmax.f32 %v2212, %v1632
  %v2313 = vmax.f32 %v2213, %v1995
  %v2314 = vmax.f32 %v2214, %v1997
  %v2315 = vmax.f32 %v2215, %v541
  %v2316 = vmax.f32 %v2216, %v543
  %v2317 = vmax.f32 %v2217, %v906
  %v2318 = vmax.f32 %v2218, %v908
  %v2319 = vmax.f32 %v2219, %v1271
  %v2320 = vmax.f32 %v2220, %v1273
  %v2321 = vmax.f32 %v2221, %v1636
  %v2322 = vmax.f32 %v2222, %v1638
  %v2323 = vmax.f32 %v2223, %v2001
  %v2324 = vmax.f32 %v2224, %v2003
  %v2325 = vmax.f32 %v2225, %v547
  %v2326 = vmax.f32 %v2226, %v549
  %v2327 = vmax.f32 %v2227, %v912
  %v2328 = vmax.f32 %v2228, %v914
  %v2329 = vmax.f32 %v2229, %v1277
  %v2330 = vmax.f32 %v2230, %v1279
  %v2331 = vmax.f32 %v2231, %v1642
  %v2332 = vmax.f32 %v2232, %v1644
  %v2333 = vmax.f32 %v2233, %v2007
  %v2334 = vmax.f32 %v2234, %v2009
  %v2335 = vmax.f32 %v2235, %v553
  %v2336 = vmax.f32 %v2236, %v555
  %v2337 = vmax.f32 %v2237, %v918
  %v2338 = vmax.f32 %v2238, %v920
  %v2339 = vmax.f32 %v2239, %v1283
  %v2340 = vmax.f32 %v2240, %v1285
  %v2341 = vmax.f32 %v2241, %v1648
  %v2342 = vmax.f32 %v2242, %v1650
  %v2343 = vmax.f32 %v2243, %v2013
  %v2344 = vmax.f32 %v2244, %v2015
  %v2345 = vmax.f32 %v2245, %v559
  %v2346 = vmax.f32 %v2246, %v561
  %v2347 = vmax.f32 %v2247, %v924
  %v2348 = vmax.f32 %v2248, %v926
  %v2349 = vmax.f32 %v2249, %v1289
  %v2350 = vmax.f32 %v2250, %v1291
  %v2351 = vmax.f32 %v2251, %v1654
  %v2352 = vmax.f32 %v2252, %v1656
  %v2353 = vmax.f32 %v2253, %v2019
  %v2354 = vmax.f32 %v2254, %v2021
  %v2355 = vmax.f32 %v2255, %v565
  %v2356 = vmax.f32 %v2256, %v567
  %v2357 = vmax.f32 %v2257, %v930
  %v2358 = vmax.f32 %v2258, %v932
  %v2359 = vmax.f32 %v2259, %v1295
  %v2360 = vmax.f32 %v2260, %v1297
  %v2361 = vmax.f32 %v2261, %v1660
  %v2362 = vmax.f32 %v2262, %v1662
  %v2363 = vmax.f32 %v2263, %v2025
  %v2364 = vmax.f32 %v2264, %v2027
  %v2365 = vmax.f32 %v2265, %v571
  %v2366 = vmax.f32 %v2266, %v573
  %v2367 = vmax.f32 %v2267, %v936
  %v2368 = vmax.f32 %v2268, %v938
  %v2369 = vmax.f32 %v2269, %v1301
  %v2370 = vmax.f32 %v2270, %v1303
  %v2371 = vmax.f32 %v2271, %v1666
  %v2372 = vmax.f32 %v2272, %v1668
  %v2373 = vmax.f32 %v2273, %v2031
  %v2374 = vmax.f32 %v2274, %v2033
  %v2375 = vmax.f32 %v2275, %v577
  %v2376 = vmax.f32 %v2276, %v579
  %v2377 = vmax.f32 %v2277, %v942
  %v2378 = vmax.f32 %v2278, %v944
  %v2379 = vmax.f32 %v2279, %v1307
  %v2380 = vmax.f32 %v2280, %v1309
  %v2381 = vmax.f32 %v2281, %v1672
  %v2382 = vmax.f32 %v2282, %v1674
  %v2383 = vmax.f32 %v2283, %v2037
  %v2384 = vmax.f32 %v2284, %v2039
  %v2385 = vmax.f32 %v2285, %v583
  %v2386 = vmax.f32 %v2286, %v585
  %v2387 = vmax.f32 %v2287, %v948
  %v2388 = vmax.f32 %v2288, %v950
  %v2389 = vmax.f32 %v2289, %v1313
  %v2390 = vmax.f32 %v2290, %v1315
  %v2391 = vmax.f32 %v2291, %v1678
  %v2392 = vmax.f32 %v2292, %v1680
  %v2393 = vmax.f32 %v2293, %v2043
  %v2394 = vmax.f32 %v2294, %v2045
  %v2395 = vmax.f32 %v2295, %v589
  %v2396 = vmax.f32 %v2296, %v591
  %v2397 = vmax.f32 %v2297, %v954
  %v2398 = vmax.f32 %v2298, %v956
  %v2399 = vmax.f32 %v2299, %v1319
  %v2400 = vmax.f32 %v2300, %v1321
  %v2401 = vmax.f32 %v2301, %v1684
  %v2402 = vmax.f32 %v2302, %v1686
  %v2403 = vmax.f32 %v2303, %v2049
  %v2404 = vmax.f32 %v2304, %v2051
  %v2405 = vmax.f32 %v2305, %v595
  %v2406 = vmax.f32 %v2306, %v597
  %v2407 = vmax.f32 %v2307, %v960
  %v2408 = vmax.f32 %v2308, %v962
  %v2409 = vmax.f32 %v2309, %v1325
  %v2410 = vmax.f32 %v2310, %v1327
  %v2411 = vmax.f32 %v2311, %v1690
  %v2412 = vmax.f32 %v2312, %v1692
  %v2413 = vmax.f32 %v2313, %v2055
  %v2414 = vmax.f32 %v2314, %v2057
  %v2415 = vmax.f32 %v2315, %v601
  %v2416 = vmax.f32 %v2316, %v603
  %v2417 = vmax.f32 %v2317, %v966
  %v2418 = vmax.f32 %v2318, %v968
  %v2419 = vmax.f32 %v2319, %v1331
  %v2420 = vmax.f32 %v2320, %v1333
  %v2421 = vmax.f32 %v2321, %v1696
  %v2422 = vmax.f32 %v2322, %v1698
  %v2423 = vmax.f32 %v2323, %v2061
  %v2424 = vmax.f32 %v2324, %v2063
  %v2425 = vmax.f32 %v2325, %v607
  %v2426 = vmax.f32 %v2326, %v609
  %v2427 = vmax.f32 %v2327, %v972
  %v2428 = vmax.f32 %v2328, %v974
  %v2429 = vmax.f32 %v2329, %v1337
  %v2430 = vmax.f32 %v2330, %v1339
  %v2431 = vmax.f32 %v2331, %v1702
  %v2432 = vmax.f32 %v2332, %v1704
  %v2433 = vmax.f32 %v2333, %v2067
  %v2434 = vmax.f32 %v2334, %v2069
  %v2435 = vmax.f32 %v2335, %v613
  %v2436 = vmax.f32 %v2336, %v615
  %v2437 = vmax.f32 %v2337, %v978
  %v2438 = vmax.f32 %v2338, %v980
  %v2439 = vmax.f32 %v2339, %v1343
  %v2440 = vmax.f32 %v2340, %v1345
  %v2441 = vmax.f32 %v2341, %v1708
  %v2442 = vmax.f32 %v2342, %v1710
  %v2443 = vmax.f32 %v2343, %v2073
  %v2444 = vmax.f32 %v2344, %v2075
  %v2445 = vmax.f32 %v2345, %v619
  %v2446 = vmax.f32 %v2346, %v621
  %v2447 = vmax.f32 %v2347, %v984
  %v2448 = vmax.f32 %v2348, %v986
  %v2449 = vmax.f32 %v2349, %v1349
  %v2450 = vmax.f32 %v2350, %v1351
  %v2451 = vmax.f32 %v2351, %v1714
  %v2452 = vmax.f32 %v2352, %v1716
  %v2453 = vmax.f32 %v2353, %v2079
  %v2454 = vmax.f32 %v2354, %v2081
  %v2455 = vmax.f32 %v2355, %v625
  %v2456 = vmax.f32 %v2356, %v627
  %v2457 = vmax.f32 %v2357, %v990
  %v2458 = vmax.f32 %v2358, %v992
  %v2459 = vmax.f32 %v2359, %v1355
  %v2460 = vmax.f32 %v2360, %v1357
  %v2461 = vmax.f32 %v2361, %v1720
  %v2462 = vmax.f32 %v2362, %v1722
  %v2463 = vmax.f32 %v2363, %v2085
  %v2464 = vmax.f32 %v2364, %v2087
  %v2465 = vmax.f32 %v2365, %v631
  %v2466 = vmax.f32 %v2366, %v633
  %v2467 = vmax.f32 %v2367, %v996
  %v2468 = vmax.f32 %v2368, %v998
  %v2469 = vmax.f32 %v2369, %v1361
  %v2470 = vmax.f32 %v2370, %v1363
  %v2471 = vmax.f32 %v2371, %v1726
  %v2472 = vmax.f32 %v2372, %v1728
  %v2473 = vmax.f32 %v2373, %v2091
  %v2474 = vmax.f32 %v2374, %v2093
  %v2475 = vmax.f32 %v2375, %v637
  %v2476 = vmax.f32 %v2376, %v639
  %v2477 = vmax.f32 %v2377, %v1002
  %v2478 = vmax.f32 %v2378, %v1004
  %v2479 = vmax.f32 %v2379, %v1367
  %v2480 = vmax.f32 %v2380, %v1369
  %v2481 = vmax.f32 %v2381, %v1732
  %v2482 = vmax.f32 %v2382, %v1734
  %v2483 = vmax.f32 %v2383, %v2097
  %v2484 = vmax.f32 %v2384, %v2099
  %v2485 = vmax.f32 %v2385, %v643
  %v2486 = vmax.f32 %v2386, %v645
  %v2487 = vmax.f32 %v2387, %v1008
  %v2488 = vmax.f32 %v2388, %v1010
  %v2489 = vmax.f32 %v2389, %v1373
  %v2490 = vmax.f32 %v2390, %v1375
  %v2491 = vmax.f32 %v2391, %v1738
  %v2492 = vmax.f32 %v2392, %v1740
  %v2493 = vmax.f32 %v2393, %v2103
  %v2494 = vmax.f32 %v2394, %v2105
  %v2495 = vmax.f32 %v2395, %v649
  %v2496 = vmax.f32 %v2396, %v651
  %v2497 = vmax.f32 %v2397, %v1014
  %v2498 = vmax.f32 %v2398, %v1016
  %v2499 = vmax.f32 %v2399, %v1379
  %v2500 = vmax.f32 %v2400, %v1381
  %v2501 = vmax.f32 %v2401, %v1744
  %v2502 = vmax.f32 %v2402, %v1746
  %v2503 = vmax.f32 %v2403, %v2109
  %v2504 = vmax.f32 %v2404, %v2111
  %v2505 = vmax.f32 %v2405, %v655
  %v2506 = vmax.f32 %v2406, %v657
  %v2507 = vmax.f32 %v2407, %v1020
  %v2508 = vmax.f32 %v2408, %v1022
  %v2509 = vmax.f32 %v2409, %v1385
  %v2510 = vmax.f32 %v2410, %v1387
  %v2511 = vmax.f32 %v2411, %v1750
  %v2512 = vmax.f32 %v2412, %v1752
  %v2513 = vmax.f32 %v2413, %v2115
  %v2514 = vmax.f32 %v2414, %v2117
  %v2515 = vmax.f32 %v2415, %v661
  %v2516 = vmax.f32 %v2416, %v663
  %v2517 = vmax.f32 %v2417, %v1026
  %v2518 = vmax.f32 %v2418, %v1028
  %v2519 = vmax.f32 %v2419, %v1391
  %v2520 = vmax.f32 %v2420, %v1393
  %v2521 = vmax.f32 %v2421, %v1756
  %v2522 = vmax.f32 %v2422, %v1758
  %v2523 = vmax.f32 %v2423, %v2121
  %v2524 = vmax.f32 %v2424, %v2123
  %v2525 = vld [vmem:[%s2] sm:$0xff]
  %v2526 = vld [vmem:[%s2 + $0x8] sm:$0xff]
  %v2527 = vld [vmem:[%s2 + $0x10] sm:$0xff]
  %v2528 = vld [vmem:[%s2 + $0x18] sm:$0xff]
  %v2529 = vld [vmem:[%s2 + $0x20] sm:$0x1]
  %v2530 = vld [vmem:[%s3] sm:$0xff]
  %v2531 = vld [vmem:[%s3 + $0x8] sm:$0xff]
  %v2532 = vld [vmem:[%s3 + $0x10] sm:$0xff]
  %v2533 = vld [vmem:[%s3 + $0x18] sm:$0xff]
  %v2534 = vld [vmem:[%s3 + $0x20] sm:$0x1]
  %2536 = vset.pattern.permute.xlu0 0
  %2537 = vperm.xlu0 %2536, %v2530
  %v2538 = vpop.permute.xlu0 %2537
  %2541 = vset.pattern.permute.xlu0 0
  %2542 = vperm.xlu0 %2541, %v2531
  %v2543 = vpop.permute.xlu0 %2542
  %2546 = vset.pattern.permute.xlu0 0
  %2547 = vperm.xlu0 %2546, %v2532
  %v2548 = vpop.permute.xlu0 %2547
  %2551 = vset.pattern.permute.xlu0 0
  %2552 = vperm.xlu0 %2551, %v2533
  %v2553 = vpop.permute.xlu0 %2552
  %2556 = vset.pattern.permute.xlu0 0
  %2557 = vperm.xlu0 %2556, %v2534
  %v2558 = vpop.permute.xlu0 %2557
  %vm2560 = vcmask 654336
  %v2562 = vsel %vm2560, %v2525, 0
  %v2565 = vsel %vm2560, %v2526, 0
  %v2568 = vsel %vm2560, %v2527, 0
  %v2571 = vsel %vm2560, %v2528, 0
  %v2574 = vsel %vm2560, %v2529, 0
  %2576 = vmatprep.subr.mxu0 0.0
  %2577 = vmatpush1.msra.mxu0 0.0
  %2578 = vmatprep.subr.mxu0 0.0
  %2579 = vmatpush1.msra.mxu0 0.0
  %2580 = vmatprep.subr.mxu0 0.0
  %2581 = vmatpush1.msra.mxu0 0.0
  %2582 = vmatprep.subr.mxu0 0.0
  %2583 = vmatpush1.msra.mxu0 0.0
  %2584 = vmatprep.subr.mxu0 0.0
  %2585 = vmatpush1.msra.mxu0 0.0
  %2586 = vmatprep.subr.mxu0 0.0
  %2587 = vmatpush1.msra.mxu0 0.0
  %2588 = vmatprep.subr.mxu0 %v2516
  %2589 = vmatpush1.msra.mxu0 %v2515
  %2590 = vmatprep.subr.mxu0 %v2506
  %2591 = vmatpush1.msra.mxu0 %v2505
  %2592 = vmatprep.subr.mxu0 %v2496
  %2593 = vmatpush1.msra.mxu0 %v2495
  %2594 = vmatprep.subr.mxu0 %v2486
  %2595 = vmatpush1.msra.mxu0 %v2485
  %2596 = vmatprep.subr.mxu0 %v2476
  %2597 = vmatpush1.msra.mxu0 %v2475
  %2598 = vmatprep.subr.mxu0 %v2466
  %2599 = vmatpush1.msra.mxu0 %v2465
  %2600 = vmatprep.subr.mxu0 %v2456
  %2601 = vmatpush1.msra.mxu0 %v2455
  %2602 = vmatprep.subr.mxu0 %v2446
  %2603 = vmatpush1.msra.mxu0 %v2445
  %2604 = vmatprep.subr.mxu0 %v2436
  %2605 = vmatpush1.msra.mxu0 %v2435
  %2606 = vmatprep.subr.mxu0 %v2426
  %2607 = vmatpush1.msra.mxu0 %v2425
  %2608 = vmatprep.subr.mxu0 0.0
  %2609 = vmatpush2.msra.mxu0 0.0
  %2610 = vmatprep.subr.mxu0 0.0
  %2611 = vmatpush2.msra.mxu0 0.0
  %2612 = vmatprep.subr.mxu0 0.0
  %2613 = vmatpush2.msra.mxu0 0.0
  %2614 = vmatprep.subr.mxu0 0.0
  %2615 = vmatpush2.msra.mxu0 0.0
  %2616 = vmatprep.subr.mxu0 0.0
  %2617 = vmatpush2.msra.mxu0 0.0
  %2618 = vmatprep.subr.mxu0 0.0
  %2619 = vmatpush2.msra.mxu0 0.0
  %2620 = vmatprep.subr.mxu0 0.0
  %2621 = vmatpush2.msra.mxu0 0.0
  %2622 = vmatprep.subr.mxu0 0.0
  %2623 = vmatpush2.msra.mxu0 0.0
  %2624 = vmatprep.subr.mxu0 0.0
  %2625 = vmatpush2.msra.mxu0 0.0
  %2626 = vmatprep.subr.mxu0 0.0
  %2627 = vmatpush2.msra.mxu0 0.0
  %2628 = vmatprep.subr.mxu0 0.0
  %2629 = vmatpush2.msra.mxu0 0.0
  %2630 = vmatprep.subr.mxu0 0.0
  %2631 = vmatpush2.msra.mxu0 0.0
  %2632 = vmatprep.subr.mxu0 0.0
  %2633 = vmatpush2.msra.mxu0 0.0
  %2634 = vmatprep.subr.mxu0 0.0
  %2635 = vmatpush2.msra.mxu0 0.0
  %2636 = vmatprep.subr.mxu0 0.0
  %2637 = vmatpush2.msra.mxu0 0.0
  %2638 = vmatprep.subr.mxu0 0.0
  %2639 = vmatpush2.msra.mxu0 0.0
  %2640 = vmatprep.mubr.f32.mxu0 0.0
  %2641 = vmatmul.mubr.f32.gmra.mxu0 %v2562
  %v2642 = vpop.f32.mrf.mxu0
  %v2643 = vadd.f32 %v2538, %v2642
  %v2644 = vpop.f32.mrf.mxu0
  %v2645 = vadd.f32 %v2538, %v2644
  %2646 = vmatprep.mubr.f32.mxu0 0.0
  %2647 = vmatmul.mubr.f32.gmra.mxu0 %v2565
  %v2648 = vpop.f32.mrf.mxu0
  %v2649 = vadd.f32 %v2543, %v2648
  %v2650 = vpop.f32.mrf.mxu0
  %v2651 = vadd.f32 %v2543, %v2650
  %2652 = vmatprep.mubr.f32.mxu0 0.0
  %2653 = vmatmul.mubr.f32.gmra.mxu0 %v2568
  %v2654 = vpop.f32.mrf.mxu0
  %v2655 = vadd.f32 %v2548, %v2654
  %v2656 = vpop.f32.mrf.mxu0
  %v2657 = vadd.f32 %v2548, %v2656
  %2658 = vmatprep.mubr.f32.mxu0 0.0
  %2659 = vmatmul.mubr.f32.gmra.mxu0 %v2571
  %v2660 = vpop.f32.mrf.mxu0
  %v2661 = vadd.f32 %v2553, %v2660
  %v2662 = vpop.f32.mrf.mxu0
  %v2663 = vadd.f32 %v2553, %v2662
  %2664 = vmatprep.mubr.f32.mxu0 0.0
  %2665 = vmatmul.mubr.f32.gmra.mxu0 %v2574
  %v2666 = vpop.f32.mrf.mxu0
  %v2667 = vadd.f32 %v2558, %v2666
  %v2668 = vpop.f32.mrf.mxu0
  %v2669 = vadd.f32 %v2558, %v2668
  %2670 = vdwg.mxu0
  %2671 = vmatprep.subr.mxu0 0.0
  %2672 = vmatpush1.msra.mxu0 0.0
  %2673 = vmatprep.subr.mxu0 0.0
  %2674 = vmatpush1.msra.mxu0 0.0
  %2675 = vmatprep.subr.mxu0 0.0
  %2676 = vmatpush1.msra.mxu0 0.0
  %2677 = vmatprep.subr.mxu0 0.0
  %2678 = vmatpush1.msra.mxu0 0.0
  %2679 = vmatprep.subr.mxu0 0.0
  %2680 = vmatpush1.msra.mxu0 0.0
  %2681 = vmatprep.subr.mxu0 0.0
  %2682 = vmatpush1.msra.mxu0 0.0
  %2683 = vmatprep.subr.mxu0 %v2518
  %2684 = vmatpush1.msra.mxu0 %v2517
  %2685 = vmatprep.subr.mxu0 %v2508
  %2686 = vmatpush1.msra.mxu0 %v2507
  %2687 = vmatprep.subr.mxu0 %v2498
  %2688 = vmatpush1.msra.mxu0 %v2497
  %2689 = vmatprep.subr.mxu0 %v2488
  %2690 = vmatpush1.msra.mxu0 %v2487
  %2691 = vmatprep.subr.mxu0 %v2478
  %2692 = vmatpush1.msra.mxu0 %v2477
  %2693 = vmatprep.subr.mxu0 %v2468
  %2694 = vmatpush1.msra.mxu0 %v2467
  %2695 = vmatprep.subr.mxu0 %v2458
  %2696 = vmatpush1.msra.mxu0 %v2457
  %2697 = vmatprep.subr.mxu0 %v2448
  %2698 = vmatpush1.msra.mxu0 %v2447
  %2699 = vmatprep.subr.mxu0 %v2438
  %2700 = vmatpush1.msra.mxu0 %v2437
  %2701 = vmatprep.subr.mxu0 %v2428
  %2702 = vmatpush1.msra.mxu0 %v2427
  %2703 = vmatprep.subr.mxu0 0.0
  %2704 = vmatpush2.msra.mxu0 0.0
  %2705 = vmatprep.subr.mxu0 0.0
  %2706 = vmatpush2.msra.mxu0 0.0
  %2707 = vmatprep.subr.mxu0 0.0
  %2708 = vmatpush2.msra.mxu0 0.0
  %2709 = vmatprep.subr.mxu0 0.0
  %2710 = vmatpush2.msra.mxu0 0.0
  %2711 = vmatprep.subr.mxu0 0.0
  %2712 = vmatpush2.msra.mxu0 0.0
  %2713 = vmatprep.subr.mxu0 0.0
  %2714 = vmatpush2.msra.mxu0 0.0
  %2715 = vmatprep.subr.mxu0 0.0
  %2716 = vmatpush2.msra.mxu0 0.0
  %2717 = vmatprep.subr.mxu0 0.0
  %2718 = vmatpush2.msra.mxu0 0.0
  %2719 = vmatprep.subr.mxu0 0.0
  %2720 = vmatpush2.msra.mxu0 0.0
  %2721 = vmatprep.subr.mxu0 0.0
  %2722 = vmatpush2.msra.mxu0 0.0
  %2723 = vmatprep.subr.mxu0 0.0
  %2724 = vmatpush2.msra.mxu0 0.0
  %2725 = vmatprep.subr.mxu0 0.0
  %2726 = vmatpush2.msra.mxu0 0.0
  %2727 = vmatprep.subr.mxu0 0.0
  %2728 = vmatpush2.msra.mxu0 0.0
  %2729 = vmatprep.subr.mxu0 0.0
  %2730 = vmatpush2.msra.mxu0 0.0
  %2731 = vmatprep.subr.mxu0 0.0
  %2732 = vmatpush2.msra.mxu0 0.0
  %2733 = vmatprep.subr.mxu0 0.0
  %2734 = vmatpush2.msra.mxu0 0.0
  %2735 = vmatprep.mubr.f32.mxu0 0.0
  %2736 = vmatmul.mubr.f32.gmra.mxu0 %v2562
  %v2737 = vpop.f32.mrf.mxu0
  %v2738 = vadd.f32 %v2538, %v2737
  %v2739 = vpop.f32.mrf.mxu0
  %v2740 = vadd.f32 %v2538, %v2739
  %2741 = vmatprep.mubr.f32.mxu0 0.0
  %2742 = vmatmul.mubr.f32.gmra.mxu0 %v2565
  %v2743 = vpop.f32.mrf.mxu0
  %v2744 = vadd.f32 %v2543, %v2743
  %v2745 = vpop.f32.mrf.mxu0
  %v2746 = vadd.f32 %v2543, %v2745
  %2747 = vmatprep.mubr.f32.mxu0 0.0
  %2748 = vmatmul.mubr.f32.gmra.mxu0 %v2568
  %v2749 = vpop.f32.mrf.mxu0
  %v2750 = vadd.f32 %v2548, %v2749
  %v2751 = vpop.f32.mrf.mxu0
  %v2752 = vadd.f32 %v2548, %v2751
  %2753 = vmatprep.mubr.f32.mxu0 0.0
  %2754 = vmatmul.mubr.f32.gmra.mxu0 %v2571
  %v2755 = vpop.f32.mrf.mxu0
  %v2756 = vadd.f32 %v2553, %v2755
  %v2757 = vpop.f32.mrf.mxu0
  %v2758 = vadd.f32 %v2553, %v2757
  %2759 = vmatprep.mubr.f32.mxu0 0.0
  %2760 = vmatmul.mubr.f32.gmra.mxu0 %v2574
  %v2761 = vpop.f32.mrf.mxu0
  %v2762 = vadd.f32 %v2558, %v2761
  %v2763 = vpop.f32.mrf.mxu0
  %v2764 = vadd.f32 %v2558, %v2763
  %2765 = vdwg.mxu0
  %2766 = vmatprep.subr.mxu0 0.0
  %2767 = vmatpush1.msra.mxu0 0.0
  %2768 = vmatprep.subr.mxu0 0.0
  %2769 = vmatpush1.msra.mxu0 0.0
  %2770 = vmatprep.subr.mxu0 0.0
  %2771 = vmatpush1.msra.mxu0 0.0
  %2772 = vmatprep.subr.mxu0 0.0
  %2773 = vmatpush1.msra.mxu0 0.0
  %2774 = vmatprep.subr.mxu0 0.0
  %2775 = vmatpush1.msra.mxu0 0.0
  %2776 = vmatprep.subr.mxu0 0.0
  %2777 = vmatpush1.msra.mxu0 0.0
  %2778 = vmatprep.subr.mxu0 %v2520
  %2779 = vmatpush1.msra.mxu0 %v2519
  %2780 = vmatprep.subr.mxu0 %v2510
  %2781 = vmatpush1.msra.mxu0 %v2509
  %2782 = vmatprep.subr.mxu0 %v2500
  %2783 = vmatpush1.msra.mxu0 %v2499
  %2784 = vmatprep.subr.mxu0 %v2490
  %2785 = vmatpush1.msra.mxu0 %v2489
  %2786 = vmatprep.subr.mxu0 %v2480
  %2787 = vmatpush1.msra.mxu0 %v2479
  %2788 = vmatprep.subr.mxu0 %v2470
  %2789 = vmatpush1.msra.mxu0 %v2469
  %2790 = vmatprep.subr.mxu0 %v2460
  %2791 = vmatpush1.msra.mxu0 %v2459
  %2792 = vmatprep.subr.mxu0 %v2450
  %2793 = vmatpush1.msra.mxu0 %v2449
  %2794 = vmatprep.subr.mxu0 %v2440
  %2795 = vmatpush1.msra.mxu0 %v2439
  %2796 = vmatprep.subr.mxu0 %v2430
  %2797 = vmatpush1.msra.mxu0 %v2429
  %2798 = vmatprep.subr.mxu0 0.0
  %2799 = vmatpush2.msra.mxu0 0.0
  %2800 = vmatprep.subr.mxu0 0.0
  %2801 = vmatpush2.msra.mxu0 0.0
  %2802 = vmatprep.subr.mxu0 0.0
  %2803 = vmatpush2.msra.mxu0 0.0
  %2804 = vmatprep.subr.mxu0 0.0
  %2805 = vmatpush2.msra.mxu0 0.0
  %2806 = vmatprep.subr.mxu0 0.0
  %2807 = vmatpush2.msra.mxu0 0.0
  %2808 = vmatprep.subr.mxu0 0.0
  %2809 = vmatpush2.msra.mxu0 0.0
  %2810 = vmatprep.subr.mxu0 0.0
  %2811 = vmatpush2.msra.mxu0 0.0
  %2812 = vmatprep.subr.mxu0 0.0
  %2813 = vmatpush2.msra.mxu0 0.0
  %2814 = vmatprep.subr.mxu0 0.0
  %2815 = vmatpush2.msra.mxu0 0.0
  %2816 = vmatprep.subr.mxu0 0.0
  %2817 = vmatpush2.msra.mxu0 0.0
  %2818 = vmatprep.subr.mxu0 0.0
  %2819 = vmatpush2.msra.mxu0 0.0
  %2820 = vmatprep.subr.mxu0 0.0
  %2821 = vmatpush2.msra.mxu0 0.0
  %2822 = vmatprep.subr.mxu0 0.0
  %2823 = vmatpush2.msra.mxu0 0.0
  %2824 = vmatprep.subr.mxu0 0.0
  %2825 = vmatpush2.msra.mxu0 0.0
  %2826 = vmatprep.subr.mxu0 0.0
  %2827 = vmatpush2.msra.mxu0 0.0
  %2828 = vmatprep.subr.mxu0 0.0
  %2829 = vmatpush2.msra.mxu0 0.0
  %2830 = vmatprep.mubr.f32.mxu0 0.0
  %2831 = vmatmul.mubr.f32.gmra.mxu0 %v2562
  %v2832 = vpop.f32.mrf.mxu0
  %v2833 = vadd.f32 %v2538, %v2832
  %v2834 = vpop.f32.mrf.mxu0
  %v2835 = vadd.f32 %v2538, %v2834
  %2836 = vmatprep.mubr.f32.mxu0 0.0
  %2837 = vmatmul.mubr.f32.gmra.mxu0 %v2565
  %v2838 = vpop.f32.mrf.mxu0
  %v2839 = vadd.f32 %v2543, %v2838
  %v2840 = vpop.f32.mrf.mxu0
  %v2841 = vadd.f32 %v2543, %v2840
  %2842 = vmatprep.mubr.f32.mxu0 0.0
  %2843 = vmatmul.mubr.f32.gmra.mxu0 %v2568
  %v2844 = vpop.f32.mrf.mxu0
  %v2845 = vadd.f32 %v2548, %v2844
  %v2846 = vpop.f32.mrf.mxu0
  %v2847 = vadd.f32 %v2548, %v2846
  %2848 = vmatprep.mubr.f32.mxu0 0.0
  %2849 = vmatmul.mubr.f32.gmra.mxu0 %v2571
  %v2850 = vpop.f32.mrf.mxu0
  %v2851 = vadd.f32 %v2553, %v2850
  %v2852 = vpop.f32.mrf.mxu0
  %v2853 = vadd.f32 %v2553, %v2852
  %2854 = vmatprep.mubr.f32.mxu0 0.0
  %2855 = vmatmul.mubr.f32.gmra.mxu0 %v2574
  %v2856 = vpop.f32.mrf.mxu0
  %v2857 = vadd.f32 %v2558, %v2856
  %v2858 = vpop.f32.mrf.mxu0
  %v2859 = vadd.f32 %v2558, %v2858
  %2860 = vdwg.mxu0
  %2861 = vmatprep.subr.mxu0 0.0
  %2862 = vmatpush1.msra.mxu0 0.0
  %2863 = vmatprep.subr.mxu0 0.0
  %2864 = vmatpush1.msra.mxu0 0.0
  %2865 = vmatprep.subr.mxu0 0.0
  %2866 = vmatpush1.msra.mxu0 0.0
  %2867 = vmatprep.subr.mxu0 0.0
  %2868 = vmatpush1.msra.mxu0 0.0
  %2869 = vmatprep.subr.mxu0 0.0
  %2870 = vmatpush1.msra.mxu0 0.0
  %2871 = vmatprep.subr.mxu0 0.0
  %2872 = vmatpush1.msra.mxu0 0.0
  %2873 = vmatprep.subr.mxu0 %v2522
  %2874 = vmatpush1.msra.mxu0 %v2521
  %2875 = vmatprep.subr.mxu0 %v2512
  %2876 = vmatpush1.msra.mxu0 %v2511
  %2877 = vmatprep.subr.mxu0 %v2502
  %2878 = vmatpush1.msra.mxu0 %v2501
  %2879 = vmatprep.subr.mxu0 %v2492
  %2880 = vmatpush1.msra.mxu0 %v2491
  %2881 = vmatprep.subr.mxu0 %v2482
  %2882 = vmatpush1.msra.mxu0 %v2481
  %2883 = vmatprep.subr.mxu0 %v2472
  %2884 = vmatpush1.msra.mxu0 %v2471
  %2885 = vmatprep.subr.mxu0 %v2462
  %2886 = vmatpush1.msra.mxu0 %v2461
  %2887 = vmatprep.subr.mxu0 %v2452
  %2888 = vmatpush1.msra.mxu0 %v2451
  %2889 = vmatprep.subr.mxu0 %v2442
  %2890 = vmatpush1.msra.mxu0 %v2441
  %2891 = vmatprep.subr.mxu0 %v2432
  %2892 = vmatpush1.msra.mxu0 %v2431
  %2893 = vmatprep.subr.mxu0 0.0
  %2894 = vmatpush2.msra.mxu0 0.0
  %2895 = vmatprep.subr.mxu0 0.0
  %2896 = vmatpush2.msra.mxu0 0.0
  %2897 = vmatprep.subr.mxu0 0.0
  %2898 = vmatpush2.msra.mxu0 0.0
  %2899 = vmatprep.subr.mxu0 0.0
  %2900 = vmatpush2.msra.mxu0 0.0
  %2901 = vmatprep.subr.mxu0 0.0
  %2902 = vmatpush2.msra.mxu0 0.0
  %2903 = vmatprep.subr.mxu0 0.0
  %2904 = vmatpush2.msra.mxu0 0.0
  %2905 = vmatprep.subr.mxu0 0.0
  %2906 = vmatpush2.msra.mxu0 0.0
  %2907 = vmatprep.subr.mxu0 0.0
  %2908 = vmatpush2.msra.mxu0 0.0
  %2909 = vmatprep.subr.mxu0 0.0
  %2910 = vmatpush2.msra.mxu0 0.0
  %2911 = vmatprep.subr.mxu0 0.0
  %2912 = vmatpush2.msra.mxu0 0.0
  %2913 = vmatprep.subr.mxu0 0.0
  %2914 = vmatpush2.msra.mxu0 0.0
  %2915 = vmatprep.subr.mxu0 0.0
  %2916 = vmatpush2.msra.mxu0 0.0
  %2917 = vmatprep.subr.mxu0 0.0
  %2918 = vmatpush2.msra.mxu0 0.0
  %2919 = vmatprep.subr.mxu0 0.0
  %2920 = vmatpush2.msra.mxu0 0.0
  %2921 = vmatprep.subr.mxu0 0.0
  %2922 = vmatpush2.msra.mxu0 0.0
  %2923 = vmatprep.subr.mxu0 0.0
  %2924 = vmatpush2.msra.mxu0 0.0
  %2925 = vmatprep.mubr.f32.mxu0 0.0
  %2926 = vmatmul.mubr.f32.gmra.mxu0 %v2562
  %v2927 = vpop.f32.mrf.mxu0
  %v2928 = vadd.f32 %v2538, %v2927
  %v2929 = vpop.f32.mrf.mxu0
  %v2930 = vadd.f32 %v2538, %v2929
  %2931 = vmatprep.mubr.f32.mxu0 0.0
  %2932 = vmatmul.mubr.f32.gmra.mxu0 %v2565
  %v2933 = vpop.f32.mrf.mxu0
  %v2934 = vadd.f32 %v2543, %v2933
  %v2935 = vpop.f32.mrf.mxu0
  %v2936 = vadd.f32 %v2543, %v2935
  %2937 = vmatprep.mubr.f32.mxu0 0.0
  %2938 = vmatmul.mubr.f32.gmra.mxu0 %v2568
  %v2939 = vpop.f32.mrf.mxu0
  %v2940 = vadd.f32 %v2548, %v2939
  %v2941 = vpop.f32.mrf.mxu0
  %v2942 = vadd.f32 %v2548, %v2941
  %2943 = vmatprep.mubr.f32.mxu0 0.0
  %2944 = vmatmul.mubr.f32.gmra.mxu0 %v2571
  %v2945 = vpop.f32.mrf.mxu0
  %v2946 = vadd.f32 %v2553, %v2945
  %v2947 = vpop.f32.mrf.mxu0
  %v2948 = vadd.f32 %v2553, %v2947
  %2949 = vmatprep.mubr.f32.mxu0 0.0
  %2950 = vmatmul.mubr.f32.gmra.mxu0 %v2574
  %v2951 = vpop.f32.mrf.mxu0
  %v2952 = vadd.f32 %v2558, %v2951
  %v2953 = vpop.f32.mrf.mxu0
  %v2954 = vadd.f32 %v2558, %v2953
  %2955 = vdwg.mxu0
  %2956 = vmatprep.subr.mxu0 0.0
  %2957 = vmatpush1.msra.mxu0 0.0
  %2958 = vmatprep.subr.mxu0 0.0
  %2959 = vmatpush1.msra.mxu0 0.0
  %2960 = vmatprep.subr.mxu0 0.0
  %2961 = vmatpush1.msra.mxu0 0.0
  %2962 = vmatprep.subr.mxu0 0.0
  %2963 = vmatpush1.msra.mxu0 0.0
  %2964 = vmatprep.subr.mxu0 0.0
  %2965 = vmatpush1.msra.mxu0 0.0
  %2966 = vmatprep.subr.mxu0 0.0
  %2967 = vmatpush1.msra.mxu0 0.0
  %2968 = vmatprep.subr.mxu0 %v2524
  %2969 = vmatpush1.msra.mxu0 %v2523
  %2970 = vmatprep.subr.mxu0 %v2514
  %2971 = vmatpush1.msra.mxu0 %v2513
  %2972 = vmatprep.subr.mxu0 %v2504
  %2973 = vmatpush1.msra.mxu0 %v2503
  %2974 = vmatprep.subr.mxu0 %v2494
  %2975 = vmatpush1.msra.mxu0 %v2493
  %2976 = vmatprep.subr.mxu0 %v2484
  %2977 = vmatpush1.msra.mxu0 %v2483
  %2978 = vmatprep.subr.mxu0 %v2474
  %2979 = vmatpush1.msra.mxu0 %v2473
  %2980 = vmatprep.subr.mxu0 %v2464
  %2981 = vmatpush1.msra.mxu0 %v2463
  %2982 = vmatprep.subr.mxu0 %v2454
  %2983 = vmatpush1.msra.mxu0 %v2453
  %2984 = vmatprep.subr.mxu0 %v2444
  %2985 = vmatpush1.msra.mxu0 %v2443
  %2986 = vmatprep.subr.mxu0 %v2434
  %2987 = vmatpush1.msra.mxu0 %v2433
  %2988 = vmatprep.subr.mxu0 0.0
  %2989 = vmatpush2.msra.mxu0 0.0
  %2990 = vmatprep.subr.mxu0 0.0
  %2991 = vmatpush2.msra.mxu0 0.0
  %2992 = vmatprep.subr.mxu0 0.0
  %2993 = vmatpush2.msra.mxu0 0.0
  %2994 = vmatprep.subr.mxu0 0.0
  %2995 = vmatpush2.msra.mxu0 0.0
  %2996 = vmatprep.subr.mxu0 0.0
  %2997 = vmatpush2.msra.mxu0 0.0
  %2998 = vmatprep.subr.mxu0 0.0
  %2999 = vmatpush2.msra.mxu0 0.0
  %3000 = vmatprep.subr.mxu0 0.0
  %3001 = vmatpush2.msra.mxu0 0.0
  %3002 = vmatprep.subr.mxu0 0.0
  %3003 = vmatpush2.msra.mxu0 0.0
  %3004 = vmatprep.subr.mxu0 0.0
  %3005 = vmatpush2.msra.mxu0 0.0
  %3006 = vmatprep.subr.mxu0 0.0
  %3007 = vmatpush2.msra.mxu0 0.0
  %3008 = vmatprep.subr.mxu0 0.0
  %3009 = vmatpush2.msra.mxu0 0.0
  %3010 = vmatprep.subr.mxu0 0.0
  %3011 = vmatpush2.msra.mxu0 0.0
  %3012 = vmatprep.subr.mxu0 0.0
  %3013 = vmatpush2.msra.mxu0 0.0
  %3014 = vmatprep.subr.mxu0 0.0
  %3015 = vmatpush2.msra.mxu0 0.0
  %3016 = vmatprep.subr.mxu0 0.0
  %3017 = vmatpush2.msra.mxu0 0.0
  %3018 = vmatprep.subr.mxu0 0.0
  %3019 = vmatpush2.msra.mxu0 0.0
  %3020 = vmatprep.mubr.f32.mxu0 0.0
  %3021 = vmatmul.mubr.f32.gmra.mxu0 %v2562
  %v3022 = vpop.f32.mrf.mxu0
  %v3023 = vadd.f32 %v2538, %v3022
  %v3024 = vpop.f32.mrf.mxu0
  %v3025 = vadd.f32 %v2538, %v3024
  %3026 = vmatprep.mubr.f32.mxu0 0.0
  %3027 = vmatmul.mubr.f32.gmra.mxu0 %v2565
  %v3028 = vpop.f32.mrf.mxu0
  %v3029 = vadd.f32 %v2543, %v3028
  %v3030 = vpop.f32.mrf.mxu0
  %v3031 = vadd.f32 %v2543, %v3030
  %3032 = vmatprep.mubr.f32.mxu0 0.0
  %3033 = vmatmul.mubr.f32.gmra.mxu0 %v2568
  %v3034 = vpop.f32.mrf.mxu0
  %v3035 = vadd.f32 %v2548, %v3034
  %v3036 = vpop.f32.mrf.mxu0
  %v3037 = vadd.f32 %v2548, %v3036
  %3038 = vmatprep.mubr.f32.mxu0 0.0
  %3039 = vmatmul.mubr.f32.gmra.mxu0 %v2571
  %v3040 = vpop.f32.mrf.mxu0
  %v3041 = vadd.f32 %v2553, %v3040
  %v3042 = vpop.f32.mrf.mxu0
  %v3043 = vadd.f32 %v2553, %v3042
  %3044 = vmatprep.mubr.f32.mxu0 0.0
  %3045 = vmatmul.mubr.f32.gmra.mxu0 %v2574
  %v3046 = vpop.f32.mrf.mxu0
  %v3047 = vadd.f32 %v2558, %v3046
  %v3048 = vpop.f32.mrf.mxu0
  %v3049 = vadd.f32 %v2558, %v3048
  %3050 = vdwg.mxu0
  %3101 = vrot.lane.b32.xlu0 %v2643, 127
  %v3102 = vpop.permute.xlu0 %3101
  %3103 = vrot.lane.b32.xlu0 %v2645, 127
  %v3104 = vpop.permute.xlu0 %3103
  %3105 = vrot.lane.b32.xlu0 %v2738, 127
  %v3106 = vpop.permute.xlu0 %3105
  %3107 = vrot.lane.b32.xlu0 %v2740, 127
  %v3108 = vpop.permute.xlu0 %3107
  %3109 = vrot.lane.b32.xlu0 %v2833, 127
  %v3110 = vpop.permute.xlu0 %3109
  %3111 = vrot.lane.b32.xlu0 %v2835, 127
  %v3112 = vpop.permute.xlu0 %3111
  %3113 = vrot.lane.b32.xlu0 %v2928, 127
  %v3114 = vpop.permute.xlu0 %3113
  %3115 = vrot.lane.b32.xlu0 %v2930, 127
  %v3116 = vpop.permute.xlu0 %3115
  %3117 = vrot.lane.b32.xlu0 %v3023, 127
  %v3118 = vpop.permute.xlu0 %3117
  %3119 = vrot.lane.b32.xlu0 %v3025, 127
  %v3120 = vpop.permute.xlu0 %3119
  %3121 = vrot.lane.b32.xlu0 %v2649, 127
  %v3122 = vpop.permute.xlu0 %3121
  %3123 = vrot.lane.b32.xlu0 %v2651, 127
  %v3124 = vpop.permute.xlu0 %3123
  %3125 = vrot.lane.b32.xlu0 %v2744, 127
  %v3126 = vpop.permute.xlu0 %3125
  %3127 = vrot.lane.b32.xlu0 %v2746, 127
  %v3128 = vpop.permute.xlu0 %3127
  %3129 = vrot.lane.b32.xlu0 %v2839, 127
  %v3130 = vpop.permute.xlu0 %3129
  %3131 = vrot.lane.b32.xlu0 %v2841, 127
  %v3132 = vpop.permute.xlu0 %3131
  %3133 = vrot.lane.b32.xlu0 %v2934, 127
  %v3134 = vpop.permute.xlu0 %3133
  %3135 = vrot.lane.b32.xlu0 %v2936, 127
  %v3136 = vpop.permute.xlu0 %3135
  %3137 = vrot.lane.b32.xlu0 %v3029, 127
  %v3138 = vpop.permute.xlu0 %3137
  %3139 = vrot.lane.b32.xlu0 %v3031, 127
  %v3140 = vpop.permute.xlu0 %3139
  %3141 = vrot.lane.b32.xlu0 %v2655, 127
  %v3142 = vpop.permute.xlu0 %3141
  %3143 = vrot.lane.b32.xlu0 %v2657, 127
  %v3144 = vpop.permute.xlu0 %3143
  %3145 = vrot.lane.b32.xlu0 %v2750, 127
  %v3146 = vpop.permute.xlu0 %3145
  %3147 = vrot.lane.b32.xlu0 %v2752, 127
  %v3148 = vpop.permute.xlu0 %3147
  %3149 = vrot.lane.b32.xlu0 %v2845, 127
  %v3150 = vpop.permute.xlu0 %3149
  %3151 = vrot.lane.b32.xlu0 %v2847, 127
  %v3152 = vpop.permute.xlu0 %3151
  %3153 = vrot.lane.b32.xlu0 %v2940, 127
  %v3154 = vpop.permute.xlu0 %3153
  %3155 = vrot.lane.b32.xlu0 %v2942, 127
  %v3156 = vpop.permute.xlu0 %3155
  %3157 = vrot.lane.b32.xlu0 %v3035, 127
  %v3158 = vpop.permute.xlu0 %3157
  %3159 = vrot.lane.b32.xlu0 %v3037, 127
  %v3160 = vpop.permute.xlu0 %3159
  %3161 = vrot.lane.b32.xlu0 %v2661, 127
  %v3162 = vpop.permute.xlu0 %3161
  %3163 = vrot.lane.b32.xlu0 %v2663, 127
  %v3164 = vpop.permute.xlu0 %3163
  %3165 = vrot.lane.b32.xlu0 %v2756, 127
  %v3166 = vpop.permute.xlu0 %3165
  %3167 = vrot.lane.b32.xlu0 %v2758, 127
  %v3168 = vpop.permute.xlu0 %3167
  %3169 = vrot.lane.b32.xlu0 %v2851, 127
  %v3170 = vpop.permute.xlu0 %3169
  %3171 = vrot.lane.b32.xlu0 %v2853, 127
  %v3172 = vpop.permute.xlu0 %3171
  %3173 = vrot.lane.b32.xlu0 %v2946, 127
  %v3174 = vpop.permute.xlu0 %3173
  %3175 = vrot.lane.b32.xlu0 %v2948, 127
  %v3176 = vpop.permute.xlu0 %3175
  %3177 = vrot.lane.b32.xlu0 %v3041, 127
  %v3178 = vpop.permute.xlu0 %3177
  %3179 = vrot.lane.b32.xlu0 %v3043, 127
  %v3180 = vpop.permute.xlu0 %3179
  %3181 = vrot.lane.b32.xlu0 %v2667, 127
  %v3182 = vpop.permute.xlu0 %3181
  %3183 = vrot.lane.b32.xlu0 %v2669, 127
  %v3184 = vpop.permute.xlu0 %3183
  %3185 = vrot.lane.b32.xlu0 %v2762, 127
  %v3186 = vpop.permute.xlu0 %3185
  %3187 = vrot.lane.b32.xlu0 %v2764, 127
  %v3188 = vpop.permute.xlu0 %3187
  %3189 = vrot.lane.b32.xlu0 %v2857, 127
  %v3190 = vpop.permute.xlu0 %3189
  %3191 = vrot.lane.b32.xlu0 %v2859, 127
  %v3192 = vpop.permute.xlu0 %3191
  %3193 = vrot.lane.b32.xlu0 %v2952, 127
  %v3194 = vpop.permute.xlu0 %3193
  %3195 = vrot.lane.b32.xlu0 %v2954, 127
  %v3196 = vpop.permute.xlu0 %3195
  %3197 = vrot.lane.b32.xlu0 %v3047, 127
  %v3198 = vpop.permute.xlu0 %3197
  %3199 = vrot.lane.b32.xlu0 %v3049, 127
  %v3200 = vpop.permute.xlu0 %3199
  %vm3201 = vcmask 1039360
  %v3202 = vsel %vm3201, %v3102, %v3104
  %v3203 = vsel %vm3201, %v3104, %v3106
  %v3204 = vsel %vm3201, %v3106, %v3108
  %v3205 = vsel %vm3201, %v3108, %v3110
  %v3206 = vsel %vm3201, %v3110, %v3112
  %v3207 = vsel %vm3201, %v3112, %v3114
  %v3208 = vsel %vm3201, %v3114, %v3116
  %v3209 = vsel %vm3201, %v3116, %v3118
  %v3210 = vsel %vm3201, %v3118, %v3120
  %v3211 = vsel %vm3201, %v3122, %v3124
  %v3212 = vsel %vm3201, %v3124, %v3126
  %v3213 = vsel %vm3201, %v3126, %v3128
  %v3214 = vsel %vm3201, %v3128, %v3130
  %v3215 = vsel %vm3201, %v3130, %v3132
  %v3216 = vsel %vm3201, %v3132, %v3134
  %v3217 = vsel %vm3201, %v3134, %v3136
  %v3218 = vsel %vm3201, %v3136, %v3138
  %v3219 = vsel %vm3201, %v3138, %v3140
  %v3220 = vsel %vm3201, %v3142, %v3144
  %v3221 = vsel %vm3201, %v3144, %v3146
  %v3222 = vsel %vm3201, %v3146, %v3148
  %v3223 = vsel %vm3201, %v3148, %v3150
  %v3224 = vsel %vm3201, %v3150, %v3152
  %v3225 = vsel %vm3201, %v3152, %v3154
  %v3226 = vsel %vm3201, %v3154, %v3156
  %v3227 = vsel %vm3201, %v3156, %v3158
  %v3228 = vsel %vm3201, %v3158, %v3160
  %v3229 = vsel %vm3201, %v3162, %v3164
  %v3230 = vsel %vm3201, %v3164, %v3166
  %v3231 = vsel %vm3201, %v3166, %v3168
  %v3232 = vsel %vm3201, %v3168, %v3170
  %v3233 = vsel %vm3201, %v3170, %v3172
  %v3234 = vsel %vm3201, %v3172, %v3174
  %v3235 = vsel %vm3201, %v3174, %v3176
  %v3236 = vsel %vm3201, %v3176, %v3178
  %v3237 = vsel %vm3201, %v3178, %v3180
  %v3238 = vsel %vm3201, %v3182, %v3184
  %v3239 = vsel %vm3201, %v3184, %v3186
  %v3240 = vsel %vm3201, %v3186, %v3188
  %v3241 = vsel %vm3201, %v3188, %v3190
  %v3242 = vsel %vm3201, %v3190, %v3192
  %v3243 = vsel %vm3201, %v3192, %v3194
  %v3244 = vsel %vm3201, %v3194, %v3196
  %v3245 = vsel %vm3201, %v3196, %v3198
  %v3246 = vsel %vm3201, %v3198, %v3200
  %v3297 = vmax.f32 %v2643, %v3202
  %v3298 = vmax.f32 %v2645, %v3203
  %v3299 = vmax.f32 %v2738, %v3204
  %v3300 = vmax.f32 %v2740, %v3205
  %v3301 = vmax.f32 %v2833, %v3206
  %v3302 = vmax.f32 %v2835, %v3207
  %v3303 = vmax.f32 %v2928, %v3208
  %v3304 = vmax.f32 %v2930, %v3209
  %v3305 = vmax.f32 %v3023, %v3210
  %v3306 = vmax.f32 %v3025, %v3120
  %v3307 = vmax.f32 %v2649, %v3211
  %v3308 = vmax.f32 %v2651, %v3212
  %v3309 = vmax.f32 %v2744, %v3213
  %v3310 = vmax.f32 %v2746, %v3214
  %v3311 = vmax.f32 %v2839, %v3215
  %v3312 = vmax.f32 %v2841, %v3216
  %v3313 = vmax.f32 %v2934, %v3217
  %v3314 = vmax.f32 %v2936, %v3218
  %v3315 = vmax.f32 %v3029, %v3219
  %v3316 = vmax.f32 %v3031, %v3140
  %v3317 = vmax.f32 %v2655, %v3220
  %v3318 = vmax.f32 %v2657, %v3221
  %v3319 = vmax.f32 %v2750, %v3222
  %v3320 = vmax.f32 %v2752, %v3223
  %v3321 = vmax.f32 %v2845, %v3224
  %v3322 = vmax.f32 %v2847, %v3225
  %v3323 = vmax.f32 %v2940, %v3226
  %v3324 = vmax.f32 %v2942, %v3227
  %v3325 = vmax.f32 %v3035, %v3228
  %v3326 = vmax.f32 %v3037, %v3160
  %v3327 = vmax.f32 %v2661, %v3229
  %v3328 = vmax.f32 %v2663, %v3230
  %v3329 = vmax.f32 %v2756, %v3231
  %v3330 = vmax.f32 %v2758, %v3232
  %v3331 = vmax.f32 %v2851, %v3233
  %v3332 = vmax.f32 %v2853, %v3234
  %v3333 = vmax.f32 %v2946, %v3235
  %v3334 = vmax.f32 %v2948, %v3236
  %v3335 = vmax.f32 %v3041, %v3237
  %v3336 = vmax.f32 %v3043, %v3180
  %v3337 = vmax.f32 %v2667, %v3238
  %v3338 = vmax.f32 %v2669, %v3239
  %v3339 = vmax.f32 %v2762, %v3240
  %v3340 = vmax.f32 %v2764, %v3241
  %v3341 = vmax.f32 %v2857, %v3242
  %v3342 = vmax.f32 %v2859, %v3243
  %v3343 = vmax.f32 %v2952, %v3244
  %v3344 = vmax.f32 %v2954, %v3245
  %v3345 = vmax.f32 %v3047, %v3246
  %v3346 = vmax.f32 %v3049, %v3200
  %3347 = vrot.lane.b32.xlu0 %v2643, 126
  %v3348 = vpop.permute.xlu0 %3347
  %3349 = vrot.lane.b32.xlu0 %v2645, 126
  %v3350 = vpop.permute.xlu0 %3349
  %3351 = vrot.lane.b32.xlu0 %v2738, 126
  %v3352 = vpop.permute.xlu0 %3351
  %3353 = vrot.lane.b32.xlu0 %v2740, 126
  %v3354 = vpop.permute.xlu0 %3353
  %3355 = vrot.lane.b32.xlu0 %v2833, 126
  %v3356 = vpop.permute.xlu0 %3355
  %3357 = vrot.lane.b32.xlu0 %v2835, 126
  %v3358 = vpop.permute.xlu0 %3357
  %3359 = vrot.lane.b32.xlu0 %v2928, 126
  %v3360 = vpop.permute.xlu0 %3359
  %3361 = vrot.lane.b32.xlu0 %v2930, 126
  %v3362 = vpop.permute.xlu0 %3361
  %3363 = vrot.lane.b32.xlu0 %v3023, 126
  %v3364 = vpop.permute.xlu0 %3363
  %3365 = vrot.lane.b32.xlu0 %v3025, 126
  %v3366 = vpop.permute.xlu0 %3365
  %3367 = vrot.lane.b32.xlu0 %v2649, 126
  %v3368 = vpop.permute.xlu0 %3367
  %3369 = vrot.lane.b32.xlu0 %v2651, 126
  %v3370 = vpop.permute.xlu0 %3369
  %3371 = vrot.lane.b32.xlu0 %v2744, 126
  %v3372 = vpop.permute.xlu0 %3371
  %3373 = vrot.lane.b32.xlu0 %v2746, 126
  %v3374 = vpop.permute.xlu0 %3373
  %3375 = vrot.lane.b32.xlu0 %v2839, 126
  %v3376 = vpop.permute.xlu0 %3375
  %3377 = vrot.lane.b32.xlu0 %v2841, 126
  %v3378 = vpop.permute.xlu0 %3377
  %3379 = vrot.lane.b32.xlu0 %v2934, 126
  %v3380 = vpop.permute.xlu0 %3379
  %3381 = vrot.lane.b32.xlu0 %v2936, 126
  %v3382 = vpop.permute.xlu0 %3381
  %3383 = vrot.lane.b32.xlu0 %v3029, 126
  %v3384 = vpop.permute.xlu0 %3383
  %3385 = vrot.lane.b32.xlu0 %v3031, 126
  %v3386 = vpop.permute.xlu0 %3385
  %3387 = vrot.lane.b32.xlu0 %v2655, 126
  %v3388 = vpop.permute.xlu0 %3387
  %3389 = vrot.lane.b32.xlu0 %v2657, 126
  %v3390 = vpop.permute.xlu0 %3389
  %3391 = vrot.lane.b32.xlu0 %v2750, 126
  %v3392 = vpop.permute.xlu0 %3391
  %3393 = vrot.lane.b32.xlu0 %v2752, 126
  %v3394 = vpop.permute.xlu0 %3393
  %3395 = vrot.lane.b32.xlu0 %v2845, 126
  %v3396 = vpop.permute.xlu0 %3395
  %3397 = vrot.lane.b32.xlu0 %v2847, 126
  %v3398 = vpop.permute.xlu0 %3397
  %3399 = vrot.lane.b32.xlu0 %v2940, 126
  %v3400 = vpop.permute.xlu0 %3399
  %3401 = vrot.lane.b32.xlu0 %v2942, 126
  %v3402 = vpop.permute.xlu0 %3401
  %3403 = vrot.lane.b32.xlu0 %v3035, 126
  %v3404 = vpop.permute.xlu0 %3403
  %3405 = vrot.lane.b32.xlu0 %v3037, 126
  %v3406 = vpop.permute.xlu0 %3405
  %3407 = vrot.lane.b32.xlu0 %v2661, 126
  %v3408 = vpop.permute.xlu0 %3407
  %3409 = vrot.lane.b32.xlu0 %v2663, 126
  %v3410 = vpop.permute.xlu0 %3409
  %3411 = vrot.lane.b32.xlu0 %v2756, 126
  %v3412 = vpop.permute.xlu0 %3411
  %3413 = vrot.lane.b32.xlu0 %v2758, 126
  %v3414 = vpop.permute.xlu0 %3413
  %3415 = vrot.lane.b32.xlu0 %v2851, 126
  %v3416 = vpop.permute.xlu0 %3415
  %3417 = vrot.lane.b32.xlu0 %v2853, 126
  %v3418 = vpop.permute.xlu0 %3417
  %3419 = vrot.lane.b32.xlu0 %v2946, 126
  %v3420 = vpop.permute.xlu0 %3419
  %3421 = vrot.lane.b32.xlu0 %v2948, 126
  %v3422 = vpop.permute.xlu0 %3421
  %3423 = vrot.lane.b32.xlu0 %v3041, 126
  %v3424 = vpop.permute.xlu0 %3423
  %3425 = vrot.lane.b32.xlu0 %v3043, 126
  %v3426 = vpop.permute.xlu0 %3425
  %3427 = vrot.lane.b32.xlu0 %v2667, 126
  %v3428 = vpop.permute.xlu0 %3427
  %3429 = vrot.lane.b32.xlu0 %v2669, 126
  %v3430 = vpop.permute.xlu0 %3429
  %3431 = vrot.lane.b32.xlu0 %v2762, 126
  %v3432 = vpop.permute.xlu0 %3431
  %3433 = vrot.lane.b32.xlu0 %v2764, 126
  %v3434 = vpop.permute.xlu0 %3433
  %3435 = vrot.lane.b32.xlu0 %v2857, 126
  %v3436 = vpop.permute.xlu0 %3435
  %3437 = vrot.lane.b32.xlu0 %v2859, 126
  %v3438 = vpop.permute.xlu0 %3437
  %3439 = vrot.lane.b32.xlu0 %v2952, 126
  %v3440 = vpop.permute.xlu0 %3439
  %3441 = vrot.lane.b32.xlu0 %v2954, 126
  %v3442 = vpop.permute.xlu0 %3441
  %3443 = vrot.lane.b32.xlu0 %v3047, 126
  %v3444 = vpop.permute.xlu0 %3443
  %3445 = vrot.lane.b32.xlu0 %v3049, 126
  %v3446 = vpop.permute.xlu0 %3445
  %vm3447 = vcmask 1031168
  %v3448 = vsel %vm3447, %v3348, %v3350
  %v3449 = vsel %vm3447, %v3350, %v3352
  %v3450 = vsel %vm3447, %v3352, %v3354
  %v3451 = vsel %vm3447, %v3354, %v3356
  %v3452 = vsel %vm3447, %v3356, %v3358
  %v3453 = vsel %vm3447, %v3358, %v3360
  %v3454 = vsel %vm3447, %v3360, %v3362
  %v3455 = vsel %vm3447, %v3362, %v3364
  %v3456 = vsel %vm3447, %v3364, %v3366
  %v3457 = vsel %vm3447, %v3368, %v3370
  %v3458 = vsel %vm3447, %v3370, %v3372
  %v3459 = vsel %vm3447, %v3372, %v3374
  %v3460 = vsel %vm3447, %v3374, %v3376
  %v3461 = vsel %vm3447, %v3376, %v3378
  %v3462 = vsel %vm3447, %v3378, %v3380
  %v3463 = vsel %vm3447, %v3380, %v3382
  %v3464 = vsel %vm3447, %v3382, %v3384
  %v3465 = vsel %vm3447, %v3384, %v3386
  %v3466 = vsel %vm3447, %v3388, %v3390
  %v3467 = vsel %vm3447, %v3390, %v3392
  %v3468 = vsel %vm3447, %v3392, %v3394
  %v3469 = vsel %vm3447, %v3394, %v3396
  %v3470 = vsel %vm3447, %v3396, %v3398
  %v3471 = vsel %vm3447, %v3398, %v3400
  %v3472 = vsel %vm3447, %v3400, %v3402
  %v3473 = vsel %vm3447, %v3402, %v3404
  %v3474 = vsel %vm3447, %v3404, %v3406
  %v3475 = vsel %vm3447, %v3408, %v3410
  %v3476 = vsel %vm3447, %v3410, %v3412
  %v3477 = vsel %vm3447, %v3412, %v3414
  %v3478 = vsel %vm3447, %v3414, %v3416
  %v3479 = vsel %vm3447, %v3416, %v3418
  %v3480 = vsel %vm3447, %v3418, %v3420
  %v3481 = vsel %vm3447, %v3420, %v3422
  %v3482 = vsel %vm3447, %v3422, %v3424
  %v3483 = vsel %vm3447, %v3424, %v3426
  %v3484 = vsel %vm3447, %v3428, %v3430
  %v3485 = vsel %vm3447, %v3430, %v3432
  %v3486 = vsel %vm3447, %v3432, %v3434
  %v3487 = vsel %vm3447, %v3434, %v3436
  %v3488 = vsel %vm3447, %v3436, %v3438
  %v3489 = vsel %vm3447, %v3438, %v3440
  %v3490 = vsel %vm3447, %v3440, %v3442
  %v3491 = vsel %vm3447, %v3442, %v3444
  %v3492 = vsel %vm3447, %v3444, %v3446
  %v3543 = vmax.f32 %v3297, %v3448
  %v3544 = vmax.f32 %v3298, %v3449
  %v3545 = vmax.f32 %v3299, %v3450
  %v3546 = vmax.f32 %v3300, %v3451
  %v3547 = vmax.f32 %v3301, %v3452
  %v3548 = vmax.f32 %v3302, %v3453
  %v3549 = vmax.f32 %v3303, %v3454
  %v3550 = vmax.f32 %v3304, %v3455
  %v3551 = vmax.f32 %v3305, %v3456
  %v3552 = vmax.f32 %v3306, %v3366
  %v3553 = vmax.f32 %v3307, %v3457
  %v3554 = vmax.f32 %v3308, %v3458
  %v3555 = vmax.f32 %v3309, %v3459
  %v3556 = vmax.f32 %v3310, %v3460
  %v3557 = vmax.f32 %v3311, %v3461
  %v3558 = vmax.f32 %v3312, %v3462
  %v3559 = vmax.f32 %v3313, %v3463
  %v3560 = vmax.f32 %v3314, %v3464
  %v3561 = vmax.f32 %v3315, %v3465
  %v3562 = vmax.f32 %v3316, %v3386
  %v3563 = vmax.f32 %v3317, %v3466
  %v3564 = vmax.f32 %v3318, %v3467
  %v3565 = vmax.f32 %v3319, %v3468
  %v3566 = vmax.f32 %v3320, %v3469
  %v3567 = vmax.f32 %v3321, %v3470
  %v3568 = vmax.f32 %v3322, %v3471
  %v3569 = vmax.f32 %v3323, %v3472
  %v3570 = vmax.f32 %v3324, %v3473
  %v3571 = vmax.f32 %v3325, %v3474
  %v3572 = vmax.f32 %v3326, %v3406
  %v3573 = vmax.f32 %v3327, %v3475
  %v3574 = vmax.f32 %v3328, %v3476
  %v3575 = vmax.f32 %v3329, %v3477
  %v3576 = vmax.f32 %v3330, %v3478
  %v3577 = vmax.f32 %v3331, %v3479
  %v3578 = vmax.f32 %v3332, %v3480
  %v3579 = vmax.f32 %v3333, %v3481
  %v3580 = vmax.f32 %v3334, %v3482
  %v3581 = vmax.f32 %v3335, %v3483
  %v3582 = vmax.f32 %v3336, %v3426
  %v3583 = vmax.f32 %v3337, %v3484
  %v3584 = vmax.f32 %v3338, %v3485
  %v3585 = vmax.f32 %v3339, %v3486
  %v3586 = vmax.f32 %v3340, %v3487
  %v3587 = vmax.f32 %v3341, %v3488
  %v3588 = vmax.f32 %v3342, %v3489
  %v3589 = vmax.f32 %v3343, %v3490
  %v3590 = vmax.f32 %v3344, %v3491
  %v3591 = vmax.f32 %v3345, %v3492
  %v3592 = vmax.f32 %v3346, %v3446
  %3593 = vrot.lane.b32.xlu0 %v2643, 125
  %v3594 = vpop.permute.xlu0 %3593
  %3595 = vrot.lane.b32.xlu0 %v2645, 125
  %v3596 = vpop.permute.xlu0 %3595
  %3597 = vrot.lane.b32.xlu0 %v2738, 125
  %v3598 = vpop.permute.xlu0 %3597
  %3599 = vrot.lane.b32.xlu0 %v2740, 125
  %v3600 = vpop.permute.xlu0 %3599
  %3601 = vrot.lane.b32.xlu0 %v2833, 125
  %v3602 = vpop.permute.xlu0 %3601
  %3603 = vrot.lane.b32.xlu0 %v2835, 125
  %v3604 = vpop.permute.xlu0 %3603
  %3605 = vrot.lane.b32.xlu0 %v2928, 125
  %v3606 = vpop.permute.xlu0 %3605
  %3607 = vrot.lane.b32.xlu0 %v2930, 125
  %v3608 = vpop.permute.xlu0 %3607
  %3609 = vrot.lane.b32.xlu0 %v3023, 125
  %v3610 = vpop.permute.xlu0 %3609
  %3611 = vrot.lane.b32.xlu0 %v3025, 125
  %v3612 = vpop.permute.xlu0 %3611
  %3613 = vrot.lane.b32.xlu0 %v2649, 125
  %v3614 = vpop.permute.xlu0 %3613
  %3615 = vrot.lane.b32.xlu0 %v2651, 125
  %v3616 = vpop.permute.xlu0 %3615
  %3617 = vrot.lane.b32.xlu0 %v2744, 125
  %v3618 = vpop.permute.xlu0 %3617
  %3619 = vrot.lane.b32.xlu0 %v2746, 125
  %v3620 = vpop.permute.xlu0 %3619
  %3621 = vrot.lane.b32.xlu0 %v2839, 125
  %v3622 = vpop.permute.xlu0 %3621
  %3623 = vrot.lane.b32.xlu0 %v2841, 125
  %v3624 = vpop.permute.xlu0 %3623
  %3625 = vrot.lane.b32.xlu0 %v2934, 125
  %v3626 = vpop.permute.xlu0 %3625
  %3627 = vrot.lane.b32.xlu0 %v2936, 125
  %v3628 = vpop.permute.xlu0 %3627
  %3629 = vrot.lane.b32.xlu0 %v3029, 125
  %v3630 = vpop.permute.xlu0 %3629
  %3631 = vrot.lane.b32.xlu0 %v3031, 125
  %v3632 = vpop.permute.xlu0 %3631
  %3633 = vrot.lane.b32.xlu0 %v2655, 125
  %v3634 = vpop.permute.xlu0 %3633
  %3635 = vrot.lane.b32.xlu0 %v2657, 125
  %v3636 = vpop.permute.xlu0 %3635
  %3637 = vrot.lane.b32.xlu0 %v2750, 125
  %v3638 = vpop.permute.xlu0 %3637
  %3639 = vrot.lane.b32.xlu0 %v2752, 125
  %v3640 = vpop.permute.xlu0 %3639
  %3641 = vrot.lane.b32.xlu0 %v2845, 125
  %v3642 = vpop.permute.xlu0 %3641
  %3643 = vrot.lane.b32.xlu0 %v2847, 125
  %v3644 = vpop.permute.xlu0 %3643
  %3645 = vrot.lane.b32.xlu0 %v2940, 125
  %v3646 = vpop.permute.xlu0 %3645
  %3647 = vrot.lane.b32.xlu0 %v2942, 125
  %v3648 = vpop.permute.xlu0 %3647
  %3649 = vrot.lane.b32.xlu0 %v3035, 125
  %v3650 = vpop.permute.xlu0 %3649
  %3651 = vrot.lane.b32.xlu0 %v3037, 125
  %v3652 = vpop.permute.xlu0 %3651
  %3653 = vrot.lane.b32.xlu0 %v2661, 125
  %v3654 = vpop.permute.xlu0 %3653
  %3655 = vrot.lane.b32.xlu0 %v2663, 125
  %v3656 = vpop.permute.xlu0 %3655
  %3657 = vrot.lane.b32.xlu0 %v2756, 125
  %v3658 = vpop.permute.xlu0 %3657
  %3659 = vrot.lane.b32.xlu0 %v2758, 125
  %v3660 = vpop.permute.xlu0 %3659
  %3661 = vrot.lane.b32.xlu0 %v2851, 125
  %v3662 = vpop.permute.xlu0 %3661
  %3663 = vrot.lane.b32.xlu0 %v2853, 125
  %v3664 = vpop.permute.xlu0 %3663
  %3665 = vrot.lane.b32.xlu0 %v2946, 125
  %v3666 = vpop.permute.xlu0 %3665
  %3667 = vrot.lane.b32.xlu0 %v2948, 125
  %v3668 = vpop.permute.xlu0 %3667
  %3669 = vrot.lane.b32.xlu0 %v3041, 125
  %v3670 = vpop.permute.xlu0 %3669
  %3671 = vrot.lane.b32.xlu0 %v3043, 125
  %v3672 = vpop.permute.xlu0 %3671
  %3673 = vrot.lane.b32.xlu0 %v2667, 125
  %v3674 = vpop.permute.xlu0 %3673
  %3675 = vrot.lane.b32.xlu0 %v2669, 125
  %v3676 = vpop.permute.xlu0 %3675
  %3677 = vrot.lane.b32.xlu0 %v2762, 125
  %v3678 = vpop.permute.xlu0 %3677
  %3679 = vrot.lane.b32.xlu0 %v2764, 125
  %v3680 = vpop.permute.xlu0 %3679
  %3681 = vrot.lane.b32.xlu0 %v2857, 125
  %v3682 = vpop.permute.xlu0 %3681
  %3683 = vrot.lane.b32.xlu0 %v2859, 125
  %v3684 = vpop.permute.xlu0 %3683
  %3685 = vrot.lane.b32.xlu0 %v2952, 125
  %v3686 = vpop.permute.xlu0 %3685
  %3687 = vrot.lane.b32.xlu0 %v2954, 125
  %v3688 = vpop.permute.xlu0 %3687
  %3689 = vrot.lane.b32.xlu0 %v3047, 125
  %v3690 = vpop.permute.xlu0 %3689
  %3691 = vrot.lane.b32.xlu0 %v3049, 125
  %v3692 = vpop.permute.xlu0 %3691
  %vm3693 = vcmask 1022976
  %v3694 = vsel %vm3693, %v3594, %v3596
  %v3695 = vsel %vm3693, %v3596, %v3598
  %v3696 = vsel %vm3693, %v3598, %v3600
  %v3697 = vsel %vm3693, %v3600, %v3602
  %v3698 = vsel %vm3693, %v3602, %v3604
  %v3699 = vsel %vm3693, %v3604, %v3606
  %v3700 = vsel %vm3693, %v3606, %v3608
  %v3701 = vsel %vm3693, %v3608, %v3610
  %v3702 = vsel %vm3693, %v3610, %v3612
  %v3703 = vsel %vm3693, %v3614, %v3616
  %v3704 = vsel %vm3693, %v3616, %v3618
  %v3705 = vsel %vm3693, %v3618, %v3620
  %v3706 = vsel %vm3693, %v3620, %v3622
  %v3707 = vsel %vm3693, %v3622, %v3624
  %v3708 = vsel %vm3693, %v3624, %v3626
  %v3709 = vsel %vm3693, %v3626, %v3628
  %v3710 = vsel %vm3693, %v3628, %v3630
  %v3711 = vsel %vm3693, %v3630, %v3632
  %v3712 = vsel %vm3693, %v3634, %v3636
  %v3713 = vsel %vm3693, %v3636, %v3638
  %v3714 = vsel %vm3693, %v3638, %v3640
  %v3715 = vsel %vm3693, %v3640, %v3642
  %v3716 = vsel %vm3693, %v3642, %v3644
  %v3717 = vsel %vm3693, %v3644, %v3646
  %v3718 = vsel %vm3693, %v3646, %v3648
  %v3719 = vsel %vm3693, %v3648, %v3650
  %v3720 = vsel %vm3693, %v3650, %v3652
  %v3721 = vsel %vm3693, %v3654, %v3656
  %v3722 = vsel %vm3693, %v3656, %v3658
  %v3723 = vsel %vm3693, %v3658, %v3660
  %v3724 = vsel %vm3693, %v3660, %v3662
  %v3725 = vsel %vm3693, %v3662, %v3664
  %v3726 = vsel %vm3693, %v3664, %v3666
  %v3727 = vsel %vm3693, %v3666, %v3668
  %v3728 = vsel %vm3693, %v3668, %v3670
  %v3729 = vsel %vm3693, %v3670, %v3672
  %v3730 = vsel %vm3693, %v3674, %v3676
  %v3731 = vsel %vm3693, %v3676, %v3678
  %v3732 = vsel %vm3693, %v3678, %v3680
  %v3733 = vsel %vm3693, %v3680, %v3682
  %v3734 = vsel %vm3693, %v3682, %v3684
  %v3735 = vsel %vm3693, %v3684, %v3686
  %v3736 = vsel %vm3693, %v3686, %v3688
  %v3737 = vsel %vm3693, %v3688, %v3690
  %v3738 = vsel %vm3693, %v3690, %v3692
  %v3789 = vmax.f32 %v3543, %v3694
  %v3790 = vmax.f32 %v3544, %v3695
  %v3791 = vmax.f32 %v3545, %v3696
  %v3792 = vmax.f32 %v3546, %v3697
  %v3793 = vmax.f32 %v3547, %v3698
  %v3794 = vmax.f32 %v3548, %v3699
  %v3795 = vmax.f32 %v3549, %v3700
  %v3796 = vmax.f32 %v3550, %v3701
  %v3797 = vmax.f32 %v3551, %v3702
  %v3798 = vmax.f32 %v3552, %v3612
  %v3799 = vmax.f32 %v3553, %v3703
  %v3800 = vmax.f32 %v3554, %v3704
  %v3801 = vmax.f32 %v3555, %v3705
  %v3802 = vmax.f32 %v3556, %v3706
  %v3803 = vmax.f32 %v3557, %v3707
  %v3804 = vmax.f32 %v3558, %v3708
  %v3805 = vmax.f32 %v3559, %v3709
  %v3806 = vmax.f32 %v3560, %v3710
  %v3807 = vmax.f32 %v3561, %v3711
  %v3808 = vmax.f32 %v3562, %v3632
  %v3809 = vmax.f32 %v3563, %v3712
  %v3810 = vmax.f32 %v3564, %v3713
  %v3811 = vmax.f32 %v3565, %v3714
  %v3812 = vmax.f32 %v3566, %v3715
  %v3813 = vmax.f32 %v3567, %v3716
  %v3814 = vmax.f32 %v3568, %v3717
  %v3815 = vmax.f32 %v3569, %v3718
  %v3816 = vmax.f32 %v3570, %v3719
  %v3817 = vmax.f32 %v3571, %v3720
  %v3818 = vmax.f32 %v3572, %v3652
  %v3819 = vmax.f32 %v3573, %v3721
  %v3820 = vmax.f32 %v3574, %v3722
  %v3821 = vmax.f32 %v3575, %v3723
  %v3822 = vmax.f32 %v3576, %v3724
  %v3823 = vmax.f32 %v3577, %v3725
  %v3824 = vmax.f32 %v3578, %v3726
  %v3825 = vmax.f32 %v3579, %v3727
  %v3826 = vmax.f32 %v3580, %v3728
  %v3827 = vmax.f32 %v3581, %v3729
  %v3828 = vmax.f32 %v3582, %v3672
  %v3829 = vmax.f32 %v3583, %v3730
  %v3830 = vmax.f32 %v3584, %v3731
  %v3831 = vmax.f32 %v3585, %v3732
  %v3832 = vmax.f32 %v3586, %v3733
  %v3833 = vmax.f32 %v3587, %v3734
  %v3834 = vmax.f32 %v3588, %v3735
  %v3835 = vmax.f32 %v3589, %v3736
  %v3836 = vmax.f32 %v3590, %v3737
  %v3837 = vmax.f32 %v3591, %v3738
  %v3838 = vmax.f32 %v3592, %v3692
  %3839 = vrot.lane.b32.xlu0 %v2643, 124
  %v3840 = vpop.permute.xlu0 %3839
  %3841 = vrot.lane.b32.xlu0 %v2645, 124
  %v3842 = vpop.permute.xlu0 %3841
  %3843 = vrot.lane.b32.xlu0 %v2738, 124
  %v3844 = vpop.permute.xlu0 %3843
  %3845 = vrot.lane.b32.xlu0 %v2740, 124
  %v3846 = vpop.permute.xlu0 %3845
  %3847 = vrot.lane.b32.xlu0 %v2833, 124
  %v3848 = vpop.permute.xlu0 %3847
  %3849 = vrot.lane.b32.xlu0 %v2835, 124
  %v3850 = vpop.permute.xlu0 %3849
  %3851 = vrot.lane.b32.xlu0 %v2928, 124
  %v3852 = vpop.permute.xlu0 %3851
  %3853 = vrot.lane.b32.xlu0 %v2930, 124
  %v3854 = vpop.permute.xlu0 %3853
  %3855 = vrot.lane.b32.xlu0 %v3023, 124
  %v3856 = vpop.permute.xlu0 %3855
  %3857 = vrot.lane.b32.xlu0 %v3025, 124
  %v3858 = vpop.permute.xlu0 %3857
  %3859 = vrot.lane.b32.xlu0 %v2649, 124
  %v3860 = vpop.permute.xlu0 %3859
  %3861 = vrot.lane.b32.xlu0 %v2651, 124
  %v3862 = vpop.permute.xlu0 %3861
  %3863 = vrot.lane.b32.xlu0 %v2744, 124
  %v3864 = vpop.permute.xlu0 %3863
  %3865 = vrot.lane.b32.xlu0 %v2746, 124
  %v3866 = vpop.permute.xlu0 %3865
  %3867 = vrot.lane.b32.xlu0 %v2839, 124
  %v3868 = vpop.permute.xlu0 %3867
  %3869 = vrot.lane.b32.xlu0 %v2841, 124
  %v3870 = vpop.permute.xlu0 %3869
  %3871 = vrot.lane.b32.xlu0 %v2934, 124
  %v3872 = vpop.permute.xlu0 %3871
  %3873 = vrot.lane.b32.xlu0 %v2936, 124
  %v3874 = vpop.permute.xlu0 %3873
  %3875 = vrot.lane.b32.xlu0 %v3029, 124
  %v3876 = vpop.permute.xlu0 %3875
  %3877 = vrot.lane.b32.xlu0 %v3031, 124
  %v3878 = vpop.permute.xlu0 %3877
  %3879 = vrot.lane.b32.xlu0 %v2655, 124
  %v3880 = vpop.permute.xlu0 %3879
  %3881 = vrot.lane.b32.xlu0 %v2657, 124
  %v3882 = vpop.permute.xlu0 %3881
  %3883 = vrot.lane.b32.xlu0 %v2750, 124
  %v3884 = vpop.permute.xlu0 %3883
  %3885 = vrot.lane.b32.xlu0 %v2752, 124
  %v3886 = vpop.permute.xlu0 %3885
  %3887 = vrot.lane.b32.xlu0 %v2845, 124
  %v3888 = vpop.permute.xlu0 %3887
  %3889 = vrot.lane.b32.xlu0 %v2847, 124
  %v3890 = vpop.permute.xlu0 %3889
  %3891 = vrot.lane.b32.xlu0 %v2940, 124
  %v3892 = vpop.permute.xlu0 %3891
  %3893 = vrot.lane.b32.xlu0 %v2942, 124
  %v3894 = vpop.permute.xlu0 %3893
  %3895 = vrot.lane.b32.xlu0 %v3035, 124
  %v3896 = vpop.permute.xlu0 %3895
  %3897 = vrot.lane.b32.xlu0 %v3037, 124
  %v3898 = vpop.permute.xlu0 %3897
  %3899 = vrot.lane.b32.xlu0 %v2661, 124
  %v3900 = vpop.permute.xlu0 %3899
  %3901 = vrot.lane.b32.xlu0 %v2663, 124
  %v3902 = vpop.permute.xlu0 %3901
  %3903 = vrot.lane.b32.xlu0 %v2756, 124
  %v3904 = vpop.permute.xlu0 %3903
  %3905 = vrot.lane.b32.xlu0 %v2758, 124
  %v3906 = vpop.permute.xlu0 %3905
  %3907 = vrot.lane.b32.xlu0 %v2851, 124
  %v3908 = vpop.permute.xlu0 %3907
  %3909 = vrot.lane.b32.xlu0 %v2853, 124
  %v3910 = vpop.permute.xlu0 %3909
  %3911 = vrot.lane.b32.xlu0 %v2946, 124
  %v3912 = vpop.permute.xlu0 %3911
  %3913 = vrot.lane.b32.xlu0 %v2948, 124
  %v3914 = vpop.permute.xlu0 %3913
  %3915 = vrot.lane.b32.xlu0 %v3041, 124
  %v3916 = vpop.permute.xlu0 %3915
  %3917 = vrot.lane.b32.xlu0 %v3043, 124
  %v3918 = vpop.permute.xlu0 %3917
  %3919 = vrot.lane.b32.xlu0 %v2667, 124
  %v3920 = vpop.permute.xlu0 %3919
  %3921 = vrot.lane.b32.xlu0 %v2669, 124
  %v3922 = vpop.permute.xlu0 %3921
  %3923 = vrot.lane.b32.xlu0 %v2762, 124
  %v3924 = vpop.permute.xlu0 %3923
  %3925 = vrot.lane.b32.xlu0 %v2764, 124
  %v3926 = vpop.permute.xlu0 %3925
  %3927 = vrot.lane.b32.xlu0 %v2857, 124
  %v3928 = vpop.permute.xlu0 %3927
  %3929 = vrot.lane.b32.xlu0 %v2859, 124
  %v3930 = vpop.permute.xlu0 %3929
  %3931 = vrot.lane.b32.xlu0 %v2952, 124
  %v3932 = vpop.permute.xlu0 %3931
  %3933 = vrot.lane.b32.xlu0 %v2954, 124
  %v3934 = vpop.permute.xlu0 %3933
  %3935 = vrot.lane.b32.xlu0 %v3047, 124
  %v3936 = vpop.permute.xlu0 %3935
  %3937 = vrot.lane.b32.xlu0 %v3049, 124
  %v3938 = vpop.permute.xlu0 %3937
  %vm3939 = vcmask 1014784
  %v3940 = vsel %vm3939, %v3840, %v3842
  %v3941 = vsel %vm3939, %v3842, %v3844
  %v3942 = vsel %vm3939, %v3844, %v3846
  %v3943 = vsel %vm3939, %v3846, %v3848
  %v3944 = vsel %vm3939, %v3848, %v3850
  %v3945 = vsel %vm3939, %v3850, %v3852
  %v3946 = vsel %vm3939, %v3852, %v3854
  %v3947 = vsel %vm3939, %v3854, %v3856
  %v3948 = vsel %vm3939, %v3856, %v3858
  %v3949 = vsel %vm3939, %v3860, %v3862
  %v3950 = vsel %vm3939, %v3862, %v3864
  %v3951 = vsel %vm3939, %v3864, %v3866
  %v3952 = vsel %vm3939, %v3866, %v3868
  %v3953 = vsel %vm3939, %v3868, %v3870
  %v3954 = vsel %vm3939, %v3870, %v3872
  %v3955 = vsel %vm3939, %v3872, %v3874
  %v3956 = vsel %vm3939, %v3874, %v3876
  %v3957 = vsel %vm3939, %v3876, %v3878
  %v3958 = vsel %vm3939, %v3880, %v3882
  %v3959 = vsel %vm3939, %v3882, %v3884
  %v3960 = vsel %vm3939, %v3884, %v3886
  %v3961 = vsel %vm3939, %v3886, %v3888
  %v3962 = vsel %vm3939, %v3888, %v3890
  %v3963 = vsel %vm3939, %v3890, %v3892
  %v3964 = vsel %vm3939, %v3892, %v3894
  %v3965 = vsel %vm3939, %v3894, %v3896
  %v3966 = vsel %vm3939, %v3896, %v3898
  %v3967 = vsel %vm3939, %v3900, %v3902
  %v3968 = vsel %vm3939, %v3902, %v3904
  %v3969 = vsel %vm3939, %v3904, %v3906
  %v3970 = vsel %vm3939, %v3906, %v3908
  %v3971 = vsel %vm3939, %v3908, %v3910
  %v3972 = vsel %vm3939, %v3910, %v3912
  %v3973 = vsel %vm3939, %v3912, %v3914
  %v3974 = vsel %vm3939, %v3914, %v3916
  %v3975 = vsel %vm3939, %v3916, %v3918
  %v3976 = vsel %vm3939, %v3920, %v3922
  %v3977 = vsel %vm3939, %v3922, %v3924
  %v3978 = vsel %vm3939, %v3924, %v3926
  %v3979 = vsel %vm3939, %v3926, %v3928
  %v3980 = vsel %vm3939, %v3928, %v3930
  %v3981 = vsel %vm3939, %v3930, %v3932
  %v3982 = vsel %vm3939, %v3932, %v3934
  %v3983 = vsel %vm3939, %v3934, %v3936
  %v3984 = vsel %vm3939, %v3936, %v3938
  %v4035 = vmax.f32 %v3789, %v3940
  %v4036 = vmax.f32 %v3790, %v3941
  %v4037 = vmax.f32 %v3791, %v3942
  %v4038 = vmax.f32 %v3792, %v3943
  %v4039 = vmax.f32 %v3793, %v3944
  %v4040 = vmax.f32 %v3794, %v3945
  %v4041 = vmax.f32 %v3795, %v3946
  %v4042 = vmax.f32 %v3796, %v3947
  %v4043 = vmax.f32 %v3797, %v3948
  %v4044 = vmax.f32 %v3798, %v3858
  %v4045 = vmax.f32 %v3799, %v3949
  %v4046 = vmax.f32 %v3800, %v3950
  %v4047 = vmax.f32 %v3801, %v3951
  %v4048 = vmax.f32 %v3802, %v3952
  %v4049 = vmax.f32 %v3803, %v3953
  %v4050 = vmax.f32 %v3804, %v3954
  %v4051 = vmax.f32 %v3805, %v3955
  %v4052 = vmax.f32 %v3806, %v3956
  %v4053 = vmax.f32 %v3807, %v3957
  %v4054 = vmax.f32 %v3808, %v3878
  %v4055 = vmax.f32 %v3809, %v3958
  %v4056 = vmax.f32 %v3810, %v3959
  %v4057 = vmax.f32 %v3811, %v3960
  %v4058 = vmax.f32 %v3812, %v3961
  %v4059 = vmax.f32 %v3813, %v3962
  %v4060 = vmax.f32 %v3814, %v3963
  %v4061 = vmax.f32 %v3815, %v3964
  %v4062 = vmax.f32 %v3816, %v3965
  %v4063 = vmax.f32 %v3817, %v3966
  %v4064 = vmax.f32 %v3818, %v3898
  %v4065 = vmax.f32 %v3819, %v3967
  %v4066 = vmax.f32 %v3820, %v3968
  %v4067 = vmax.f32 %v3821, %v3969
  %v4068 = vmax.f32 %v3822, %v3970
  %v4069 = vmax.f32 %v3823, %v3971
  %v4070 = vmax.f32 %v3824, %v3972
  %v4071 = vmax.f32 %v3825, %v3973
  %v4072 = vmax.f32 %v3826, %v3974
  %v4073 = vmax.f32 %v3827, %v3975
  %v4074 = vmax.f32 %v3828, %v3918
  %v4075 = vmax.f32 %v3829, %v3976
  %v4076 = vmax.f32 %v3830, %v3977
  %v4077 = vmax.f32 %v3831, %v3978
  %v4078 = vmax.f32 %v3832, %v3979
  %v4079 = vmax.f32 %v3833, %v3980
  %v4080 = vmax.f32 %v3834, %v3981
  %v4081 = vmax.f32 %v3835, %v3982
  %v4082 = vmax.f32 %v3836, %v3983
  %v4083 = vmax.f32 %v3837, %v3984
  %v4084 = vmax.f32 %v3838, %v3938
  %v4085 = vld [vmem:[%s4] sm:$0x1]
  %vm4086 = vcmask 269312
  %v4088 = vsel %vm4086, %v4085, 0
  %vm4090 = vcmask 1040384
  %v4092 = vsel %vm4090, %v4075, 0
  %v4095 = vsel %vm4090, %v4076, 0
  %v4098 = vsel %vm4090, %v4077, 0
  %v4101 = vsel %vm4090, %v4078, 0
  %v4104 = vsel %vm4090, %v4079, 0
  %v4107 = vsel %vm4090, %v4080, 0
  %v4110 = vsel %vm4090, %v4081, 0
  %v4113 = vsel %vm4090, %v4082, 0
  %v4116 = vsel %vm4090, %v4083, 0
  %v4119 = vsel %vm4090, %v4084, 0
  %4121 = vmatprep.subr.mxu0 0.0
  %4122 = vmatpush1.msra.mxu0 0.0
  %4123 = vmatprep.subr.mxu0 0.0
  %4124 = vmatpush1.msra.mxu0 0.0
  %4125 = vmatprep.subr.mxu0 0.0
  %4126 = vmatpush1.msra.mxu0 0.0
  %4127 = vmatprep.subr.mxu0 0.0
  %4128 = vmatpush1.msra.mxu0 0.0
  %4129 = vmatprep.subr.mxu0 0.0
  %4130 = vmatpush1.msra.mxu0 0.0
  %4131 = vmatprep.subr.mxu0 0.0
  %4132 = vmatpush1.msra.mxu0 0.0
  %4133 = vmatprep.subr.mxu0 0.0
  %4134 = vmatpush1.msra.mxu0 0.0
  %4135 = vmatprep.subr.mxu0 0.0
  %4136 = vmatpush1.msra.mxu0 0.0
  %4137 = vmatprep.subr.mxu0 0.0
  %4138 = vmatpush1.msra.mxu0 0.0
  %4139 = vmatprep.subr.mxu0 0.0
  %4140 = vmatpush1.msra.mxu0 0.0
  %4141 = vmatprep.subr.mxu0 0.0
  %4142 = vmatpush1.msra.mxu0 0.0
  %4143 = vmatprep.subr.mxu0 %v4095
  %4144 = vmatpush1.msra.mxu0 %v4092
  %4145 = vmatprep.subr.mxu0 %v4066
  %4146 = vmatpush1.msra.mxu0 %v4065
  %4147 = vmatprep.subr.mxu0 %v4056
  %4148 = vmatpush1.msra.mxu0 %v4055
  %4149 = vmatprep.subr.mxu0 %v4046
  %4150 = vmatpush1.msra.mxu0 %v4045
  %4151 = vmatprep.subr.mxu0 %v4036
  %4152 = vmatpush1.msra.mxu0 %v4035
  %4153 = vmatprep.subr.mxu0 0.0
  %4154 = vmatpush2.msra.mxu0 0.0
  %4155 = vmatprep.subr.mxu0 0.0
  %4156 = vmatpush2.msra.mxu0 0.0
  %4157 = vmatprep.subr.mxu0 0.0
  %4158 = vmatpush2.msra.mxu0 0.0
  %4159 = vmatprep.subr.mxu0 0.0
  %4160 = vmatpush2.msra.mxu0 0.0
  %4161 = vmatprep.subr.mxu0 0.0
  %4162 = vmatpush2.msra.mxu0 0.0
  %4163 = vmatprep.subr.mxu0 0.0
  %4164 = vmatpush2.msra.mxu0 0.0
  %4165 = vmatprep.subr.mxu0 0.0
  %4166 = vmatpush2.msra.mxu0 0.0
  %4167 = vmatprep.subr.mxu0 0.0
  %4168 = vmatpush2.msra.mxu0 0.0
  %4169 = vmatprep.subr.mxu0 0.0
  %4170 = vmatpush2.msra.mxu0 0.0
  %4171 = vmatprep.subr.mxu0 0.0
  %4172 = vmatpush2.msra.mxu0 0.0
  %4173 = vmatprep.subr.mxu0 0.0
  %4174 = vmatpush2.msra.mxu0 0.0
  %4175 = vmatprep.subr.mxu0 0.0
  %4176 = vmatpush2.msra.mxu0 0.0
  %4177 = vmatprep.subr.mxu0 0.0
  %4178 = vmatpush2.msra.mxu0 0.0
  %4179 = vmatprep.subr.mxu0 0.0
  %4180 = vmatpush2.msra.mxu0 0.0
  %4181 = vmatprep.subr.mxu0 0.0
  %4182 = vmatpush2.msra.mxu0 0.0
  %4183 = vmatprep.subr.mxu0 0.0
  %4184 = vmatpush2.msra.mxu0 0.0
  %4185 = vmatprep.mubr.f32.mxu0 0.0
  %4186 = vmatmul.mubr.f32.gmra.mxu0 %v4088
  %v4187 = vpop.f32.mrf.mxu0
  %v4188 = vadd.f32 0.0, %v4187
  %v4189 = vpop.f32.mrf.mxu0
  %v4190 = vadd.f32 0.0, %v4189
  %4191 = vdwg.mxu0
  %4192 = vmatprep.subr.mxu0 0.0
  %4193 = vmatpush1.msra.mxu0 0.0
  %4194 = vmatprep.subr.mxu0 0.0
  %4195 = vmatpush1.msra.mxu0 0.0
  %4196 = vmatprep.subr.mxu0 0.0
  %4197 = vmatpush1.msra.mxu0 0.0
  %4198 = vmatprep.subr.mxu0 0.0
  %4199 = vmatpush1.msra.mxu0 0.0
  %4200 = vmatprep.subr.mxu0 0.0
  %4201 = vmatpush1.msra.mxu0 0.0
  %4202 = vmatprep.subr.mxu0 0.0
  %4203 = vmatpush1.msra.mxu0 0.0
  %4204 = vmatprep.subr.mxu0 0.0
  %4205 = vmatpush1.msra.mxu0 0.0
  %4206 = vmatprep.subr.mxu0 0.0
  %4207 = vmatpush1.msra.mxu0 0.0
  %4208 = vmatprep.subr.mxu0 0.0
  %4209 = vmatpush1.msra.mxu0 0.0
  %4210 = vmatprep.subr.mxu0 0.0
  %4211 = vmatpush1.msra.mxu0 0.0
  %4212 = vmatprep.subr.mxu0 0.0
  %4213 = vmatpush1.msra.mxu0 0.0
  %4214 = vmatprep.subr.mxu0 %v4101
  %4215 = vmatpush1.msra.mxu0 %v4098
  %4216 = vmatprep.subr.mxu0 %v4068
  %4217 = vmatpush1.msra.mxu0 %v4067
  %4218 = vmatprep.subr.mxu0 %v4058
  %4219 = vmatpush1.msra.mxu0 %v4057
  %4220 = vmatprep.subr.mxu0 %v4048
  %4221 = vmatpush1.msra.mxu0 %v4047
  %4222 = vmatprep.subr.mxu0 %v4038
  %4223 = vmatpush1.msra.mxu0 %v4037
  %4224 = vmatprep.subr.mxu0 0.0
  %4225 = vmatpush2.msra.mxu0 0.0
  %4226 = vmatprep.subr.mxu0 0.0
  %4227 = vmatpush2.msra.mxu0 0.0
  %4228 = vmatprep.subr.mxu0 0.0
  %4229 = vmatpush2.msra.mxu0 0.0
  %4230 = vmatprep.subr.mxu0 0.0
  %4231 = vmatpush2.msra.mxu0 0.0
  %4232 = vmatprep.subr.mxu0 0.0
  %4233 = vmatpush2.msra.mxu0 0.0
  %4234 = vmatprep.subr.mxu0 0.0
  %4235 = vmatpush2.msra.mxu0 0.0
  %4236 = vmatprep.subr.mxu0 0.0
  %4237 = vmatpush2.msra.mxu0 0.0
  %4238 = vmatprep.subr.mxu0 0.0
  %4239 = vmatpush2.msra.mxu0 0.0
  %4240 = vmatprep.subr.mxu0 0.0
  %4241 = vmatpush2.msra.mxu0 0.0
  %4242 = vmatprep.subr.mxu0 0.0
  %4243 = vmatpush2.msra.mxu0 0.0
  %4244 = vmatprep.subr.mxu0 0.0
  %4245 = vmatpush2.msra.mxu0 0.0
  %4246 = vmatprep.subr.mxu0 0.0
  %4247 = vmatpush2.msra.mxu0 0.0
  %4248 = vmatprep.subr.mxu0 0.0
  %4249 = vmatpush2.msra.mxu0 0.0
  %4250 = vmatprep.subr.mxu0 0.0
  %4251 = vmatpush2.msra.mxu0 0.0
  %4252 = vmatprep.subr.mxu0 0.0
  %4253 = vmatpush2.msra.mxu0 0.0
  %4254 = vmatprep.subr.mxu0 0.0
  %4255 = vmatpush2.msra.mxu0 0.0
  %4256 = vmatprep.mubr.f32.mxu0 0.0
  %4257 = vmatmul.mubr.f32.gmra.mxu0 %v4088
  %v4258 = vpop.f32.mrf.mxu0
  %v4259 = vadd.f32 0.0, %v4258
  %v4260 = vpop.f32.mrf.mxu0
  %v4261 = vadd.f32 0.0, %v4260
  %4262 = vdwg.mxu0
  %4263 = vmatprep.subr.mxu0 0.0
  %4264 = vmatpush1.msra.mxu0 0.0
  %4265 = vmatprep.subr.mxu0 0.0
  %4266 = vmatpush1.msra.mxu0 0.0
  %4267 = vmatprep.subr.mxu0 0.0
  %4268 = vmatpush1.msra.mxu0 0.0
  %4269 = vmatprep.subr.mxu0 0.0
  %4270 = vmatpush1.msra.mxu0 0.0
  %4271 = vmatprep.subr.mxu0 0.0
  %4272 = vmatpush1.msra.mxu0 0.0
  %4273 = vmatprep.subr.mxu0 0.0
  %4274 = vmatpush1.msra.mxu0 0.0
  %4275 = vmatprep.subr.mxu0 0.0
  %4276 = vmatpush1.msra.mxu0 0.0
  %4277 = vmatprep.subr.mxu0 0.0
  %4278 = vmatpush1.msra.mxu0 0.0
  %4279 = vmatprep.subr.mxu0 0.0
  %4280 = vmatpush1.msra.mxu0 0.0
  %4281 = vmatprep.subr.mxu0 0.0
  %4282 = vmatpush1.msra.mxu0 0.0
  %4283 = vmatprep.subr.mxu0 0.0
  %4284 = vmatpush1.msra.mxu0 0.0
  %4285 = vmatprep.subr.mxu0 %v4107
  %4286 = vmatpush1.msra.mxu0 %v4104
  %4287 = vmatprep.subr.mxu0 %v4070
  %4288 = vmatpush1.msra.mxu0 %v4069
  %4289 = vmatprep.subr.mxu0 %v4060
  %4290 = vmatpush1.msra.mxu0 %v4059
  %4291 = vmatprep.subr.mxu0 %v4050
  %4292 = vmatpush1.msra.mxu0 %v4049
  %4293 = vmatprep.subr.mxu0 %v4040
  %4294 = vmatpush1.msra.mxu0 %v4039
  %4295 = vmatprep.subr.mxu0 0.0
  %4296 = vmatpush2.msra.mxu0 0.0
  %4297 = vmatprep.subr.mxu0 0.0
  %4298 = vmatpush2.msra.mxu0 0.0
  %4299 = vmatprep.subr.mxu0 0.0
  %4300 = vmatpush2.msra.mxu0 0.0
  %4301 = vmatprep.subr.mxu0 0.0
  %4302 = vmatpush2.msra.mxu0 0.0
  %4303 = vmatprep.subr.mxu0 0.0
  %4304 = vmatpush2.msra.mxu0 0.0
  %4305 = vmatprep.subr.mxu0 0.0
  %4306 = vmatpush2.msra.mxu0 0.0
  %4307 = vmatprep.subr.mxu0 0.0
  %4308 = vmatpush2.msra.mxu0 0.0
  %4309 = vmatprep.subr.mxu0 0.0
  %4310 = vmatpush2.msra.mxu0 0.0
  %4311 = vmatprep.subr.mxu0 0.0
  %4312 = vmatpush2.msra.mxu0 0.0
  %4313 = vmatprep.subr.mxu0 0.0
  %4314 = vmatpush2.msra.mxu0 0.0
  %4315 = vmatprep.subr.mxu0 0.0
  %4316 = vmatpush2.msra.mxu0 0.0
  %4317 = vmatprep.subr.mxu0 0.0
  %4318 = vmatpush2.msra.mxu0 0.0
  %4319 = vmatprep.subr.mxu0 0.0
  %4320 = vmatpush2.msra.mxu0 0.0
  %4321 = vmatprep.subr.mxu0 0.0
  %4322 = vmatpush2.msra.mxu0 0.0
  %4323 = vmatprep.subr.mxu0 0.0
  %4324 = vmatpush2.msra.mxu0 0.0
  %4325 = vmatprep.subr.mxu0 0.0
  %4326 = vmatpush2.msra.mxu0 0.0
  %4327 = vmatprep.mubr.f32.mxu0 0.0
  %4328 = vmatmul.mubr.f32.gmra.mxu0 %v4088
  %v4329 = vpop.f32.mrf.mxu0
  %v4330 = vadd.f32 0.0, %v4329
  %v4331 = vpop.f32.mrf.mxu0
  %v4332 = vadd.f32 0.0, %v4331
  %4333 = vdwg.mxu0
  %4334 = vmatprep.subr.mxu0 0.0
  %4335 = vmatpush1.msra.mxu0 0.0
  %4336 = vmatprep.subr.mxu0 0.0
  %4337 = vmatpush1.msra.mxu0 0.0
  %4338 = vmatprep.subr.mxu0 0.0
  %4339 = vmatpush1.msra.mxu0 0.0
  %4340 = vmatprep.subr.mxu0 0.0
  %4341 = vmatpush1.msra.mxu0 0.0
  %4342 = vmatprep.subr.mxu0 0.0
  %4343 = vmatpush1.msra.mxu0 0.0
  %4344 = vmatprep.subr.mxu0 0.0
  %4345 = vmatpush1.msra.mxu0 0.0
  %4346 = vmatprep.subr.mxu0 0.0
  %4347 = vmatpush1.msra.mxu0 0.0
  %4348 = vmatprep.subr.mxu0 0.0
  %4349 = vmatpush1.msra.mxu0 0.0
  %4350 = vmatprep.subr.mxu0 0.0
  %4351 = vmatpush1.msra.mxu0 0.0
  %4352 = vmatprep.subr.mxu0 0.0
  %4353 = vmatpush1.msra.mxu0 0.0
  %4354 = vmatprep.subr.mxu0 0.0
  %4355 = vmatpush1.msra.mxu0 0.0
  %4356 = vmatprep.subr.mxu0 %v4113
  %4357 = vmatpush1.msra.mxu0 %v4110
  %4358 = vmatprep.subr.mxu0 %v4072
  %4359 = vmatpush1.msra.mxu0 %v4071
  %4360 = vmatprep.subr.mxu0 %v4062
  %4361 = vmatpush1.msra.mxu0 %v4061
  %4362 = vmatprep.subr.mxu0 %v4052
  %4363 = vmatpush1.msra.mxu0 %v4051
  %4364 = vmatprep.subr.mxu0 %v4042
  %4365 = vmatpush1.msra.mxu0 %v4041
  %4366 = vmatprep.subr.mxu0 0.0
  %4367 = vmatpush2.msra.mxu0 0.0
  %4368 = vmatprep.subr.mxu0 0.0
  %4369 = vmatpush2.msra.mxu0 0.0
  %4370 = vmatprep.subr.mxu0 0.0
  %4371 = vmatpush2.msra.mxu0 0.0
  %4372 = vmatprep.subr.mxu0 0.0
  %4373 = vmatpush2.msra.mxu0 0.0
  %4374 = vmatprep.subr.mxu0 0.0
  %4375 = vmatpush2.msra.mxu0 0.0
  %4376 = vmatprep.subr.mxu0 0.0
  %4377 = vmatpush2.msra.mxu0 0.0
  %4378 = vmatprep.subr.mxu0 0.0
  %4379 = vmatpush2.msra.mxu0 0.0
  %4380 = vmatprep.subr.mxu0 0.0
  %4381 = vmatpush2.msra.mxu0 0.0
  %4382 = vmatprep.subr.mxu0 0.0
  %4383 = vmatpush2.msra.mxu0 0.0
  %4384 = vmatprep.subr.mxu0 0.0
  %4385 = vmatpush2.msra.mxu0 0.0
  %4386 = vmatprep.subr.mxu0 0.0
  %4387 = vmatpush2.msra.mxu0 0.0
  %4388 = vmatprep.subr.mxu0 0.0
  %4389 = vmatpush2.msra.mxu0 0.0
  %4390 = vmatprep.subr.mxu0 0.0
  %4391 = vmatpush2.msra.mxu0 0.0
  %4392 = vmatprep.subr.mxu0 0.0
  %4393 = vmatpush2.msra.mxu0 0.0
  %4394 = vmatprep.subr.mxu0 0.0
  %4395 = vmatpush2.msra.mxu0 0.0
  %4396 = vmatprep.subr.mxu0 0.0
  %4397 = vmatpush2.msra.mxu0 0.0
  %4398 = vmatprep.mubr.f32.mxu0 0.0
  %4399 = vmatmul.mubr.f32.gmra.mxu0 %v4088
  %v4400 = vpop.f32.mrf.mxu0
  %v4401 = vadd.f32 0.0, %v4400
  %v4402 = vpop.f32.mrf.mxu0
  %v4403 = vadd.f32 0.0, %v4402
  %4404 = vdwg.mxu0
  %4405 = vmatprep.subr.mxu0 0.0
  %4406 = vmatpush1.msra.mxu0 0.0
  %4407 = vmatprep.subr.mxu0 0.0
  %4408 = vmatpush1.msra.mxu0 0.0
  %4409 = vmatprep.subr.mxu0 0.0
  %4410 = vmatpush1.msra.mxu0 0.0
  %4411 = vmatprep.subr.mxu0 0.0
  %4412 = vmatpush1.msra.mxu0 0.0
  %4413 = vmatprep.subr.mxu0 0.0
  %4414 = vmatpush1.msra.mxu0 0.0
  %4415 = vmatprep.subr.mxu0 0.0
  %4416 = vmatpush1.msra.mxu0 0.0
  %4417 = vmatprep.subr.mxu0 0.0
  %4418 = vmatpush1.msra.mxu0 0.0
  %4419 = vmatprep.subr.mxu0 0.0
  %4420 = vmatpush1.msra.mxu0 0.0
  %4421 = vmatprep.subr.mxu0 0.0
  %4422 = vmatpush1.msra.mxu0 0.0
  %4423 = vmatprep.subr.mxu0 0.0
  %4424 = vmatpush1.msra.mxu0 0.0
  %4425 = vmatprep.subr.mxu0 0.0
  %4426 = vmatpush1.msra.mxu0 0.0
  %4427 = vmatprep.subr.mxu0 %v4119
  %4428 = vmatpush1.msra.mxu0 %v4116
  %4429 = vmatprep.subr.mxu0 %v4074
  %4430 = vmatpush1.msra.mxu0 %v4073
  %4431 = vmatprep.subr.mxu0 %v4064
  %4432 = vmatpush1.msra.mxu0 %v4063
  %4433 = vmatprep.subr.mxu0 %v4054
  %4434 = vmatpush1.msra.mxu0 %v4053
  %4435 = vmatprep.subr.mxu0 %v4044
  %4436 = vmatpush1.msra.mxu0 %v4043
  %4437 = vmatprep.subr.mxu0 0.0
  %4438 = vmatpush2.msra.mxu0 0.0
  %4439 = vmatprep.subr.mxu0 0.0
  %4440 = vmatpush2.msra.mxu0 0.0
  %4441 = vmatprep.subr.mxu0 0.0
  %4442 = vmatpush2.msra.mxu0 0.0
  %4443 = vmatprep.subr.mxu0 0.0
  %4444 = vmatpush2.msra.mxu0 0.0
  %4445 = vmatprep.subr.mxu0 0.0
  %4446 = vmatpush2.msra.mxu0 0.0
  %4447 = vmatprep.subr.mxu0 0.0
  %4448 = vmatpush2.msra.mxu0 0.0
  %4449 = vmatprep.subr.mxu0 0.0
  %4450 = vmatpush2.msra.mxu0 0.0
  %4451 = vmatprep.subr.mxu0 0.0
  %4452 = vmatpush2.msra.mxu0 0.0
  %4453 = vmatprep.subr.mxu0 0.0
  %4454 = vmatpush2.msra.mxu0 0.0
  %4455 = vmatprep.subr.mxu0 0.0
  %4456 = vmatpush2.msra.mxu0 0.0
  %4457 = vmatprep.subr.mxu0 0.0
  %4458 = vmatpush2.msra.mxu0 0.0
  %4459 = vmatprep.subr.mxu0 0.0
  %4460 = vmatpush2.msra.mxu0 0.0
  %4461 = vmatprep.subr.mxu0 0.0
  %4462 = vmatpush2.msra.mxu0 0.0
  %4463 = vmatprep.subr.mxu0 0.0
  %4464 = vmatpush2.msra.mxu0 0.0
  %4465 = vmatprep.subr.mxu0 0.0
  %4466 = vmatpush2.msra.mxu0 0.0
  %4467 = vmatprep.subr.mxu0 0.0
  %4468 = vmatpush2.msra.mxu0 0.0
  %4469 = vmatprep.mubr.f32.mxu0 0.0
  %4470 = vmatmul.mubr.f32.gmra.mxu0 %v4088
  %v4471 = vpop.f32.mrf.mxu0
  %v4472 = vadd.f32 0.0, %v4471
  %v4473 = vpop.f32.mrf.mxu0
  %v4474 = vadd.f32 0.0, %v4473
  %4475 = vdwg.mxu0
  %v4476 = vld [vmem:[%s5] sm:$0xff]
  %v4477 = vld [vmem:[%s5 + $0x8] sm:$0xff]
  %v4478 = vld [vmem:[%s5 + $0x10] sm:$0xff]
  %v4479 = vld [vmem:[%s5 + $0x18] sm:$0xff]
  %v4480 = vld [vmem:[%s5 + $0x20] sm:$0xff]
  %v4481 = vld [vmem:[%s5 + $0x28] sm:$0xff]
  %v4482 = vld [vmem:[%s5 + $0x30] sm:$0xff]
  %v4483 = vld [vmem:[%s5 + $0x38] sm:$0xff]
  %v4484 = vld [vmem:[%s5 + $0x40] sm:$0xff]
  %v4485 = vld [vmem:[%s5 + $0x48] sm:$0xff]
  %v4486 = vld [vmem:[%s5 + $0x50] sm:$0xff]
  %v4487 = vld [vmem:[%s5 + $0x58] sm:$0xff]
  %v4488 = vld [vmem:[%s5 + $0x60] sm:$0xff]
  %v4489 = vld [vmem:[%s5 + $0x68] sm:$0xff]
  %v4490 = vld [vmem:[%s5 + $0x70] sm:$0xff]
  %v4491 = vld [vmem:[%s5 + $0x78] sm:$0xff]
  %v4492 = vld [vmem:[%s5 + $0x80] sm:$0xff]
  %v4493 = vld [vmem:[%s5 + $0x88] sm:$0xff]
  %v4494 = vld [vmem:[%s5 + $0x90] sm:$0xff]
  %v4495 = vld [vmem:[%s5 + $0x98] sm:$0xff]
  %v4496 = vld [vmem:[%s5 + $0xa0] sm:$0xff]
  %v4497 = vld [vmem:[%s5 + $0xa8] sm:$0xff]
  %v4498 = vld [vmem:[%s5 + $0xb0] sm:$0xff]
  %v4499 = vld [vmem:[%s5 + $0xb8] sm:$0xff]
  %v4500 = vld [vmem:[%s5 + $0xc0] sm:$0xff]
  %v4501 = vld [vmem:[%s5 + $0xc8] sm:$0xff]
  %v4502 = vld [vmem:[%s5 + $0xd0] sm:$0xff]
  %v4503 = vld [vmem:[%s5 + $0xd8] sm:$0xff]
  %v4504 = vld [vmem:[%s5 + $0xe0] sm:$0xff]
  %v4505 = vld [vmem:[%s5 + $0xe8] sm:$0xff]
  %v4506 = vld [vmem:[%s5 + $0xf0] sm:$0xff]
  %v4507 = vld [vmem:[%s5 + $0xf8] sm:$0xff]
  %v4508 = vld [vmem:[%s5 + $0x100] sm:$0xff]
  %v4509 = vld [vmem:[%s5 + $0x108] sm:$0xff]
  %v4510 = vld [vmem:[%s5 + $0x110] sm:$0xff]
  %v4511 = vld [vmem:[%s5 + $0x118] sm:$0xff]
  %v4512 = vld [vmem:[%s5 + $0x120] sm:$0xff]
  %v4513 = vld [vmem:[%s5 + $0x128] sm:$0xff]
  %v4514 = vld [vmem:[%s5 + $0x130] sm:$0xff]
  %v4515 = vld [vmem:[%s5 + $0x138] sm:$0xff]
  %v4516 = vld [vmem:[%s5 + $0x140] sm:$0xff]
  %v4517 = vld [vmem:[%s5 + $0x148] sm:$0xff]
  %v4518 = vld [vmem:[%s5 + $0x150] sm:$0xff]
  %v4519 = vld [vmem:[%s5 + $0x158] sm:$0xff]
  %v4520 = vld [vmem:[%s5 + $0x160] sm:$0xff]
  %v4521 = vld [vmem:[%s5 + $0x168] sm:$0xff]
  %v4522 = vld [vmem:[%s5 + $0x170] sm:$0xff]
  %v4523 = vld [vmem:[%s5 + $0x178] sm:$0xff]
  %v4524 = vld [vmem:[%s5 + $0x180] sm:$0xff]
  %v4525 = vld [vmem:[%s5 + $0x188] sm:$0xff]
  %v4526 = vld [vmem:[%s5 + $0x190] sm:$0xff]
  %v4527 = vld [vmem:[%s5 + $0x198] sm:$0xff]
  %v4528 = vld [vmem:[%s5 + $0x1a0] sm:$0xff]
  %v4529 = vld [vmem:[%s5 + $0x1a8] sm:$0xff]
  %v4530 = vld [vmem:[%s5 + $0x1b0] sm:$0xff]
  %v4531 = vld [vmem:[%s5 + $0x1b8] sm:$0xff]
  %v4532 = vld [vmem:[%s5 + $0x1c0] sm:$0xff]
  %v4533 = vld [vmem:[%s5 + $0x1c8] sm:$0xff]
  %v4534 = vld [vmem:[%s5 + $0x1d0] sm:$0xff]
  %v4535 = vld [vmem:[%s5 + $0x1d8] sm:$0xff]
  %v4536 = vld [vmem:[%s5 + $0x1e0] sm:$0xff]
  %v4537 = vld [vmem:[%s5 + $0x1e8] sm:$0xff]
  %v4538 = vld [vmem:[%s5 + $0x1f0] sm:$0xff]
  %v4539 = vld [vmem:[%s5 + $0x1f8] sm:$0xff]
  %v4540 = vld [vmem:[%s5 + $0x200] sm:$0xff]
  %v4541 = vld [vmem:[%s5 + $0x208] sm:$0xff]
  %v4542 = vld [vmem:[%s5 + $0x210] sm:$0xff]
  %v4543 = vld [vmem:[%s5 + $0x218] sm:$0xff]
  %v4544 = vld [vmem:[%s5 + $0x220] sm:$0xff]
  %v4545 = vld [vmem:[%s5 + $0x228] sm:$0xff]
  %v4546 = vld [vmem:[%s5 + $0x230] sm:$0xff]
  %v4547 = vld [vmem:[%s5 + $0x238] sm:$0xff]
  %v4548 = vld [vmem:[%s5 + $0x240] sm:$0xff]
  %v4549 = vld [vmem:[%s5 + $0x248] sm:$0xff]
  %v4550 = vld [vmem:[%s5 + $0x250] sm:$0xff]
  %v4551 = vld [vmem:[%s5 + $0x258] sm:$0xff]
  %v4552 = vld [vmem:[%s5 + $0x260] sm:$0xff]
  %v4553 = vld [vmem:[%s5 + $0x268] sm:$0xff]
  %v4554 = vld [vmem:[%s5 + $0x270] sm:$0xff]
  %v4555 = vld [vmem:[%s5 + $0x278] sm:$0xff]
  %v4556 = vld [vmem:[%s5 + $0x280] sm:$0xff]
  %v4557 = vld [vmem:[%s5 + $0x288] sm:$0xff]
  %v4558 = vld [vmem:[%s5 + $0x290] sm:$0xff]
  %v4559 = vld [vmem:[%s5 + $0x298] sm:$0xff]
  %v4560 = vld [vmem:[%s5 + $0x2a0] sm:$0xff]
  %v4561 = vld [vmem:[%s5 + $0x2a8] sm:$0xff]
  %v4562 = vld [vmem:[%s5 + $0x2b0] sm:$0xff]
  %v4563 = vld [vmem:[%s5 + $0x2b8] sm:$0xff]
  %v4564 = vld [vmem:[%s5 + $0x2c0] sm:$0xff]
  %v4565 = vld [vmem:[%s5 + $0x2c8] sm:$0xff]
  %v4566 = vld [vmem:[%s5 + $0x2d0] sm:$0xff]
  %v4567 = vld [vmem:[%s5 + $0x2d8] sm:$0xff]
  %v4568 = vld [vmem:[%s5 + $0x2e0] sm:$0xff]
  %v4569 = vld [vmem:[%s5 + $0x2e8] sm:$0xff]
  %v4570 = vld [vmem:[%s5 + $0x2f0] sm:$0xff]
  %v4571 = vld [vmem:[%s5 + $0x2f8] sm:$0xff]
  %v4572 = vld [vmem:[%s5 + $0x300] sm:$0xff]
  %v4573 = vld [vmem:[%s5 + $0x308] sm:$0xff]
  %v4574 = vld [vmem:[%s5 + $0x310] sm:$0xff]
  %v4575 = vld [vmem:[%s5 + $0x318] sm:$0xff]
  %v4576 = vld [vmem:[%s5 + $0x320] sm:$0xff]
  %v4577 = vld [vmem:[%s5 + $0x328] sm:$0xff]
  %v4578 = vld [vmem:[%s5 + $0x330] sm:$0xff]
  %v4579 = vld [vmem:[%s5 + $0x338] sm:$0xff]
  %v4580 = vld [vmem:[%s5 + $0x340] sm:$0xff]
  %v4581 = vld [vmem:[%s5 + $0x348] sm:$0xff]
  %v4582 = vld [vmem:[%s5 + $0x350] sm:$0xff]
  %v4583 = vld [vmem:[%s5 + $0x358] sm:$0xff]
  %v4584 = vld [vmem:[%s5 + $0x360] sm:$0xff]
  %v4585 = vld [vmem:[%s5 + $0x368] sm:$0xff]
  %v4586 = vld [vmem:[%s5 + $0x370] sm:$0xff]
  %v4587 = vld [vmem:[%s5 + $0x378] sm:$0xff]
  %v4588 = vld [vmem:[%s5 + $0x380] sm:$0xff]
  %v4589 = vld [vmem:[%s5 + $0x388] sm:$0xff]
  %v4590 = vld [vmem:[%s5 + $0x390] sm:$0xff]
  %v4591 = vld [vmem:[%s5 + $0x398] sm:$0xff]
  %v4592 = vld [vmem:[%s5 + $0x3a0] sm:$0xff]
  %v4593 = vld [vmem:[%s5 + $0x3a8] sm:$0xff]
  %v4594 = vld [vmem:[%s5 + $0x3b0] sm:$0xff]
  %v4595 = vld [vmem:[%s5 + $0x3b8] sm:$0xff]
  %v4596 = vld [vmem:[%s5 + $0x3c0] sm:$0xff]
  %v4597 = vld [vmem:[%s5 + $0x3c8] sm:$0xff]
  %v4598 = vld [vmem:[%s5 + $0x3d0] sm:$0xff]
  %v4599 = vld [vmem:[%s5 + $0x3d8] sm:$0xff]
  %v4600 = vld [vmem:[%s5 + $0x3e0] sm:$0xff]
  %v4601 = vld [vmem:[%s5 + $0x3e8] sm:$0xff]
  %v4602 = vld [vmem:[%s5 + $0x3f0] sm:$0xff]
  %v4603 = vld [vmem:[%s5 + $0x3f8] sm:$0xff]
  %v4604 = vld [vmem:[%s5 + $0x400] sm:$0xff]
  %v4605 = vld [vmem:[%s5 + $0x408] sm:$0xff]
  %v4606 = vld [vmem:[%s5 + $0x410] sm:$0xff]
  %v4607 = vld [vmem:[%s5 + $0x418] sm:$0xff]
  %v4608 = vld [vmem:[%s5 + $0x420] sm:$0xff]
  %v4609 = vld [vmem:[%s5 + $0x428] sm:$0xff]
  %v4610 = vld [vmem:[%s5 + $0x430] sm:$0xff]
  %v4611 = vld [vmem:[%s5 + $0x438] sm:$0xff]
  %v4612 = vld [vmem:[%s5 + $0x440] sm:$0xff]
  %v4613 = vld [vmem:[%s5 + $0x448] sm:$0xff]
  %v4614 = vld [vmem:[%s5 + $0x450] sm:$0xff]
  %v4615 = vld [vmem:[%s5 + $0x458] sm:$0xff]
  %v4616 = vld [vmem:[%s5 + $0x460] sm:$0xff]
  %v4617 = vld [vmem:[%s5 + $0x468] sm:$0xff]
  %v4618 = vld [vmem:[%s5 + $0x470] sm:$0xff]
  %v4619 = vld [vmem:[%s5 + $0x478] sm:$0xff]
  %v4620 = vld [vmem:[%s5 + $0x480] sm:$0xff]
  %v4621 = vld [vmem:[%s5 + $0x488] sm:$0xff]
  %v4622 = vld [vmem:[%s5 + $0x490] sm:$0xff]
  %v4623 = vld [vmem:[%s5 + $0x498] sm:$0xff]
  %v4624 = vld [vmem:[%s5 + $0x4a0] sm:$0xff]
  %v4625 = vld [vmem:[%s5 + $0x4a8] sm:$0xff]
  %v4626 = vld [vmem:[%s5 + $0x4b0] sm:$0xff]
  %v4627 = vld [vmem:[%s5 + $0x4b8] sm:$0xff]
  %v4628 = vld [vmem:[%s5 + $0x4c0] sm:$0xff]
  %v4629 = vld [vmem:[%s5 + $0x4c8] sm:$0xff]
  %v4630 = vld [vmem:[%s5 + $0x4d0] sm:$0xff]
  %v4631 = vld [vmem:[%s5 + $0x4d8] sm:$0xff]
  %v4632 = vld [vmem:[%s5 + $0x4e0] sm:$0xff]
  %v4633 = vld [vmem:[%s5 + $0x4e8] sm:$0xff]
  %v4634 = vld [vmem:[%s5 + $0x4f0] sm:$0xff]
  %v4635 = vld [vmem:[%s5 + $0x4f8] sm:$0xf]
  %v4636 = vld [vmem:[#allocation2] sm:$0x1]
  %4638 = vset.pattern.permute.xlu0 0
  %4639 = vperm.xlu0 %4638, %v4636
  %v4640 = vpop.permute.xlu0 %4639
  %v4642 = vlaneseq
  %v4643 = vshrl.u32 %v4642, 7
  %v4644 = vsub.s32 0, %v4643
  %v4645 = vrot.slane %v4640, %v4644
  %v4647 = vsel %vm3939, %v4474, 0
  %vm4649 = vcmask 1043456
  %v4651 = vsel %vm4649, %v4635, 0
  %4653 = vmatprep.subr.mxu0 0.0
  %4654 = vmatpush1.msra.mxu0 %v4491
  %4655 = vmatprep.subr.mxu0 0.0
  %4656 = vmatpush1.msra.mxu0 %v4490
  %4657 = vmatprep.subr.mxu0 0.0
  %4658 = vmatpush1.msra.mxu0 %v4489
  %4659 = vmatprep.subr.mxu0 0.0
  %4660 = vmatpush1.msra.mxu0 %v4488
  %4661 = vmatprep.subr.mxu0 0.0
  %4662 = vmatpush1.msra.mxu0 %v4487
  %4663 = vmatprep.subr.mxu0 0.0
  %4664 = vmatpush1.msra.mxu0 %v4486
  %4665 = vmatprep.subr.mxu0 0.0
  %4666 = vmatpush1.msra.mxu0 %v4485
  %4667 = vmatprep.subr.mxu0 0.0
  %4668 = vmatpush1.msra.mxu0 %v4484
  %4669 = vmatprep.subr.mxu0 0.0
  %4670 = vmatpush1.msra.mxu0 %v4483
  %4671 = vmatprep.subr.mxu0 0.0
  %4672 = vmatpush1.msra.mxu0 %v4482
  %4673 = vmatprep.subr.mxu0 0.0
  %4674 = vmatpush1.msra.mxu0 %v4481
  %4675 = vmatprep.subr.mxu0 0.0
  %4676 = vmatpush1.msra.mxu0 %v4480
  %4677 = vmatprep.subr.mxu0 0.0
  %4678 = vmatpush1.msra.mxu0 %v4479
  %4679 = vmatprep.subr.mxu0 0.0
  %4680 = vmatpush1.msra.mxu0 %v4478
  %4681 = vmatprep.subr.mxu0 0.0
  %4682 = vmatpush1.msra.mxu0 %v4477
  %4683 = vmatprep.subr.mxu0 0.0
  %4684 = vmatpush1.msra.mxu0 %v4476
  %4685 = vmatprep.subr.mxu0 0.0
  %4686 = vmatpush2.msra.mxu0 %v4507
  %4687 = vmatprep.subr.mxu0 0.0
  %4688 = vmatpush2.msra.mxu0 %v4506
  %4689 = vmatprep.subr.mxu0 0.0
  %4690 = vmatpush2.msra.mxu0 %v4505
  %4691 = vmatprep.subr.mxu0 0.0
  %4692 = vmatpush2.msra.mxu0 %v4504
  %4693 = vmatprep.subr.mxu0 0.0
  %4694 = vmatpush2.msra.mxu0 %v4503
  %4695 = vmatprep.subr.mxu0 0.0
  %4696 = vmatpush2.msra.mxu0 %v4502
  %4697 = vmatprep.subr.mxu0 0.0
  %4698 = vmatpush2.msra.mxu0 %v4501
  %4699 = vmatprep.subr.mxu0 0.0
  %4700 = vmatpush2.msra.mxu0 %v4500
  %4701 = vmatprep.subr.mxu0 0.0
  %4702 = vmatpush2.msra.mxu0 %v4499
  %4703 = vmatprep.subr.mxu0 0.0
  %4704 = vmatpush2.msra.mxu0 %v4498
  %4705 = vmatprep.subr.mxu0 0.0
  %4706 = vmatpush2.msra.mxu0 %v4497
  %4707 = vmatprep.subr.mxu0 0.0
  %4708 = vmatpush2.msra.mxu0 %v4496
  %4709 = vmatprep.subr.mxu0 0.0
  %4710 = vmatpush2.msra.mxu0 %v4495
  %4711 = vmatprep.subr.mxu0 0.0
  %4712 = vmatpush2.msra.mxu0 %v4494
  %4713 = vmatprep.subr.mxu0 0.0
  %4714 = vmatpush2.msra.mxu0 %v4493
  %4715 = vmatprep.subr.mxu0 0.0
  %4716 = vmatpush2.msra.mxu0 %v4492
  %4717 = vmatprep.mubr.f32.mxu0 %v4190
  %4718 = vmatmul.mubr.f32.gmra.mxu0 %v4188
  %v4719 = vpop.f32.mrf.mxu0
  %v4720 = vadd.f32 %v4645, %v4719
  %v4721 = vpop.f32.mrf.mxu0
  %4722 = vdwg.mxu0
  %4723 = vmatprep.subr.mxu0 0.0
  %4724 = vmatpush1.msra.mxu0 %v4523
  %4725 = vmatprep.subr.mxu0 0.0
  %4726 = vmatpush1.msra.mxu0 %v4522
  %4727 = vmatprep.subr.mxu0 0.0
  %4728 = vmatpush1.msra.mxu0 %v4521
  %4729 = vmatprep.subr.mxu0 0.0
  %4730 = vmatpush1.msra.mxu0 %v4520
  %4731 = vmatprep.subr.mxu0 0.0
  %4732 = vmatpush1.msra.mxu0 %v4519
  %4733 = vmatprep.subr.mxu0 0.0
  %4734 = vmatpush1.msra.mxu0 %v4518
  %4735 = vmatprep.subr.mxu0 0.0
  %4736 = vmatpush1.msra.mxu0 %v4517
  %4737 = vmatprep.subr.mxu0 0.0
  %4738 = vmatpush1.msra.mxu0 %v4516
  %4739 = vmatprep.subr.mxu0 0.0
  %4740 = vmatpush1.msra.mxu0 %v4515
  %4741 = vmatprep.subr.mxu0 0.0
  %4742 = vmatpush1.msra.mxu0 %v4514
  %4743 = vmatprep.subr.mxu0 0.0
  %4744 = vmatpush1.msra.mxu0 %v4513
  %4745 = vmatprep.subr.mxu0 0.0
  %4746 = vmatpush1.msra.mxu0 %v4512
  %4747 = vmatprep.subr.mxu0 0.0
  %4748 = vmatpush1.msra.mxu0 %v4511
  %4749 = vmatprep.subr.mxu0 0.0
  %4750 = vmatpush1.msra.mxu0 %v4510
  %4751 = vmatprep.subr.mxu0 0.0
  %4752 = vmatpush1.msra.mxu0 %v4509
  %4753 = vmatprep.subr.mxu0 0.0
  %4754 = vmatpush1.msra.mxu0 %v4508
  %4755 = vmatprep.subr.mxu0 0.0
  %4756 = vmatpush2.msra.mxu0 %v4539
  %4757 = vmatprep.subr.mxu0 0.0
  %4758 = vmatpush2.msra.mxu0 %v4538
  %4759 = vmatprep.subr.mxu0 0.0
  %4760 = vmatpush2.msra.mxu0 %v4537
  %4761 = vmatprep.subr.mxu0 0.0
  %4762 = vmatpush2.msra.mxu0 %v4536
  %4763 = vmatprep.subr.mxu0 0.0
  %4764 = vmatpush2.msra.mxu0 %v4535
  %4765 = vmatprep.subr.mxu0 0.0
  %4766 = vmatpush2.msra.mxu0 %v4534
  %4767 = vmatprep.subr.mxu0 0.0
  %4768 = vmatpush2.msra.mxu0 %v4533
  %4769 = vmatprep.subr.mxu0 0.0
  %4770 = vmatpush2.msra.mxu0 %v4532
  %4771 = vmatprep.subr.mxu0 0.0
  %4772 = vmatpush2.msra.mxu0 %v4531
  %4773 = vmatprep.subr.mxu0 0.0
  %4774 = vmatpush2.msra.mxu0 %v4530
  %4775 = vmatprep.subr.mxu0 0.0
  %4776 = vmatpush2.msra.mxu0 %v4529
  %4777 = vmatprep.subr.mxu0 0.0
  %4778 = vmatpush2.msra.mxu0 %v4528
  %4779 = vmatprep.subr.mxu0 0.0
  %4780 = vmatpush2.msra.mxu0 %v4527
  %4781 = vmatprep.subr.mxu0 0.0
  %4782 = vmatpush2.msra.mxu0 %v4526
  %4783 = vmatprep.subr.mxu0 0.0
  %4784 = vmatpush2.msra.mxu0 %v4525
  %4785 = vmatprep.subr.mxu0 0.0
  %4786 = vmatpush2.msra.mxu0 %v4524
  %4787 = vmatprep.mubr.f32.mxu0 %v4261
  %4788 = vmatmul.mubr.f32.gmra.mxu0 %v4259
  %v4789 = vpop.f32.mrf.mxu0
  %v4790 = vadd.f32 %v4720, %v4789
  %v4791 = vpop.f32.mrf.mxu0
  %4792 = vdwg.mxu0
  %4793 = vmatprep.subr.mxu0 0.0
  %4794 = vmatpush1.msra.mxu0 %v4555
  %4795 = vmatprep.subr.mxu0 0.0
  %4796 = vmatpush1.msra.mxu0 %v4554
  %4797 = vmatprep.subr.mxu0 0.0
  %4798 = vmatpush1.msra.mxu0 %v4553
  %4799 = vmatprep.subr.mxu0 0.0
  %4800 = vmatpush1.msra.mxu0 %v4552
  %4801 = vmatprep.subr.mxu0 0.0
  %4802 = vmatpush1.msra.mxu0 %v4551
  %4803 = vmatprep.subr.mxu0 0.0
  %4804 = vmatpush1.msra.mxu0 %v4550
  %4805 = vmatprep.subr.mxu0 0.0
  %4806 = vmatpush1.msra.mxu0 %v4549
  %4807 = vmatprep.subr.mxu0 0.0
  %4808 = vmatpush1.msra.mxu0 %v4548
  %4809 = vmatprep.subr.mxu0 0.0
  %4810 = vmatpush1.msra.mxu0 %v4547
  %4811 = vmatprep.subr.mxu0 0.0
  %4812 = vmatpush1.msra.mxu0 %v4546
  %4813 = vmatprep.subr.mxu0 0.0
  %4814 = vmatpush1.msra.mxu0 %v4545
  %4815 = vmatprep.subr.mxu0 0.0
  %4816 = vmatpush1.msra.mxu0 %v4544
  %4817 = vmatprep.subr.mxu0 0.0
  %4818 = vmatpush1.msra.mxu0 %v4543
  %4819 = vmatprep.subr.mxu0 0.0
  %4820 = vmatpush1.msra.mxu0 %v4542
  %4821 = vmatprep.subr.mxu0 0.0
  %4822 = vmatpush1.msra.mxu0 %v4541
  %4823 = vmatprep.subr.mxu0 0.0
  %4824 = vmatpush1.msra.mxu0 %v4540
  %4825 = vmatprep.subr.mxu0 0.0
  %4826 = vmatpush2.msra.mxu0 %v4571
  %4827 = vmatprep.subr.mxu0 0.0
  %4828 = vmatpush2.msra.mxu0 %v4570
  %4829 = vmatprep.subr.mxu0 0.0
  %4830 = vmatpush2.msra.mxu0 %v4569
  %4831 = vmatprep.subr.mxu0 0.0
  %4832 = vmatpush2.msra.mxu0 %v4568
  %4833 = vmatprep.subr.mxu0 0.0
  %4834 = vmatpush2.msra.mxu0 %v4567
  %4835 = vmatprep.subr.mxu0 0.0
  %4836 = vmatpush2.msra.mxu0 %v4566
  %4837 = vmatprep.subr.mxu0 0.0
  %4838 = vmatpush2.msra.mxu0 %v4565
  %4839 = vmatprep.subr.mxu0 0.0
  %4840 = vmatpush2.msra.mxu0 %v4564
  %4841 = vmatprep.subr.mxu0 0.0
  %4842 = vmatpush2.msra.mxu0 %v4563
  %4843 = vmatprep.subr.mxu0 0.0
  %4844 = vmatpush2.msra.mxu0 %v4562
  %4845 = vmatprep.subr.mxu0 0.0
  %4846 = vmatpush2.msra.mxu0 %v4561
  %4847 = vmatprep.subr.mxu0 0.0
  %4848 = vmatpush2.msra.mxu0 %v4560
  %4849 = vmatprep.subr.mxu0 0.0
  %4850 = vmatpush2.msra.mxu0 %v4559
  %4851 = vmatprep.subr.mxu0 0.0
  %4852 = vmatpush2.msra.mxu0 %v4558
  %4853 = vmatprep.subr.mxu0 0.0
  %4854 = vmatpush2.msra.mxu0 %v4557
  %4855 = vmatprep.subr.mxu0 0.0
  %4856 = vmatpush2.msra.mxu0 %v4556
  %4857 = vmatprep.mubr.f32.mxu0 %v4332
  %4858 = vmatmul.mubr.f32.gmra.mxu0 %v4330
  %v4859 = vpop.f32.mrf.mxu0
  %v4860 = vadd.f32 %v4790, %v4859
  %v4861 = vpop.f32.mrf.mxu0
  %4862 = vdwg.mxu0
  %4863 = vmatprep.subr.mxu0 0.0
  %4864 = vmatpush1.msra.mxu0 %v4587
  %4865 = vmatprep.subr.mxu0 0.0
  %4866 = vmatpush1.msra.mxu0 %v4586
  %4867 = vmatprep.subr.mxu0 0.0
  %4868 = vmatpush1.msra.mxu0 %v4585
  %4869 = vmatprep.subr.mxu0 0.0
  %4870 = vmatpush1.msra.mxu0 %v4584
  %4871 = vmatprep.subr.mxu0 0.0
  %4872 = vmatpush1.msra.mxu0 %v4583
  %4873 = vmatprep.subr.mxu0 0.0
  %4874 = vmatpush1.msra.mxu0 %v4582
  %4875 = vmatprep.subr.mxu0 0.0
  %4876 = vmatpush1.msra.mxu0 %v4581
  %4877 = vmatprep.subr.mxu0 0.0
  %4878 = vmatpush1.msra.mxu0 %v4580
  %4879 = vmatprep.subr.mxu0 0.0
  %4880 = vmatpush1.msra.mxu0 %v4579
  %4881 = vmatprep.subr.mxu0 0.0
  %4882 = vmatpush1.msra.mxu0 %v4578
  %4883 = vmatprep.subr.mxu0 0.0
  %4884 = vmatpush1.msra.mxu0 %v4577
  %4885 = vmatprep.subr.mxu0 0.0
  %4886 = vmatpush1.msra.mxu0 %v4576
  %4887 = vmatprep.subr.mxu0 0.0
  %4888 = vmatpush1.msra.mxu0 %v4575
  %4889 = vmatprep.subr.mxu0 0.0
  %4890 = vmatpush1.msra.mxu0 %v4574
  %4891 = vmatprep.subr.mxu0 0.0
  %4892 = vmatpush1.msra.mxu0 %v4573
  %4893 = vmatprep.subr.mxu0 0.0
  %4894 = vmatpush1.msra.mxu0 %v4572
  %4895 = vmatprep.subr.mxu0 0.0
  %4896 = vmatpush2.msra.mxu0 %v4603
  %4897 = vmatprep.subr.mxu0 0.0
  %4898 = vmatpush2.msra.mxu0 %v4602
  %4899 = vmatprep.subr.mxu0 0.0
  %4900 = vmatpush2.msra.mxu0 %v4601
  %4901 = vmatprep.subr.mxu0 0.0
  %4902 = vmatpush2.msra.mxu0 %v4600
  %4903 = vmatprep.subr.mxu0 0.0
  %4904 = vmatpush2.msra.mxu0 %v4599
  %4905 = vmatprep.subr.mxu0 0.0
  %4906 = vmatpush2.msra.mxu0 %v4598
  %4907 = vmatprep.subr.mxu0 0.0
  %4908 = vmatpush2.msra.mxu0 %v4597
  %4909 = vmatprep.subr.mxu0 0.0
  %4910 = vmatpush2.msra.mxu0 %v4596
  %4911 = vmatprep.subr.mxu0 0.0
  %4912 = vmatpush2.msra.mxu0 %v4595
  %4913 = vmatprep.subr.mxu0 0.0
  %4914 = vmatpush2.msra.mxu0 %v4594
  %4915 = vmatprep.subr.mxu0 0.0
  %4916 = vmatpush2.msra.mxu0 %v4593
  %4917 = vmatprep.subr.mxu0 0.0
  %4918 = vmatpush2.msra.mxu0 %v4592
  %4919 = vmatprep.subr.mxu0 0.0
  %4920 = vmatpush2.msra.mxu0 %v4591
  %4921 = vmatprep.subr.mxu0 0.0
  %4922 = vmatpush2.msra.mxu0 %v4590
  %4923 = vmatprep.subr.mxu0 0.0
  %4924 = vmatpush2.msra.mxu0 %v4589
  %4925 = vmatprep.subr.mxu0 0.0
  %4926 = vmatpush2.msra.mxu0 %v4588
  %4927 = vmatprep.mubr.f32.mxu0 %v4403
  %4928 = vmatmul.mubr.f32.gmra.mxu0 %v4401
  %v4929 = vpop.f32.mrf.mxu0
  %v4930 = vadd.f32 %v4860, %v4929
  %v4931 = vpop.f32.mrf.mxu0
  %4932 = vdwg.mxu0
  %4933 = vmatprep.subr.mxu0 0.0
  %4934 = vmatpush1.msra.mxu0 %v4619
  %4935 = vmatprep.subr.mxu0 0.0
  %4936 = vmatpush1.msra.mxu0 %v4618
  %4937 = vmatprep.subr.mxu0 0.0
  %4938 = vmatpush1.msra.mxu0 %v4617
  %4939 = vmatprep.subr.mxu0 0.0
  %4940 = vmatpush1.msra.mxu0 %v4616
  %4941 = vmatprep.subr.mxu0 0.0
  %4942 = vmatpush1.msra.mxu0 %v4615
  %4943 = vmatprep.subr.mxu0 0.0
  %4944 = vmatpush1.msra.mxu0 %v4614
  %4945 = vmatprep.subr.mxu0 0.0
  %4946 = vmatpush1.msra.mxu0 %v4613
  %4947 = vmatprep.subr.mxu0 0.0
  %4948 = vmatpush1.msra.mxu0 %v4612
  %4949 = vmatprep.subr.mxu0 0.0
  %4950 = vmatpush1.msra.mxu0 %v4611
  %4951 = vmatprep.subr.mxu0 0.0
  %4952 = vmatpush1.msra.mxu0 %v4610
  %4953 = vmatprep.subr.mxu0 0.0
  %4954 = vmatpush1.msra.mxu0 %v4609
  %4955 = vmatprep.subr.mxu0 0.0
  %4956 = vmatpush1.msra.mxu0 %v4608
  %4957 = vmatprep.subr.mxu0 0.0
  %4958 = vmatpush1.msra.mxu0 %v4607
  %4959 = vmatprep.subr.mxu0 0.0
  %4960 = vmatpush1.msra.mxu0 %v4606
  %4961 = vmatprep.subr.mxu0 0.0
  %4962 = vmatpush1.msra.mxu0 %v4605
  %4963 = vmatprep.subr.mxu0 0.0
  %4964 = vmatpush1.msra.mxu0 %v4604
  %4965 = vmatprep.subr.mxu0 0.0
  %4966 = vmatpush2.msra.mxu0 %v4651
  %4967 = vmatprep.subr.mxu0 0.0
  %4968 = vmatpush2.msra.mxu0 %v4634
  %4969 = vmatprep.subr.mxu0 0.0
  %4970 = vmatpush2.msra.mxu0 %v4633
  %4971 = vmatprep.subr.mxu0 0.0
  %4972 = vmatpush2.msra.mxu0 %v4632
  %4973 = vmatprep.subr.mxu0 0.0
  %4974 = vmatpush2.msra.mxu0 %v4631
  %4975 = vmatprep.subr.mxu0 0.0
  %4976 = vmatpush2.msra.mxu0 %v4630
  %4977 = vmatprep.subr.mxu0 0.0
  %4978 = vmatpush2.msra.mxu0 %v4629
  %4979 = vmatprep.subr.mxu0 0.0
  %4980 = vmatpush2.msra.mxu0 %v4628
  %4981 = vmatprep.subr.mxu0 0.0
  %4982 = vmatpush2.msra.mxu0 %v4627
  %4983 = vmatprep.subr.mxu0 0.0
  %4984 = vmatpush2.msra.mxu0 %v4626
  %4985 = vmatprep.subr.mxu0 0.0
  %4986 = vmatpush2.msra.mxu0 %v4625
  %4987 = vmatprep.subr.mxu0 0.0
  %4988 = vmatpush2.msra.mxu0 %v4624
  %4989 = vmatprep.subr.mxu0 0.0
  %4990 = vmatpush2.msra.mxu0 %v4623
  %4991 = vmatprep.subr.mxu0 0.0
  %4992 = vmatpush2.msra.mxu0 %v4622
  %4993 = vmatprep.subr.mxu0 0.0
  %4994 = vmatpush2.msra.mxu0 %v4621
  %4995 = vmatprep.subr.mxu0 0.0
  %4996 = vmatpush2.msra.mxu0 %v4620
  %4997 = vmatprep.mubr.f32.mxu0 %v4647
  %4998 = vmatmul.mubr.f32.gmra.mxu0 %v4472
  %v4999 = vpop.f32.mrf.mxu0
  %v5000 = vadd.f32 %v4930, %v4999
  %v5001 = vpop.f32.mrf.mxu0
  %5002 = vdwg.mxu0
  %v5003 = vsub.f32 0.0, %v5000
  %v5004 = vmul.f32 %v5003, 1.442695
  %v5005 = vpow.pop %v5004
  %v5006 = vadd.f32 %v5005, 1.0
  %v5007 = vrcp.pop %v5006
  %v5008 = vmul.f32 1.0, %v5007
  %5009 = vst [vmem:[%s7] sm:$0x1] %v5008
  // Predicated region
  $region30: #{cnn_forward.1} parent=0 // pred_check
    _
  $region31: #{cnn_forward.1} parent=0 // pred_check_branch
    %5011 = sbr.rel (0) target = $region33
  $region32: #{cnn_forward.1} parent=0 // pred_region
    _
  $region33: #{cnn_forward.1} parent=0 // pred_fallthru
    _
  // Predicated region
  $region34: #{cnn_forward.1} parent=0 // pred_check
    _
  $region35: #{cnn_forward.1} parent=0 // pred_check_branch
    %5013 = sbr.rel (0) target = $region37
  $region36: #{cnn_forward.1} parent=0 // pred_region
    _
  $region37: #{cnn_forward.1} parent=0 // pred_fallthru
    _

</llo_original>
